<compile_context>
chip_gen: v6e
topology: v6e:2x2x1
jax: 0.10.0
libtpu: 0.0.40
codegen_flags: <defaults>
</compile_context>

<pallas_src>
import functools

import numpy as np
import jax
import jax.numpy as jnp
from jax.experimental import pallas as pl
from jax.experimental.pallas import tpu as pltpu  # noqa: F401  (TPU backend)


# ----------------------------------------------------------------------------
# Generic single-block pallas_call helper (everything fits in VMEM here).
# ----------------------------------------------------------------------------
def _single_block_call(kernel, args, out_shapes):
    # All args / outputs are 2-D arrays mapped wholesale into VMEM, grid=(1,).
    in_specs = [pl.BlockSpec(a.shape, lambda i: (0, 0)) for a in args]
    out_specs = tuple(pl.BlockSpec(s.shape, lambda i: (0, 0)) for s in out_shapes)
    multi = len(out_shapes) > 1
    return pl.pallas_call(
        kernel,
        out_shape=tuple(out_shapes) if multi else out_shapes[0],
        grid=(1,),
        in_specs=in_specs,
        out_specs=out_specs if multi else out_specs[0],
    )(*args)


# ----------------------------------------------------------------------------
# Kernel 1: fused  y = act(x @ w + b)   (used for each conv GEMM)
#   w is stored bf16; x is cast to w.dtype; accumulation is f32.
# ----------------------------------------------------------------------------
def _linear_act_kernel(x_ref, w_ref, b_ref, o_ref, *, activation):
    w = w_ref[...]
    x = x_ref[...].astype(w.dtype)
    y = jnp.dot(x, w, preferred_element_type=jnp.float32) + b_ref[...]
    if activation == "relu":
        y = jnp.maximum(y, 0.0)
    elif activation == "tanh":
        y = jnp.tanh(y)
    o_ref[...] = y.astype(o_ref.dtype)


def pallas_linear(x, w, b, *, activation=None):
    """x:[M,K] @ w:[K,N] + b:[N], optional activation. w may be bf16."""
    M, K = x.shape
    K2, N = w.shape
    assert K == K2, (K, K2)
    kernel = functools.partial(_linear_act_kernel, activation=activation)
    return _single_block_call(
        kernel,
        [x, w, b.reshape(1, N).astype(jnp.float32)],
        [jax.ShapeDtypeStruct((M, N), jnp.float32)],
    )


# ----------------------------------------------------------------------------
# Kernel 2: fused  hidden = relu(x @ Wfc + bfc);  value = hidden @ Wcr + bcr
# ----------------------------------------------------------------------------
def _fc_critic_kernel(x_ref, wf_ref, bf_ref, wc_ref, bc_ref, h_ref, v_ref):
    wf = wf_ref[...]                          # bf16
    x = x_ref[...].astype(wf.dtype)
    h = jnp.dot(x, wf, preferred_element_type=jnp.float32) + bf_ref[...]
    h = jnp.maximum(h, 0.0)                   # f32
    h_ref[...] = h
    # critic head kept fully f32 (tiny), fused so hidden never leaves VMEM
    v_ref[...] = jnp.dot(h, wc_ref[...], preferred_element_type=jnp.float32) + bc_ref[...]


def pallas_fc_critic(x, wf, bf, wc, bc):
    B = x.shape[0]
    N = wf.shape[1]
    return _single_block_call(
        _fc_critic_kernel,
        [x, wf, bf.reshape(1, N), wc, bc.reshape(1, 1)],
        [jax.ShapeDtypeStruct((B, N), jnp.float32),
         jax.ShapeDtypeStruct((B, 1), jnp.float32)],
    )


# ----------------------------------------------------------------------------
# Kernel 3: entire MLP base fused (actor MLP, critic MLP, critic head)
# ----------------------------------------------------------------------------
def _mlp_kernel(x_ref, a1w_ref, a1b_ref, a2w_ref, a2b_ref,
                c1w_ref, c1b_ref, c2w_ref, c2b_ref, crw_ref, crb_ref,
                ha_ref, v_ref):
    x = x_ref[...]
    ha = jnp.tanh(jnp.dot(x, a1w_ref[...], preferred_element_type=jnp.float32) + a1b_ref[...])
    ha = jnp.tanh(jnp.dot(ha, a2w_ref[...], preferred_element_type=jnp.float32) + a2b_ref[...])
    hc = jnp.tanh(jnp.dot(x, c1w_ref[...], preferred_element_type=jnp.float32) + c1b_ref[...])
    hc = jnp.tanh(jnp.dot(hc, c2w_ref[...], preferred_element_type=jnp.float32) + c2b_ref[...])
    ha_ref[...] = ha
    v_ref[...] = jnp.dot(hc, crw_ref[...], preferred_element_type=jnp.float32) + crb_ref[...]


def pallas_mlp(x, p):
    B = x.shape[0]
    args = [x,
            p["a1w"], p["a1b"].reshape(1, -1),
            p["a2w"], p["a2b"].reshape(1, -1),
            p["c1w"], p["c1b"].reshape(1, -1),
            p["c2w"], p["c2b"].reshape(1, -1),
            p["crw"], p["crb"].reshape(1, 1)]
    return _single_block_call(
        _mlp_kernel, args,
        [jax.ShapeDtypeStruct((B, 64), jnp.float32),
         jax.ShapeDtypeStruct((B, 1), jnp.float32)],
    )


# ----------------------------------------------------------------------------
# Patch extraction: static strided slices + concat (no gather), NHWC layout.
# Feature ordering of a patch row is (kh, kw, c) with c fastest.
# ----------------------------------------------------------------------------
def _extract_patches_nhwc(x, kh, kw, stride):
    B, H, W, C = x.shape
    oh = (H - kh) // stride + 1
    ow = (W - kw) // stride + 1
    pieces = []
    for i in range(kh):
        for j in range(kw):
            sl = x[:, i:i + (oh - 1) * stride + 1:stride,
                      j:j + (ow - 1) * stride + 1:stride, :]   # [B, oh, ow, C]
            pieces.append(sl)
    patches = jnp.concatenate(pieces, axis=-1)                 # [B, oh, ow, kh*kw*C]
    return patches.reshape(B * oh * ow, kh * kw * C), oh, ow


def _conv_gemm_relu(x_nhwc, wmat, b, kh, kw, stride):
    """Conv2d (no padding) + ReLU as im2col GEMM; stays in NHWC."""
    B = x_nhwc.shape[0]
    cout = wmat.shape[1]
    patches, oh, ow = _extract_patches_nhwc(x_nhwc, kh, kw, stride)
    y = pallas_linear(patches, wmat, b, activation="relu")     # [B*oh*ow, cout]
    return y.reshape(B, oh, ow, cout)


# ----------------------------------------------------------------------------
# Jitted forwards
# ----------------------------------------------------------------------------
def _cnn_forward(params, inputs):
    # inputs: NCHW [B, C, 84, 84]; the 1/255 scale is folded into w1.
    x = jnp.transpose(inputs, (0, 2, 3, 1))                    # NHWC once, up front
    x = _conv_gemm_relu(x, params["w1"], params["b1"], 8, 8, 4)   # [B,20,20,32]
    x = _conv_gemm_relu(x, params["w2"], params["b2"], 4, 4, 2)   # [B, 9, 9,64]
    x = _conv_gemm_relu(x, params["w3"], params["b3"], 3, 3, 1)   # [B, 7, 7,32]
    x = x.reshape(x.shape[0], -1)        # (h, w, c) order; fc_w rows permuted to match
    hidden, value = pallas_fc_critic(x, params["fc_w"], params["fc_b"],
                                     params["cr_w"], params["cr_b"])
    return value, hidden


def _mlp_forward(params, inputs):
    hidden, value = pallas_mlp(inputs, params)
    return value, hidden


# ----------------------------------------------------------------------------
# Deterministic parameter initialisation (mirrors the PyTorch inits)
# ----------------------------------------------------------------------------
def orthogonal(key, shape, gain=1.0):
    rows = shape[0]
    cols = int(np.prod(shape[1:])) if len(shape) > 1 else 1
    big, small = (rows, cols) if rows >= cols else (cols, rows)
    a = jax.random.normal(key, (big, small), dtype=jnp.float32)
    q, r = jnp.linalg.qr(a)
    q = q * jnp.sign(jnp.diagonal(r))
    if rows < cols:
        q = q.T
    return (gain * q).reshape(shape).astype(jnp.float32)


def normc(key, shape):
    w = jax.random.normal(key, shape, dtype=jnp.float32)
    return w / jnp.sqrt(jnp.sum(w * w, axis=1, keepdims=True))


def _conv_w_to_mat(w):
    # PyTorch conv weight [Cout, Cin, KH, KW] -> GEMM weight [(kh,kw,cin), Cout]
    cout, cin, kh, kw = w.shape
    return jnp.transpose(w, (2, 3, 1, 0)).reshape(kh * kw * cin, cout)


# ----------------------------------------------------------------------------
# Policy (forward pass only — the `dist` head is not used in forward)
# ----------------------------------------------------------------------------
class PallasPolicy:
    def __init__(self, obs_shape, action_space_n, recurrent_policy, key):
        # TODO(synk): distribution head (dist / act / evaluate_actions) is not
        # part of forward() and is not implemented here.
        del action_space_n
        relu_gain = float(np.sqrt(2.0))
        self.state_size = 1
        if len(obs_shape) == 3:
            self.kind = "cnn"
            if recurrent_policy:
                # TODO(synk): nn.GRUCell recurrent path not implemented in Pallas.
                raise NotImplementedError
            c = obs_shape[0]
            ks = jax.random.split(key, 5)
            w1 = orthogonal(ks[0], (32, c, 8, 8), relu_gain)
            w2 = orthogonal(ks[1], (64, 32, 4, 4), relu_gain)
            w3 = orthogonal(ks[2], (32, 64, 3, 3), relu_gain)
            fc_w = orthogonal(ks[3], (512, 32 * 7 * 7), relu_gain)
            cr_w = orthogonal(ks[4], (1, 512), 1.0)
            # fc weight columns are (c, h, w) ordered in PyTorch flatten; permute
            # rows of the transposed matrix to the (h, w, c) order our NHWC
            # pipeline produces.
            fc_w_t = jnp.transpose(fc_w.reshape(512, 32, 7, 7),
                                   (2, 3, 1, 0)).reshape(32 * 7 * 7, 512)
            self.params = dict(
                w1=(_conv_w_to_mat(w1) / 255.0).astype(jnp.bfloat16),  # 1/255 folded
                b1=jnp.zeros((32,), jnp.float32),
                w2=_conv_w_to_mat(w2).astype(jnp.bfloat16),
                b2=jnp.zeros((64,), jnp.float32),
                w3=_conv_w_to_mat(w3).astype(jnp.bfloat16),
                b3=jnp.zeros((32,), jnp.float32),
                fc_w=fc_w_t.astype(jnp.bfloat16),
                fc_b=jnp.zeros((512,), jnp.float32),
                cr_w=cr_w.T.astype(jnp.float32),      # [512, 1]
                cr_b=jnp.zeros((1,), jnp.float32),
            )
            self._fwd = jax.jit(_cnn_forward)
        elif len(obs_shape) == 1:
            self.kind = "mlp"
            assert not recurrent_policy
            n = obs_shape[0]
            ks = jax.random.split(key, 5)
            self.params = dict(
                a1w=normc(ks[0], (64, n)).T, a1b=jnp.zeros((64,), jnp.float32),
                a2w=normc(ks[1], (64, 64)).T, a2b=jnp.zeros((64,), jnp.float32),
                c1w=normc(ks[2], (64, n)).T, c1b=jnp.zeros((64,), jnp.float32),
                c2w=normc(ks[3], (64, 64)).T, c2b=jnp.zeros((64,), jnp.float32),
                crw=normc(ks[4], (1, 64)).T, crb=jnp.zeros((1,), jnp.float32),
            )
            self._fwd = jax.jit(_mlp_forward)
        else:
            raise NotImplementedError

    def forward(self, inputs, states, masks):
        # Non-recurrent paths ignore states/masks (same as the PyTorch module).
        value, hidden = self._fwd(self.params, inputs)
        return value, hidden, states


# ----------------------------------------------------------------------------
if __name__ == "__main__":
    key = jax.random.PRNGKey(0)
    k_param, k_in, k_param2, k_in2 = jax.random.split(key, 4)

    # --- CNN path (obs_shape length 3). 84x84 is forced by Linear(32*7*7, 512).
    B, C = 2, 4
    policy_cnn = PallasPolicy((C, 84, 84), action_space_n=6,
                              recurrent_policy=False, key=k_param)
    inputs = jax.random.uniform(k_in, (B, C, 84, 84), jnp.float32, 0.0, 255.0)
    states = jnp.zeros((B, policy_cnn.state_size), jnp.float32)
    masks = jnp.ones((B, 1), jnp.float32)
    value, hidden, out_states = policy_cnn.forward(inputs, states, masks)
    jax.block_until_ready((value, hidden, out_states))
    assert value.shape == (B, 1) and hidden.shape == (B, 512)

    # --- MLP path (obs_shape length 1).
    D = 8
    policy_mlp = PallasPolicy((D,), action_space_n=6,
                              recurrent_policy=False, key=k_param2)
    inputs_m = jax.random.normal(k_in2, (B, D), jnp.float32)
    value_m, hidden_m, _ = policy_mlp.forward(inputs_m, states, masks)
    jax.block_until_ready((value_m, hidden_m))
    assert value_m.shape == (B, 1) and hidden_m.shape == (B, 64)

    print("KERNEL_OK")
</pallas_src>

<mosaic_0001>
module attributes {stable_mosaic.version = 11 : i64} {
  func.func @_linear_act_kernel(%arg0: i32, %arg1: memref<800x256xf32, #tpu.memory_space<vmem>>, %arg2: memref<256x32xbf16, #tpu.memory_space<vmem>>, %arg3: memref<1x32xf32, #tpu.memory_space<vmem>>, %arg4: memref<800x32xf32, #tpu.memory_space<vmem>>) attributes {dimension_semantics = [#tpu.dimension_semantics<arbitrary>], iteration_bounds = array<i64: 1>, scalar_prefetch = 0 : i64, scratch_operands = 0 : i64, tpu.core_type = #tpu.core_type<tc>, window_params = [{pipeline_mode = #tpu.pipeline_mode<synchronous>, transform_indices = @transform_0, window_bounds = array<i64: 800, 256>}, {pipeline_mode = #tpu.pipeline_mode<synchronous>, transform_indices = @transform_1, window_bounds = array<i64: 256, 32>}, {pipeline_mode = #tpu.pipeline_mode<synchronous>, transform_indices = @transform_2, window_bounds = array<i64: 1, 32>}, {pipeline_mode = #tpu.pipeline_mode<synchronous>, transform_indices = @transform_3, window_bounds = array<i64: 800, 32>}]} {
    %c0 = arith.constant 0 : index
    %c0_0 = arith.constant 0 : index
    %0 = vector.load %arg2[%c0, %c0_0] : memref<256x32xbf16, #tpu.memory_space<vmem>>, vector<256x32xbf16>
    %c0_1 = arith.constant 0 : index
    %c0_2 = arith.constant 0 : index
    %1 = vector.load %arg1[%c0_1, %c0_2] : memref<800x256xf32, #tpu.memory_space<vmem>>, vector<800x256xf32>
    %2 = arith.truncf %1 : vector<800x256xf32> to vector<800x256xbf16>
    %cst = arith.constant dense<0.000000e+00> : vector<800x32xf32>
    %3 = tpu.matmul %2, %0, %cst {dimension_numbers = #tpu.dot_dimension_numbers<[1], [0], [0], [1], [0, 0, 1, 1], [], []>} : vector<800x256xbf16>, vector<256x32xbf16>, vector<800x32xf32> -> vector<800x32xf32>
    %c0_3 = arith.constant 0 : index
    %c0_4 = arith.constant 0 : index
    %4 = vector.load %arg3[%c0_3, %c0_4] : memref<1x32xf32, #tpu.memory_space<vmem>>, vector<1x32xf32>
    %5 = vector.broadcast %4 : vector<1x32xf32> to vector<800x32xf32>
    %6 = arith.addf %3, %5 : vector<800x32xf32>
    %cst_5 = arith.constant 0.000000e+00 : f32
    %7 = vector.broadcast %cst_5 : f32 to vector<800x32xf32>
    %8 = arith.maximumf %6, %7 : vector<800x32xf32>
    %c0_6 = arith.constant 0 : index
    %c0_7 = arith.constant 0 : index
    %9 = vector.load %arg4[%c0_6, %c0_7] : memref<800x32xf32, #tpu.memory_space<vmem>>, vector<800x32xf32>
    tpu.vector_store %arg4[%c0_6, %c0_7], %8 {strides = array<i32>} : memref<800x32xf32, #tpu.memory_space<vmem>>, vector<800x32xf32>,
    return
  }
  func.func @transform_0(%arg0: i32) -> (i32, i32) {
    %c0_i32 = arith.constant 0 : i32
    %c0_i32_0 = arith.constant 0 : i32
    %c0_i32_1 = arith.constant 0 : i32
    return %c0_i32, %c0_i32_0 : i32, i32
  }
  func.func @transform_1(%arg0: i32) -> (i32, i32) {
    %c0_i32 = arith.constant 0 : i32
    %c0_i32_0 = arith.constant 0 : i32
    %c0_i32_1 = arith.constant 0 : i32
    return %c0_i32, %c0_i32_0 : i32, i32
  }
  func.func @transform_2(%arg0: i32) -> (i32, i32) {
    %c0_i32 = arith.constant 0 : i32
    %c0_i32_0 = arith.constant 0 : i32
    %c0_i32_1 = arith.constant 0 : i32
    return %c0_i32, %c0_i32_0 : i32, i32
  }
  func.func @transform_3(%arg0: i32) -> (i32, i32) {
    %c0_i32 = arith.constant 0 : i32
    %c0_i32_0 = arith.constant 0 : i32
    %c0_i32_1 = arith.constant 0 : i32
    return %c0_i32, %c0_i32_0 : i32, i32
  }
}

module attributes {stable_mosaic.version = 11 : i64} {
  func.func @_linear_act_kernel(%arg0: i32, %arg1: memref<162x512xf32, #tpu.memory_space<vmem>>, %arg2: memref<512x64xbf16, #tpu.memory_space<vmem>>, %arg3: memref<1x64xf32, #tpu.memory_space<vmem>>, %arg4: memref<162x64xf32, #tpu.memory_space<vmem>>) attributes {dimension_semantics = [#tpu.dimension_semantics<arbitrary>], iteration_bounds = array<i64: 1>, scalar_prefetch = 0 : i64, scratch_operands = 0 : i64, tpu.core_type = #tpu.core_type<tc>, window_params = [{pipeline_mode = #tpu.pipeline_mode<synchronous>, transform_indices = @transform_0, window_bounds = array<i64: 162, 512>}, {pipeline_mode = #tpu.pipeline_mode<synchronous>, transform_indices = @transform_1, window_bounds = array<i64: 512, 64>}, {pipeline_mode = #tpu.pipeline_mode<synchronous>, transform_indices = @transform_2, window_bounds = array<i64: 1, 64>}, {pipeline_mode = #tpu.pipeline_mode<synchronous>, transform_indices = @transform_3, window_bounds = array<i64: 162, 64>}]} {
    %c0 = arith.constant 0 : index
    %c0_0 = arith.constant 0 : index
    %0 = vector.load %arg2[%c0, %c0_0] : memref<512x64xbf16, #tpu.memory_space<vmem>>, vector<512x64xbf16>
    %c0_1 = arith.constant 0 : index
    %c0_2 = arith.constant 0 : index
    %1 = vector.load %arg1[%c0_1, %c0_2] : memref<162x512xf32, #tpu.memory_space<vmem>>, vector<162x512xf32>
    %2 = arith.truncf %1 : vector<162x512xf32> to vector<162x512xbf16>
    %cst = arith.constant dense<0.000000e+00> : vector<162x64xf32>
    %3 = tpu.matmul %2, %0, %cst {dimension_numbers = #tpu.dot_dimension_numbers<[1], [0], [0], [1], [0, 0, 1, 1], [], []>} : vector<162x512xbf16>, vector<512x64xbf16>, vector<162x64xf32> -> vector<162x64xf32>
    %c0_3 = arith.constant 0 : index
    %c0_4 = arith.constant 0 : index
    %4 = vector.load %arg3[%c0_3, %c0_4] : memref<1x64xf32, #tpu.memory_space<vmem>>, vector<1x64xf32>
    %5 = vector.broadcast %4 : vector<1x64xf32> to vector<162x64xf32>
    %6 = arith.addf %3, %5 : vector<162x64xf32>
    %cst_5 = arith.constant 0.000000e+00 : f32
    %7 = vector.broadcast %cst_5 : f32 to vector<162x64xf32>
    %8 = arith.maximumf %6, %7 : vector<162x64xf32>
    %c0_6 = arith.constant 0 : index
    %c0_7 = arith.constant 0 : index
    %9 = vector.load %arg4[%c0_6, %c0_7] : memref<162x64xf32, #tpu.memory_space<vmem>>, vector<162x64xf32>
    tpu.vector_store %arg4[%c0_6, %c0_7], %8 {strides = array<i32>} : memref<162x64xf32, #tpu.memory_space<vmem>>, vector<162x64xf32>,
    return
  }
  func.func @transform_0(%arg0: i32) -> (i32, i32) {
    %c0_i32 = arith.constant 0 : i32
    %c0_i32_0 = arith.constant 0 : i32
    %c0_i32_1 = arith.constant 0 : i32
    return %c0_i32, %c0_i32_0 : i32, i32
  }
  func.func @transform_1(%arg0: i32) -> (i32, i32) {
    %c0_i32 = arith.constant 0 : i32
    %c0_i32_0 = arith.constant 0 : i32
    %c0_i32_1 = arith.constant 0 : i32
    return %c0_i32, %c0_i32_0 : i32, i32
  }
  func.func @transform_2(%arg0: i32) -> (i32, i32) {
    %c0_i32 = arith.constant 0 : i32
    %c0_i32_0 = arith.constant 0 : i32
    %c0_i32_1 = arith.constant 0 : i32
    return %c0_i32, %c0_i32_0 : i32, i32
  }
  func.func @transform_3(%arg0: i32) -> (i32, i32) {
    %c0_i32 = arith.constant 0 : i32
    %c0_i32_0 = arith.constant 0 : i32
    %c0_i32_1 = arith.constant 0 : i32
    return %c0_i32, %c0_i32_0 : i32, i32
  }
}

module attributes {stable_mosaic.version = 11 : i64} {
  func.func @_linear_act_kernel(%arg0: i32, %arg1: memref<98x576xf32, #tpu.memory_space<vmem>>, %arg2: memref<576x32xbf16, #tpu.memory_space<vmem>>, %arg3: memref<1x32xf32, #tpu.memory_space<vmem>>, %arg4: memref<98x32xf32, #tpu.memory_space<vmem>>) attributes {dimension_semantics = [#tpu.dimension_semantics<arbitrary>], iteration_bounds = array<i64: 1>, scalar_prefetch = 0 : i64, scratch_operands = 0 : i64, tpu.core_type = #tpu.core_type<tc>, window_params = [{pipeline_mode = #tpu.pipeline_mode<synchronous>, transform_indices = @transform_0, window_bounds = array<i64: 98, 576>}, {pipeline_mode = #tpu.pipeline_mode<synchronous>, transform_indices = @transform_1, window_bounds = array<i64: 576, 32>}, {pipeline_mode = #tpu.pipeline_mode<synchronous>, transform_indices = @transform_2, window_bounds = array<i64: 1, 32>}, {pipeline_mode = #tpu.pipeline_mode<synchronous>, transform_indices = @transform_3, window_bounds = array<i64: 98, 32>}]} {
    %c0 = arith.constant 0 : index
    %c0_0 = arith.constant 0 : index
    %0 = vector.load %arg2[%c0, %c0_0] : memref<576x32xbf16, #tpu.memory_space<vmem>>, vector<576x32xbf16>
    %c0_1 = arith.constant 0 : index
    %c0_2 = arith.constant 0 : index
    %1 = vector.load %arg1[%c0_1, %c0_2] : memref<98x576xf32, #tpu.memory_space<vmem>>, vector<98x576xf32>
    %2 = arith.truncf %1 : vector<98x576xf32> to vector<98x576xbf16>
    %cst = arith.constant dense<0.000000e+00> : vector<98x32xf32>
    %3 = tpu.matmul %2, %0, %cst {dimension_numbers = #tpu.dot_dimension_numbers<[1], [0], [0], [1], [0, 0, 1, 1], [], []>} : vector<98x576xbf16>, vector<576x32xbf16>, vector<98x32xf32> -> vector<98x32xf32>
    %c0_3 = arith.constant 0 : index
    %c0_4 = arith.constant 0 : index
    %4 = vector.load %arg3[%c0_3, %c0_4] : memref<1x32xf32, #tpu.memory_space<vmem>>, vector<1x32xf32>
    %5 = vector.broadcast %4 : vector<1x32xf32> to vector<98x32xf32>
    %6 = arith.addf %3, %5 : vector<98x32xf32>
    %cst_5 = arith.constant 0.000000e+00 : f32
    %7 = vector.broadcast %cst_5 : f32 to vector<98x32xf32>
    %8 = arith.maximumf %6, %7 : vector<98x32xf32>
    %c0_6 = arith.constant 0 : index
    %c0_7 = arith.constant 0 : index
    %9 = vector.load %arg4[%c0_6, %c0_7] : memref<98x32xf32, #tpu.memory_space<vmem>>, vector<98x32xf32>
    tpu.vector_store %arg4[%c0_6, %c0_7], %8 {strides = array<i32>} : memref<98x32xf32, #tpu.memory_space<vmem>>, vector<98x32xf32>,
    return
  }
  func.func @transform_0(%arg0: i32) -> (i32, i32) {
    %c0_i32 = arith.constant 0 : i32
    %c0_i32_0 = arith.constant 0 : i32
    %c0_i32_1 = arith.constant 0 : i32
    return %c0_i32, %c0_i32_0 : i32, i32
  }
  func.func @transform_1(%arg0: i32) -> (i32, i32) {
    %c0_i32 = arith.constant 0 : i32
    %c0_i32_0 = arith.constant 0 : i32
    %c0_i32_1 = arith.constant 0 : i32
    return %c0_i32, %c0_i32_0 : i32, i32
  }
  func.func @transform_2(%arg0: i32) -> (i32, i32) {
    %c0_i32 = arith.constant 0 : i32
    %c0_i32_0 = arith.constant 0 : i32
    %c0_i32_1 = arith.constant 0 : i32
    return %c0_i32, %c0_i32_0 : i32, i32
  }
  func.func @transform_3(%arg0: i32) -> (i32, i32) {
    %c0_i32 = arith.constant 0 : i32
    %c0_i32_0 = arith.constant 0 : i32
    %c0_i32_1 = arith.constant 0 : i32
    return %c0_i32, %c0_i32_0 : i32, i32
  }
}

module attributes {stable_mosaic.version = 11 : i64} {
  func.func @_fc_critic_kernel(%arg0: i32, %arg1: memref<2x1568xf32, #tpu.memory_space<vmem>>, %arg2: memref<1568x512xbf16, #tpu.memory_space<vmem>>, %arg3: memref<1x512xf32, #tpu.memory_space<vmem>>, %arg4: memref<512x1xf32, #tpu.memory_space<vmem>>, %arg5: memref<1x1xf32, #tpu.memory_space<vmem>>, %arg6: memref<2x512xf32, #tpu.memory_space<vmem>>, %arg7: memref<2x1xf32, #tpu.memory_space<vmem>>) attributes {dimension_semantics = [#tpu.dimension_semantics<arbitrary>], iteration_bounds = array<i64: 1>, scalar_prefetch = 0 : i64, scratch_operands = 0 : i64, tpu.core_type = #tpu.core_type<tc>, window_params = [{pipeline_mode = #tpu.pipeline_mode<synchronous>, transform_indices = @transform_0, window_bounds = array<i64: 2, 1568>}, {pipeline_mode = #tpu.pipeline_mode<synchronous>, transform_indices = @transform_1, window_bounds = array<i64: 1568, 512>}, {pipeline_mode = #tpu.pipeline_mode<synchronous>, transform_indices = @transform_2, window_bounds = array<i64: 1, 512>}, {pipeline_mode = #tpu.pipeline_mode<synchronous>, transform_indices = @transform_3, window_bounds = array<i64: 512, 1>}, {pipeline_mode = #tpu.pipeline_mode<synchronous>, transform_indices = @transform_4, window_bounds = array<i64: 1, 1>}, {pipeline_mode = #tpu.pipeline_mode<synchronous>, transform_indices = @transform_5, window_bounds = array<i64: 2, 512>}, {pipeline_mode = #tpu.pipeline_mode<synchronous>, transform_indices = @transform_6, window_bounds = array<i64: 2, 1>}]} {
    %c0 = arith.constant 0 : index
    %c0_0 = arith.constant 0 : index
    %0 = vector.load %arg2[%c0, %c0_0] : memref<1568x512xbf16, #tpu.memory_space<vmem>>, vector<1568x512xbf16>
    %c0_1 = arith.constant 0 : index
    %c0_2 = arith.constant 0 : index
    %1 = vector.load %arg1[%c0_1, %c0_2] : memref<2x1568xf32, #tpu.memory_space<vmem>>, vector<2x1568xf32>
    %2 = arith.truncf %1 : vector<2x1568xf32> to vector<2x1568xbf16>
    %cst = arith.constant dense<0.000000e+00> : vector<2x512xf32>
    %3 = tpu.matmul %2, %0, %cst {dimension_numbers = #tpu.dot_dimension_numbers<[1], [0], [0], [1], [0, 0, 1, 1], [], []>} : vector<2x1568xbf16>, vector<1568x512xbf16>, vector<2x512xf32> -> vector<2x512xf32>
    %c0_3 = arith.constant 0 : index
    %c0_4 = arith.constant 0 : index
    %4 = vector.load %arg3[%c0_3, %c0_4] : memref<1x512xf32, #tpu.memory_space<vmem>>, vector<1x512xf32>
    %5 = vector.broadcast %4 : vector<1x512xf32> to vector<2x512xf32>
    %6 = arith.addf %3, %5 : vector<2x512xf32>
    %cst_5 = arith.constant 0.000000e+00 : f32
    %7 = vector.broadcast %cst_5 : f32 to vector<2x512xf32>
    %8 = arith.maximumf %6, %7 : vector<2x512xf32>
    %c0_6 = arith.constant 0 : index
    %c0_7 = arith.constant 0 : index
    %9 = vector.load %arg6[%c0_6, %c0_7] : memref<2x512xf32, #tpu.memory_space<vmem>>, vector<2x512xf32>
    tpu.vector_store %arg6[%c0_6, %c0_7], %8 {strides = array<i32>} : memref<2x512xf32, #tpu.memory_space<vmem>>, vector<2x512xf32>,
    %c0_8 = arith.constant 0 : index
    %c0_9 = arith.constant 0 : index
    %10 = vector.load %arg4[%c0_8, %c0_9] : memref<512x1xf32, #tpu.memory_space<vmem>>, vector<512x1xf32>
    %cst_10 = arith.constant dense<0.000000e+00> : vector<2x1xf32>
    %11 = tpu.matmul %8, %10, %cst_10 {dimension_numbers = #tpu.dot_dimension_numbers<[1], [0], [0], [1], [0, 0, 1, 1], [], []>} : vector<2x512xf32>, vector<512x1xf32>, vector<2x1xf32> -> vector<2x1xf32>
    %c0_11 = arith.constant 0 : index
    %c0_12 = arith.constant 0 : index
    %12 = vector.load %arg5[%c0_11, %c0_12] : memref<1x1xf32, #tpu.memory_space<vmem>>, vector<1x1xf32>
    %13 = vector.broadcast %12 : vector<1x1xf32> to vector<2x1xf32>
    %14 = arith.addf %11, %13 : vector<2x1xf32>
    %c0_13 = arith.constant 0 : index
    %c0_14 = arith.constant 0 : index
    %15 = vector.load %arg7[%c0_13, %c0_14] : memref<2x1xf32, #tpu.memory_space<vmem>>, vector<2x1xf32>
    tpu.vector_store %arg7[%c0_13, %c0_14], %14 {strides = array<i32>} : memref<2x1xf32, #tpu.memory_space<vmem>>, vector<2x1xf32>,
    return
  }
  func.func @transform_0(%arg0: i32) -> (i32, i32) {
    %c0_i32 = arith.constant 0 : i32
    %c0_i32_0 = arith.constant 0 : i32
    %c0_i32_1 = arith.constant 0 : i32
    return %c0_i32, %c0_i32_0 : i32, i32
  }
  func.func @transform_1(%arg0: i32) -> (i32, i32) {
    %c0_i32 = arith.constant 0 : i32
    %c0_i32_0 = arith.constant 0 : i32
    %c0_i32_1 = arith.constant 0 : i32
    return %c0_i32, %c0_i32_0 : i32, i32
  }
  func.func @transform_2(%arg0: i32) -> (i32, i32) {
    %c0_i32 = arith.constant 0 : i32
    %c0_i32_0 = arith.constant 0 : i32
    %c0_i32_1 = arith.constant 0 : i32
    return %c0_i32, %c0_i32_0 : i32, i32
  }
  func.func @transform_3(%arg0: i32) -> (i32, i32) {
    %c0_i32 = arith.constant 0 : i32
    %c0_i32_0 = arith.constant 0 : i32
    %c0_i32_1 = arith.constant 0 : i32
    return %c0_i32, %c0_i32_0 : i32, i32
  }
  func.func @transform_4(%arg0: i32) -> (i32, i32) {
    %c0_i32 = arith.constant 0 : i32
    %c0_i32_0 = arith.constant 0 : i32
    %c0_i32_1 = arith.constant 0 : i32
    return %c0_i32, %c0_i32_0 : i32, i32
  }
  func.func @transform_5(%arg0: i32) -> (i32, i32) {
    %c0_i32 = arith.constant 0 : i32
    %c0_i32_0 = arith.constant 0 : i32
    %c0_i32_1 = arith.constant 0 : i32
    return %c0_i32, %c0_i32_0 : i32, i32
  }
  func.func @transform_6(%arg0: i32) -> (i32, i32) {
    %c0_i32 = arith.constant 0 : i32
    %c0_i32_0 = arith.constant 0 : i32
    %c0_i32_1 = arith.constant 0 : i32
    return %c0_i32, %c0_i32_0 : i32, i32
  }
}

</mosaic_0001>

<llo_original>
// kernel: _cnn_forward.4
$region0: #{_cnn_forward.4}
  #allocation0 [shape = 'u32[]', space=smem, size = 0x4, offset = 0x4, fixed_abs, tag = 'smem constant byte address 0x4 - core index']
  #allocation1 [shape = 'u32[144,128]{1,0:T(1,128)}', space=vmem, size = 0x12000, scoped, tag = 'internal scratch']
  %s0 = inlined_call_operand.vmem [shape: f32[800,256], index: 0, kind: input, shape index: {}]
  %s1 = inlined_call_operand.vmem [shape: bf16[256,32], index: 1, kind: input, shape index: {}]
  %s2 = inlined_call_operand.vmem [shape: f32[1,32], index: 2, kind: input, shape index: {}]
  %s3 = inlined_call_operand.vmem [shape: f32[800,32], index: 3, kind: output, shape index: {}]
  %s4 = sld [smem:[#allocation0]]
  $region22: #{_cnn_forward.4} parent=0
    _
  %s6 = ssub.s32 1, %s4
  %s7 = scalar_select 0, %s6, %s4
  // Predicated region
  $region2: #{_cnn_forward.4} parent=0 // pred_check
    _
  $region3: #{_cnn_forward.4} parent=0 // pred_check_branch
    %9 = sbr.rel (0) target = $region5
  $region4: #{_cnn_forward.4} parent=0 // pred_region
    _
  $region5: #{_cnn_forward.4} parent=0 // pred_fallthru
    _
  // Predicated region
  $region6: #{_cnn_forward.4} parent=0 // pred_check
    _
  $region7: #{_cnn_forward.4} parent=0 // pred_check_branch
    %11 = sbr.rel (0) target = $region9
  $region8: #{_cnn_forward.4} parent=0 // pred_region
    _
  $region9: #{_cnn_forward.4} parent=0 // pred_fallthru
    _
  // Predicated region
  $region10: #{_cnn_forward.4} parent=0 // pred_check
    _
  $region11: #{_cnn_forward.4} parent=0 // pred_check_branch
    %13 = sbr.rel (0) target = $region13
  $region12: #{_cnn_forward.4} parent=0 // pred_region
    _
  $region13: #{_cnn_forward.4} parent=0 // pred_fallthru
    _
  %v15 = vld [vmem:[%s1] sm:$0xf]
  %v16 = vld [vmem:[%s1 + $0x4] sm:$0xf]
  %v17 = vld [vmem:[%s1 + $0x8] sm:$0xf]
  %v18 = vld [vmem:[%s1 + $0xc] sm:$0xf]
  %v19 = vld [vmem:[%s1 + $0x10] sm:$0xf]
  %v20 = vld [vmem:[%s1 + $0x14] sm:$0xf]
  %v21 = vld [vmem:[%s1 + $0x18] sm:$0xf]
  %v22 = vld [vmem:[%s1 + $0x1c] sm:$0xf]
  %v23 = vld [vmem:[%s1 + $0x20] sm:$0xf]
  %v24 = vld [vmem:[%s1 + $0x24] sm:$0xf]
  %v25 = vld [vmem:[%s1 + $0x28] sm:$0xf]
  %v26 = vld [vmem:[%s1 + $0x2c] sm:$0xf]
  %v27 = vld [vmem:[%s1 + $0x30] sm:$0xf]
  %v28 = vld [vmem:[%s1 + $0x34] sm:$0xf]
  %v29 = vld [vmem:[%s1 + $0x38] sm:$0xf]
  %v30 = vld [vmem:[%s1 + $0x3c] sm:$0xf]
  %v31 = vld [vmem:[%s1 + $0x40] sm:$0xf]
  %v32 = vld [vmem:[%s1 + $0x44] sm:$0xf]
  %v33 = vld [vmem:[%s1 + $0x48] sm:$0xf]
  %v34 = vld [vmem:[%s1 + $0x4c] sm:$0xf]
  %v35 = vld [vmem:[%s1 + $0x50] sm:$0xf]
  %v36 = vld [vmem:[%s1 + $0x54] sm:$0xf]
  %v37 = vld [vmem:[%s1 + $0x58] sm:$0xf]
  %v38 = vld [vmem:[%s1 + $0x5c] sm:$0xf]
  %v39 = vld [vmem:[%s1 + $0x60] sm:$0xf]
  %v40 = vld [vmem:[%s1 + $0x64] sm:$0xf]
  %v41 = vld [vmem:[%s1 + $0x68] sm:$0xf]
  %v42 = vld [vmem:[%s1 + $0x6c] sm:$0xf]
  %v43 = vld [vmem:[%s1 + $0x70] sm:$0xf]
  %v44 = vld [vmem:[%s1 + $0x74] sm:$0xf]
  %v45 = vld [vmem:[%s1 + $0x78] sm:$0xf]
  %v46 = vld [vmem:[%s1 + $0x7c] sm:$0xf]
  %v47 = vld [vmem:[%s0] sm:$0xff]
  %v48 = vld [vmem:[%s0 + $0x8] sm:$0xff]
  %v49 = vld [vmem:[%s0 + $0x10] sm:$0xff]
  %v50 = vld [vmem:[%s0 + $0x18] sm:$0xff]
  %v51 = vld [vmem:[%s0 + $0x20] sm:$0xff]
  %v52 = vld [vmem:[%s0 + $0x28] sm:$0xff]
  %v53 = vld [vmem:[%s0 + $0x30] sm:$0xff]
  %v54 = vld [vmem:[%s0 + $0x38] sm:$0xff]
  %v55 = vld [vmem:[%s0 + $0x40] sm:$0xff]
  %v56 = vld [vmem:[%s0 + $0x48] sm:$0xff]
  %v57 = vld [vmem:[%s0 + $0x50] sm:$0xff]
  %v58 = vld [vmem:[%s0 + $0x58] sm:$0xff]
  %v59 = vld [vmem:[%s0 + $0x60] sm:$0xff]
  %v60 = vld [vmem:[%s0 + $0x68] sm:$0xff]
  %v61 = vld [vmem:[%s0 + $0x70] sm:$0xff]
  %v62 = vld [vmem:[%s0 + $0x78] sm:$0xff]
  %v63 = vld [vmem:[%s0 + $0x80] sm:$0xff]
  %v64 = vld [vmem:[%s0 + $0x88] sm:$0xff]
  %v65 = vld [vmem:[%s0 + $0x90] sm:$0xff]
  %v66 = vld [vmem:[%s0 + $0x98] sm:$0xff]
  %v67 = vld [vmem:[%s0 + $0xa0] sm:$0xff]
  %v68 = vld [vmem:[%s0 + $0xa8] sm:$0xff]
  %v69 = vld [vmem:[%s0 + $0xb0] sm:$0xff]
  %v70 = vld [vmem:[%s0 + $0xb8] sm:$0xff]
  %v71 = vld [vmem:[%s0 + $0xc0] sm:$0xff]
  %v72 = vld [vmem:[%s0 + $0xc8] sm:$0xff]
  %v73 = vld [vmem:[%s0 + $0xd0] sm:$0xff]
  %v74 = vld [vmem:[%s0 + $0xd8] sm:$0xff]
  %v75 = vld [vmem:[%s0 + $0xe0] sm:$0xff]
  %v76 = vld [vmem:[%s0 + $0xe8] sm:$0xff]
  %v77 = vld [vmem:[%s0 + $0xf0] sm:$0xff]
  %v78 = vld [vmem:[%s0 + $0xf8] sm:$0xff]
  %v79 = vld [vmem:[%s0 + $0x100] sm:$0xff]
  %v80 = vld [vmem:[%s0 + $0x108] sm:$0xff]
  %v81 = vld [vmem:[%s0 + $0x110] sm:$0xff]
  %v82 = vld [vmem:[%s0 + $0x118] sm:$0xff]
  %v83 = vld [vmem:[%s0 + $0x120] sm:$0xff]
  %v84 = vld [vmem:[%s0 + $0x128] sm:$0xff]
  %v85 = vld [vmem:[%s0 + $0x130] sm:$0xff]
  %v86 = vld [vmem:[%s0 + $0x138] sm:$0xff]
  %v87 = vld [vmem:[%s0 + $0x140] sm:$0xff]
  %v88 = vld [vmem:[%s0 + $0x148] sm:$0xff]
  %v89 = vld [vmem:[%s0 + $0x150] sm:$0xff]
  %v90 = vld [vmem:[%s0 + $0x158] sm:$0xff]
  %v91 = vld [vmem:[%s0 + $0x160] sm:$0xff]
  %v92 = vld [vmem:[%s0 + $0x168] sm:$0xff]
  %v93 = vld [vmem:[%s0 + $0x170] sm:$0xff]
  %v94 = vld [vmem:[%s0 + $0x178] sm:$0xff]
  %v95 = vld [vmem:[%s0 + $0x180] sm:$0xff]
  %v96 = vld [vmem:[%s0 + $0x188] sm:$0xff]
  %v97 = vld [vmem:[%s0 + $0x190] sm:$0xff]
  %v98 = vld [vmem:[%s0 + $0x198] sm:$0xff]
  %v99 = vld [vmem:[%s0 + $0x1a0] sm:$0xff]
  %v100 = vld [vmem:[%s0 + $0x1a8] sm:$0xff]
  %v101 = vld [vmem:[%s0 + $0x1b0] sm:$0xff]
  %v102 = vld [vmem:[%s0 + $0x1b8] sm:$0xff]
  %v103 = vld [vmem:[%s0 + $0x1c0] sm:$0xff]
  %v104 = vld [vmem:[%s0 + $0x1c8] sm:$0xff]
  %v105 = vld [vmem:[%s0 + $0x1d0] sm:$0xff]
  %v106 = vld [vmem:[%s0 + $0x1d8] sm:$0xff]
  %v107 = vld [vmem:[%s0 + $0x1e0] sm:$0xff]
  %v108 = vld [vmem:[%s0 + $0x1e8] sm:$0xff]
  %v109 = vld [vmem:[%s0 + $0x1f0] sm:$0xff]
  %v110 = vld [vmem:[%s0 + $0x1f8] sm:$0xff]
  %v111 = vld [vmem:[%s0 + $0x200] sm:$0xff]
  %v112 = vld [vmem:[%s0 + $0x208] sm:$0xff]
  %v113 = vld [vmem:[%s0 + $0x210] sm:$0xff]
  %v114 = vld [vmem:[%s0 + $0x218] sm:$0xff]
  %v115 = vld [vmem:[%s0 + $0x220] sm:$0xff]
  %v116 = vld [vmem:[%s0 + $0x228] sm:$0xff]
  %v117 = vld [vmem:[%s0 + $0x230] sm:$0xff]
  %v118 = vld [vmem:[%s0 + $0x238] sm:$0xff]
  %v119 = vld [vmem:[%s0 + $0x240] sm:$0xff]
  %v120 = vld [vmem:[%s0 + $0x248] sm:$0xff]
  %v121 = vld [vmem:[%s0 + $0x250] sm:$0xff]
  %v122 = vld [vmem:[%s0 + $0x258] sm:$0xff]
  %v123 = vld [vmem:[%s0 + $0x260] sm:$0xff]
  %v124 = vld [vmem:[%s0 + $0x268] sm:$0xff]
  %v125 = vld [vmem:[%s0 + $0x270] sm:$0xff]
  %v126 = vld [vmem:[%s0 + $0x278] sm:$0xff]
  %v127 = vld [vmem:[%s0 + $0x280] sm:$0xff]
  %v128 = vld [vmem:[%s0 + $0x288] sm:$0xff]
  %v129 = vld [vmem:[%s0 + $0x290] sm:$0xff]
  %v130 = vld [vmem:[%s0 + $0x298] sm:$0xff]
  %v131 = vld [vmem:[%s0 + $0x2a0] sm:$0xff]
  %v132 = vld [vmem:[%s0 + $0x2a8] sm:$0xff]
  %v133 = vld [vmem:[%s0 + $0x2b0] sm:$0xff]
  %v134 = vld [vmem:[%s0 + $0x2b8] sm:$0xff]
  %v135 = vld [vmem:[%s0 + $0x2c0] sm:$0xff]
  %v136 = vld [vmem:[%s0 + $0x2c8] sm:$0xff]
  %v137 = vld [vmem:[%s0 + $0x2d0] sm:$0xff]
  %v138 = vld [vmem:[%s0 + $0x2d8] sm:$0xff]
  %v139 = vld [vmem:[%s0 + $0x2e0] sm:$0xff]
  %v140 = vld [vmem:[%s0 + $0x2e8] sm:$0xff]
  %v141 = vld [vmem:[%s0 + $0x2f0] sm:$0xff]
  %v142 = vld [vmem:[%s0 + $0x2f8] sm:$0xff]
  %v143 = vld [vmem:[%s0 + $0x300] sm:$0xff]
  %v144 = vld [vmem:[%s0 + $0x308] sm:$0xff]
  %v145 = vld [vmem:[%s0 + $0x310] sm:$0xff]
  %v146 = vld [vmem:[%s0 + $0x318] sm:$0xff]
  %v147 = vld [vmem:[%s0 + $0x320] sm:$0xff]
  %v148 = vld [vmem:[%s0 + $0x328] sm:$0xff]
  %v149 = vld [vmem:[%s0 + $0x330] sm:$0xff]
  %v150 = vld [vmem:[%s0 + $0x338] sm:$0xff]
  %v151 = vld [vmem:[%s0 + $0x340] sm:$0xff]
  %v152 = vld [vmem:[%s0 + $0x348] sm:$0xff]
  %v153 = vld [vmem:[%s0 + $0x350] sm:$0xff]
  %v154 = vld [vmem:[%s0 + $0x358] sm:$0xff]
  %v155 = vld [vmem:[%s0 + $0x360] sm:$0xff]
  %v156 = vld [vmem:[%s0 + $0x368] sm:$0xff]
  %v157 = vld [vmem:[%s0 + $0x370] sm:$0xff]
  %v158 = vld [vmem:[%s0 + $0x378] sm:$0xff]
  %v159 = vld [vmem:[%s0 + $0x380] sm:$0xff]
  %v160 = vld [vmem:[%s0 + $0x388] sm:$0xff]
  %v161 = vld [vmem:[%s0 + $0x390] sm:$0xff]
  %v162 = vld [vmem:[%s0 + $0x398] sm:$0xff]
  %v163 = vld [vmem:[%s0 + $0x3a0] sm:$0xff]
  %v164 = vld [vmem:[%s0 + $0x3a8] sm:$0xff]
  %v165 = vld [vmem:[%s0 + $0x3b0] sm:$0xff]
  %v166 = vld [vmem:[%s0 + $0x3b8] sm:$0xff]
  %v167 = vld [vmem:[%s0 + $0x3c0] sm:$0xff]
  %v168 = vld [vmem:[%s0 + $0x3c8] sm:$0xff]
  %v169 = vld [vmem:[%s0 + $0x3d0] sm:$0xff]
  %v170 = vld [vmem:[%s0 + $0x3d8] sm:$0xff]
  %v171 = vld [vmem:[%s0 + $0x3e0] sm:$0xff]
  %v172 = vld [vmem:[%s0 + $0x3e8] sm:$0xff]
  %v173 = vld [vmem:[%s0 + $0x3f0] sm:$0xff]
  %v174 = vld [vmem:[%s0 + $0x3f8] sm:$0xff]
  %v175 = vld [vmem:[%s0 + $0x400] sm:$0xff]
  %v176 = vld [vmem:[%s0 + $0x408] sm:$0xff]
  %v177 = vld [vmem:[%s0 + $0x410] sm:$0xff]
  %v178 = vld [vmem:[%s0 + $0x418] sm:$0xff]
  %v179 = vld [vmem:[%s0 + $0x420] sm:$0xff]
  %v180 = vld [vmem:[%s0 + $0x428] sm:$0xff]
  %v181 = vld [vmem:[%s0 + $0x430] sm:$0xff]
  %v182 = vld [vmem:[%s0 + $0x438] sm:$0xff]
  %v183 = vld [vmem:[%s0 + $0x440] sm:$0xff]
  %v184 = vld [vmem:[%s0 + $0x448] sm:$0xff]
  %v185 = vld [vmem:[%s0 + $0x450] sm:$0xff]
  %v186 = vld [vmem:[%s0 + $0x458] sm:$0xff]
  %v187 = vld [vmem:[%s0 + $0x460] sm:$0xff]
  %v188 = vld [vmem:[%s0 + $0x468] sm:$0xff]
  %v189 = vld [vmem:[%s0 + $0x470] sm:$0xff]
  %v190 = vld [vmem:[%s0 + $0x478] sm:$0xff]
  %v191 = vld [vmem:[%s0 + $0x480] sm:$0xff]
  %v192 = vld [vmem:[%s0 + $0x488] sm:$0xff]
  %v193 = vld [vmem:[%s0 + $0x490] sm:$0xff]
  %v194 = vld [vmem:[%s0 + $0x498] sm:$0xff]
  %v195 = vld [vmem:[%s0 + $0x4a0] sm:$0xff]
  %v196 = vld [vmem:[%s0 + $0x4a8] sm:$0xff]
  %v197 = vld [vmem:[%s0 + $0x4b0] sm:$0xff]
  %v198 = vld [vmem:[%s0 + $0x4b8] sm:$0xff]
  %v199 = vld [vmem:[%s0 + $0x4c0] sm:$0xff]
  %v200 = vld [vmem:[%s0 + $0x4c8] sm:$0xff]
  %v201 = vld [vmem:[%s0 + $0x4d0] sm:$0xff]
  %v202 = vld [vmem:[%s0 + $0x4d8] sm:$0xff]
  %v203 = vld [vmem:[%s0 + $0x4e0] sm:$0xff]
  %v204 = vld [vmem:[%s0 + $0x4e8] sm:$0xff]
  %v205 = vld [vmem:[%s0 + $0x4f0] sm:$0xff]
  %v206 = vld [vmem:[%s0 + $0x4f8] sm:$0xff]
  %v207 = vld [vmem:[%s0 + $0x500] sm:$0xff]
  %v208 = vld [vmem:[%s0 + $0x508] sm:$0xff]
  %v209 = vld [vmem:[%s0 + $0x510] sm:$0xff]
  %v210 = vld [vmem:[%s0 + $0x518] sm:$0xff]
  %v211 = vld [vmem:[%s0 + $0x520] sm:$0xff]
  %v212 = vld [vmem:[%s0 + $0x528] sm:$0xff]
  %v213 = vld [vmem:[%s0 + $0x530] sm:$0xff]
  %v214 = vld [vmem:[%s0 + $0x538] sm:$0xff]
  %v215 = vld [vmem:[%s0 + $0x540] sm:$0xff]
  %v216 = vld [vmem:[%s0 + $0x548] sm:$0xff]
  %v217 = vld [vmem:[%s0 + $0x550] sm:$0xff]
  %v218 = vld [vmem:[%s0 + $0x558] sm:$0xff]
  %v219 = vld [vmem:[%s0 + $0x560] sm:$0xff]
  %v220 = vld [vmem:[%s0 + $0x568] sm:$0xff]
  %v221 = vld [vmem:[%s0 + $0x570] sm:$0xff]
  %v222 = vld [vmem:[%s0 + $0x578] sm:$0xff]
  %v223 = vld [vmem:[%s0 + $0x580] sm:$0xff]
  %v224 = vld [vmem:[%s0 + $0x588] sm:$0xff]
  %v225 = vld [vmem:[%s0 + $0x590] sm:$0xff]
  %v226 = vld [vmem:[%s0 + $0x598] sm:$0xff]
  %v227 = vld [vmem:[%s0 + $0x5a0] sm:$0xff]
  %v228 = vld [vmem:[%s0 + $0x5a8] sm:$0xff]
  %v229 = vld [vmem:[%s0 + $0x5b0] sm:$0xff]
  %v230 = vld [vmem:[%s0 + $0x5b8] sm:$0xff]
  %v231 = vld [vmem:[%s0 + $0x5c0] sm:$0xff]
  %v232 = vld [vmem:[%s0 + $0x5c8] sm:$0xff]
  %v233 = vld [vmem:[%s0 + $0x5d0] sm:$0xff]
  %v234 = vld [vmem:[%s0 + $0x5d8] sm:$0xff]
  %v235 = vld [vmem:[%s0 + $0x5e0] sm:$0xff]
  %v236 = vld [vmem:[%s0 + $0x5e8] sm:$0xff]
  %v237 = vld [vmem:[%s0 + $0x5f0] sm:$0xff]
  %v238 = vld [vmem:[%s0 + $0x5f8] sm:$0xff]
  %v239 = vld [vmem:[%s0 + $0x600] sm:$0xff]
  %v240 = vld [vmem:[%s0 + $0x608] sm:$0xff]
  %v241 = vld [vmem:[%s0 + $0x610] sm:$0xff]
  %v242 = vld [vmem:[%s0 + $0x618] sm:$0xff]
  %v243 = vld [vmem:[%s0 + $0x620] sm:$0xff]
  %v244 = vld [vmem:[%s0 + $0x628] sm:$0xff]
  %v245 = vld [vmem:[%s0 + $0x630] sm:$0xff]
  %v246 = vld [vmem:[%s0 + $0x638] sm:$0xff]
  %v247 = vpack.c.bf16 %v49, %v47
  %v248 = vpack.c.bf16 %v50, %v48
  %v249 = vpack.c.bf16 %v53, %v51
  %v250 = vpack.c.bf16 %v54, %v52
  %v251 = vpack.c.bf16 %v57, %v55
  %v252 = vpack.c.bf16 %v58, %v56
  %v253 = vpack.c.bf16 %v61, %v59
  %v254 = vpack.c.bf16 %v62, %v60
  %v255 = vpack.c.bf16 %v65, %v63
  %v256 = vpack.c.bf16 %v66, %v64
  %v257 = vpack.c.bf16 %v69, %v67
  %v258 = vpack.c.bf16 %v70, %v68
  %v259 = vpack.c.bf16 %v73, %v71
  %v260 = vpack.c.bf16 %v74, %v72
  %v261 = vpack.c.bf16 %v77, %v75
  %v262 = vpack.c.bf16 %v78, %v76
  %v263 = vpack.c.bf16 %v81, %v79
  %v264 = vpack.c.bf16 %v82, %v80
  %v265 = vpack.c.bf16 %v85, %v83
  %v266 = vpack.c.bf16 %v86, %v84
  %v267 = vpack.c.bf16 %v89, %v87
  %v268 = vpack.c.bf16 %v90, %v88
  %v269 = vpack.c.bf16 %v93, %v91
  %v270 = vpack.c.bf16 %v94, %v92
  %v271 = vpack.c.bf16 %v97, %v95
  %v272 = vpack.c.bf16 %v98, %v96
  %v273 = vpack.c.bf16 %v101, %v99
  %v274 = vpack.c.bf16 %v102, %v100
  %v275 = vpack.c.bf16 %v105, %v103
  %v276 = vpack.c.bf16 %v106, %v104
  %v277 = vpack.c.bf16 %v109, %v107
  %v278 = vpack.c.bf16 %v110, %v108
  %v279 = vpack.c.bf16 %v113, %v111
  %v280 = vpack.c.bf16 %v114, %v112
  %v281 = vpack.c.bf16 %v117, %v115
  %v282 = vpack.c.bf16 %v118, %v116
  %v283 = vpack.c.bf16 %v121, %v119
  %v284 = vpack.c.bf16 %v122, %v120
  %v285 = vpack.c.bf16 %v125, %v123
  %v286 = vpack.c.bf16 %v126, %v124
  %v287 = vpack.c.bf16 %v129, %v127
  %v288 = vpack.c.bf16 %v130, %v128
  %v289 = vpack.c.bf16 %v133, %v131
  %v290 = vpack.c.bf16 %v134, %v132
  %v291 = vpack.c.bf16 %v137, %v135
  %v292 = vpack.c.bf16 %v138, %v136
  %v293 = vpack.c.bf16 %v141, %v139
  %v294 = vpack.c.bf16 %v142, %v140
  %v295 = vpack.c.bf16 %v145, %v143
  %v296 = vpack.c.bf16 %v146, %v144
  %v297 = vpack.c.bf16 %v149, %v147
  %v298 = vpack.c.bf16 %v150, %v148
  %v299 = vpack.c.bf16 %v153, %v151
  %v300 = vpack.c.bf16 %v154, %v152
  %v301 = vpack.c.bf16 %v157, %v155
  %v302 = vpack.c.bf16 %v158, %v156
  %v303 = vpack.c.bf16 %v161, %v159
  %v304 = vpack.c.bf16 %v162, %v160
  %v305 = vpack.c.bf16 %v165, %v163
  %v306 = vpack.c.bf16 %v166, %v164
  %v307 = vpack.c.bf16 %v169, %v167
  %v308 = vpack.c.bf16 %v170, %v168
  %v309 = vpack.c.bf16 %v173, %v171
  %v310 = vpack.c.bf16 %v174, %v172
  %v311 = vpack.c.bf16 %v177, %v175
  %v312 = vpack.c.bf16 %v178, %v176
  %v313 = vpack.c.bf16 %v181, %v179
  %v314 = vpack.c.bf16 %v182, %v180
  %v315 = vpack.c.bf16 %v185, %v183
  %v316 = vpack.c.bf16 %v186, %v184
  %v317 = vpack.c.bf16 %v189, %v187
  %v318 = vpack.c.bf16 %v190, %v188
  %v319 = vpack.c.bf16 %v193, %v191
  %v320 = vpack.c.bf16 %v194, %v192
  %v321 = vpack.c.bf16 %v197, %v195
  %v322 = vpack.c.bf16 %v198, %v196
  %v323 = vpack.c.bf16 %v201, %v199
  %v324 = vpack.c.bf16 %v202, %v200
  %v325 = vpack.c.bf16 %v205, %v203
  %v326 = vpack.c.bf16 %v206, %v204
  %v327 = vpack.c.bf16 %v209, %v207
  %v328 = vpack.c.bf16 %v210, %v208
  %v329 = vpack.c.bf16 %v213, %v211
  %v330 = vpack.c.bf16 %v214, %v212
  %v331 = vpack.c.bf16 %v217, %v215
  %v332 = vpack.c.bf16 %v218, %v216
  %v333 = vpack.c.bf16 %v221, %v219
  %v334 = vpack.c.bf16 %v222, %v220
  %v335 = vpack.c.bf16 %v225, %v223
  %v336 = vpack.c.bf16 %v226, %v224
  %v337 = vpack.c.bf16 %v229, %v227
  %v338 = vpack.c.bf16 %v230, %v228
  %v339 = vpack.c.bf16 %v233, %v231
  %v340 = vpack.c.bf16 %v234, %v232
  %v341 = vpack.c.bf16 %v237, %v235
  %v342 = vpack.c.bf16 %v238, %v236
  %v343 = vpack.c.bf16 %v241, %v239
  %v344 = vpack.c.bf16 %v242, %v240
  %v345 = vpack.c.bf16 %v245, %v243
  %v346 = vpack.c.bf16 %v246, %v244
  %v347 = vld [vmem:[%s2] sm:$0x1]
  %v349 = vlaneseq
  %v350 = vshrl.u32 %v349, 7
  %v351 = vsub.s32 0, %v350
  %v352 = vrot.slane %v347, %v351
  %v386 = vunpack.c.l.b16 %v15
  %v387 = vunpack.c.l.b16 %v16
  %v388 = vunpack.c.l.b16 %v17
  %v389 = vunpack.c.l.b16 %v18
  %v390 = vunpack.c.l.b16 %v19
  %v391 = vunpack.c.l.b16 %v20
  %v392 = vunpack.c.l.b16 %v21
  %v393 = vunpack.c.l.b16 %v22
  %v394 = vunpack.c.l.b16 %v23
  %v395 = vunpack.c.l.b16 %v24
  %v396 = vunpack.c.l.b16 %v25
  %v397 = vunpack.c.l.b16 %v26
  %v398 = vunpack.c.l.b16 %v27
  %v399 = vunpack.c.l.b16 %v28
  %v400 = vunpack.c.l.b16 %v29
  %v401 = vunpack.c.l.b16 %v30
  %v402 = vunpack.c.l.b16 %v31
  %v403 = vunpack.c.l.b16 %v32
  %v404 = vunpack.c.l.b16 %v33
  %v405 = vunpack.c.l.b16 %v34
  %v406 = vunpack.c.l.b16 %v35
  %v407 = vunpack.c.l.b16 %v36
  %v408 = vunpack.c.l.b16 %v37
  %v409 = vunpack.c.l.b16 %v38
  %v410 = vunpack.c.l.b16 %v39
  %v411 = vunpack.c.l.b16 %v40
  %v412 = vunpack.c.l.b16 %v41
  %v413 = vunpack.c.l.b16 %v42
  %v414 = vunpack.c.l.b16 %v43
  %v415 = vunpack.c.l.b16 %v44
  %v416 = vunpack.c.l.b16 %v45
  %v417 = vunpack.c.l.b16 %v46
  %v418 = vpack.c.b16 %v387, %v386
  %v419 = vpack.c.b16 %v389, %v388
  %v420 = vpack.c.b16 %v391, %v390
  %v421 = vpack.c.b16 %v393, %v392
  %v422 = vpack.c.b16 %v395, %v394
  %v423 = vpack.c.b16 %v397, %v396
  %v424 = vpack.c.b16 %v399, %v398
  %v425 = vpack.c.b16 %v401, %v400
  %v426 = vpack.c.b16 %v403, %v402
  %v427 = vpack.c.b16 %v405, %v404
  %v428 = vpack.c.b16 %v407, %v406
  %v429 = vpack.c.b16 %v409, %v408
  %v430 = vpack.c.b16 %v411, %v410
  %v431 = vpack.c.b16 %v413, %v412
  %v432 = vpack.c.b16 %v415, %v414
  %v433 = vpack.c.b16 %v417, %v416
  %450 = vmatprep.subr.bf16.mxu0 0
  %451 = vmatpush1.bf16.msra.mxu0 %v425
  %452 = vmatprep.subr.bf16.mxu0 0
  %453 = vmatpush1.bf16.msra.mxu0 %v424
  %454 = vmatprep.subr.bf16.mxu0 0
  %455 = vmatpush1.bf16.msra.mxu0 %v423
  %456 = vmatprep.subr.bf16.mxu0 0
  %457 = vmatpush1.bf16.msra.mxu0 %v422
  %458 = vmatprep.subr.bf16.mxu0 0
  %459 = vmatpush1.bf16.msra.mxu0 %v421
  %460 = vmatprep.subr.bf16.mxu0 0
  %461 = vmatpush1.bf16.msra.mxu0 %v420
  %462 = vmatprep.subr.bf16.mxu0 0
  %463 = vmatpush1.bf16.msra.mxu0 %v419
  %464 = vmatprep.subr.bf16.mxu0 0
  %465 = vmatpush1.bf16.msra.mxu0 %v418
  %466 = vmatprep.subr.bf16.mxu0 0
  %467 = vmatpush2.bf16.msra.mxu0 %v433
  %468 = vmatprep.subr.bf16.mxu0 0
  %469 = vmatpush2.bf16.msra.mxu0 %v432
  %470 = vmatprep.subr.bf16.mxu0 0
  %471 = vmatpush2.bf16.msra.mxu0 %v431
  %472 = vmatprep.subr.bf16.mxu0 0
  %473 = vmatpush2.bf16.msra.mxu0 %v430
  %474 = vmatprep.subr.bf16.mxu0 0
  %475 = vmatpush2.bf16.msra.mxu0 %v429
  %476 = vmatprep.subr.bf16.mxu0 0
  %477 = vmatpush2.bf16.msra.mxu0 %v428
  %478 = vmatprep.subr.bf16.mxu0 0
  %479 = vmatpush2.bf16.msra.mxu0 %v427
  %480 = vmatprep.subr.bf16.mxu0 0
  %481 = vmatpush2.bf16.msra.mxu0 %v426
  %482 = vmatprep.mubr.bf16.mxu0 %v248
  %483 = vmatmul.mubr.bf16.gmra.mxu0 %v247
  %v484 = vpop.f32.mrf.mxu0
  %v485 = vadd.f32 %v352, %v484
  %v486 = vpop.f32.mrf.mxu0
  %v487 = vpop.f32.mrf.mxu0
  %v488 = vadd.f32 %v352, %v487
  %v489 = vpop.f32.mrf.mxu0
  %490 = vmatprep.mubr.bf16.mxu0 %v250
  %491 = vmatmul.mubr.bf16.gmra.mxu0 %v249
  %v492 = vpop.f32.mrf.mxu0
  %v493 = vadd.f32 %v352, %v492
  %v494 = vpop.f32.mrf.mxu0
  %v495 = vpop.f32.mrf.mxu0
  %v496 = vadd.f32 %v352, %v495
  %v497 = vpop.f32.mrf.mxu0
  %498 = vmatprep.mubr.bf16.mxu0 %v252
  %499 = vmatmul.mubr.bf16.gmra.mxu0 %v251
  %v500 = vpop.f32.mrf.mxu0
  %v501 = vadd.f32 %v352, %v500
  %v502 = vpop.f32.mrf.mxu0
  %v503 = vpop.f32.mrf.mxu0
  %v504 = vadd.f32 %v352, %v503
  %v505 = vpop.f32.mrf.mxu0
  %506 = vmatprep.mubr.bf16.mxu0 %v254
  %507 = vmatmul.mubr.bf16.gmra.mxu0 %v253
  %v508 = vpop.f32.mrf.mxu0
  %v509 = vadd.f32 %v352, %v508
  %v510 = vpop.f32.mrf.mxu0
  %v511 = vpop.f32.mrf.mxu0
  %v512 = vadd.f32 %v352, %v511
  %v513 = vpop.f32.mrf.mxu0
  %514 = vmatprep.mubr.bf16.mxu0 %v256
  %515 = vmatmul.mubr.bf16.gmra.mxu0 %v255
  %v516 = vpop.f32.mrf.mxu0
  %v517 = vadd.f32 %v352, %v516
  %v518 = vpop.f32.mrf.mxu0
  %v519 = vpop.f32.mrf.mxu0
  %v520 = vadd.f32 %v352, %v519
  %v521 = vpop.f32.mrf.mxu0
  %522 = vmatprep.mubr.bf16.mxu0 %v258
  %523 = vmatmul.mubr.bf16.gmra.mxu0 %v257
  %v524 = vpop.f32.mrf.mxu0
  %v525 = vadd.f32 %v352, %v524
  %v526 = vpop.f32.mrf.mxu0
  %v527 = vpop.f32.mrf.mxu0
  %v528 = vadd.f32 %v352, %v527
  %v529 = vpop.f32.mrf.mxu0
  %530 = vmatprep.mubr.bf16.mxu0 %v260
  %531 = vmatmul.mubr.bf16.gmra.mxu0 %v259
  %v532 = vpop.f32.mrf.mxu0
  %v533 = vadd.f32 %v352, %v532
  %v534 = vpop.f32.mrf.mxu0
  %v535 = vpop.f32.mrf.mxu0
  %v536 = vadd.f32 %v352, %v535
  %v537 = vpop.f32.mrf.mxu0
  %538 = vmatprep.mubr.bf16.mxu0 %v262
  %539 = vmatmul.mubr.bf16.gmra.mxu0 %v261
  %v540 = vpop.f32.mrf.mxu0
  %v541 = vadd.f32 %v352, %v540
  %v542 = vpop.f32.mrf.mxu0
  %v543 = vpop.f32.mrf.mxu0
  %v544 = vadd.f32 %v352, %v543
  %v545 = vpop.f32.mrf.mxu0
  %546 = vmatprep.mubr.bf16.mxu0 %v264
  %547 = vmatmul.mubr.bf16.gmra.mxu0 %v263
  %v548 = vpop.f32.mrf.mxu0
  %v549 = vadd.f32 %v352, %v548
  %v550 = vpop.f32.mrf.mxu0
  %v551 = vpop.f32.mrf.mxu0
  %v552 = vadd.f32 %v352, %v551
  %v553 = vpop.f32.mrf.mxu0
  %554 = vmatprep.mubr.bf16.mxu0 %v266
  %555 = vmatmul.mubr.bf16.gmra.mxu0 %v265
  %v556 = vpop.f32.mrf.mxu0
  %v557 = vadd.f32 %v352, %v556
  %v558 = vpop.f32.mrf.mxu0
  %v559 = vpop.f32.mrf.mxu0
  %v560 = vadd.f32 %v352, %v559
  %v561 = vpop.f32.mrf.mxu0
  %562 = vmatprep.mubr.bf16.mxu0 %v268
  %563 = vmatmul.mubr.bf16.gmra.mxu0 %v267
  %v564 = vpop.f32.mrf.mxu0
  %v565 = vadd.f32 %v352, %v564
  %v566 = vpop.f32.mrf.mxu0
  %v567 = vpop.f32.mrf.mxu0
  %v568 = vadd.f32 %v352, %v567
  %v569 = vpop.f32.mrf.mxu0
  %570 = vmatprep.mubr.bf16.mxu0 %v270
  %571 = vmatmul.mubr.bf16.gmra.mxu0 %v269
  %v572 = vpop.f32.mrf.mxu0
  %v573 = vadd.f32 %v352, %v572
  %v574 = vpop.f32.mrf.mxu0
  %v575 = vpop.f32.mrf.mxu0
  %v576 = vadd.f32 %v352, %v575
  %v577 = vpop.f32.mrf.mxu0
  %578 = vmatprep.mubr.bf16.mxu0 %v272
  %579 = vmatmul.mubr.bf16.gmra.mxu0 %v271
  %v580 = vpop.f32.mrf.mxu0
  %v581 = vadd.f32 %v352, %v580
  %v582 = vpop.f32.mrf.mxu0
  %v583 = vpop.f32.mrf.mxu0
  %v584 = vadd.f32 %v352, %v583
  %v585 = vpop.f32.mrf.mxu0
  %586 = vmatprep.mubr.bf16.mxu0 %v274
  %587 = vmatmul.mubr.bf16.gmra.mxu0 %v273
  %v588 = vpop.f32.mrf.mxu0
  %v589 = vadd.f32 %v352, %v588
  %v590 = vpop.f32.mrf.mxu0
  %v591 = vpop.f32.mrf.mxu0
  %v592 = vadd.f32 %v352, %v591
  %v593 = vpop.f32.mrf.mxu0
  %594 = vmatprep.mubr.bf16.mxu0 %v276
  %595 = vmatmul.mubr.bf16.gmra.mxu0 %v275
  %v596 = vpop.f32.mrf.mxu0
  %v597 = vadd.f32 %v352, %v596
  %v598 = vpop.f32.mrf.mxu0
  %v599 = vpop.f32.mrf.mxu0
  %v600 = vadd.f32 %v352, %v599
  %v601 = vpop.f32.mrf.mxu0
  %602 = vmatprep.mubr.bf16.mxu0 %v278
  %603 = vmatmul.mubr.bf16.gmra.mxu0 %v277
  %v604 = vpop.f32.mrf.mxu0
  %v605 = vadd.f32 %v352, %v604
  %v606 = vpop.f32.mrf.mxu0
  %v607 = vpop.f32.mrf.mxu0
  %v608 = vadd.f32 %v352, %v607
  %v609 = vpop.f32.mrf.mxu0
  %610 = vmatprep.mubr.bf16.mxu0 %v280
  %611 = vmatmul.mubr.bf16.gmra.mxu0 %v279
  %v612 = vpop.f32.mrf.mxu0
  %v613 = vadd.f32 %v352, %v612
  %v614 = vpop.f32.mrf.mxu0
  %v615 = vpop.f32.mrf.mxu0
  %v616 = vadd.f32 %v352, %v615
  %v617 = vpop.f32.mrf.mxu0
  %618 = vmatprep.mubr.bf16.mxu0 %v282
  %619 = vmatmul.mubr.bf16.gmra.mxu0 %v281
  %v620 = vpop.f32.mrf.mxu0
  %v621 = vadd.f32 %v352, %v620
  %v622 = vpop.f32.mrf.mxu0
  %v623 = vpop.f32.mrf.mxu0
  %v624 = vadd.f32 %v352, %v623
  %v625 = vpop.f32.mrf.mxu0
  %626 = vmatprep.mubr.bf16.mxu0 %v284
  %627 = vmatmul.mubr.bf16.gmra.mxu0 %v283
  %v628 = vpop.f32.mrf.mxu0
  %v629 = vadd.f32 %v352, %v628
  %v630 = vpop.f32.mrf.mxu0
  %v631 = vpop.f32.mrf.mxu0
  %v632 = vadd.f32 %v352, %v631
  %v633 = vpop.f32.mrf.mxu0
  %634 = vmatprep.mubr.bf16.mxu0 %v286
  %635 = vmatmul.mubr.bf16.gmra.mxu0 %v285
  %v636 = vpop.f32.mrf.mxu0
  %v637 = vadd.f32 %v352, %v636
  %v638 = vpop.f32.mrf.mxu0
  %v639 = vpop.f32.mrf.mxu0
  %v640 = vadd.f32 %v352, %v639
  %v641 = vpop.f32.mrf.mxu0
  %642 = vmatprep.mubr.bf16.mxu0 %v288
  %643 = vmatmul.mubr.bf16.gmra.mxu0 %v287
  %v644 = vpop.f32.mrf.mxu0
  %v645 = vadd.f32 %v352, %v644
  %v646 = vpop.f32.mrf.mxu0
  %v647 = vpop.f32.mrf.mxu0
  %v648 = vadd.f32 %v352, %v647
  %v649 = vpop.f32.mrf.mxu0
  %650 = vmatprep.mubr.bf16.mxu0 %v290
  %651 = vmatmul.mubr.bf16.gmra.mxu0 %v289
  %v652 = vpop.f32.mrf.mxu0
  %v653 = vadd.f32 %v352, %v652
  %v654 = vpop.f32.mrf.mxu0
  %v655 = vpop.f32.mrf.mxu0
  %v656 = vadd.f32 %v352, %v655
  %v657 = vpop.f32.mrf.mxu0
  %658 = vmatprep.mubr.bf16.mxu0 %v292
  %659 = vmatmul.mubr.bf16.gmra.mxu0 %v291
  %v660 = vpop.f32.mrf.mxu0
  %v661 = vadd.f32 %v352, %v660
  %v662 = vpop.f32.mrf.mxu0
  %v663 = vpop.f32.mrf.mxu0
  %v664 = vadd.f32 %v352, %v663
  %v665 = vpop.f32.mrf.mxu0
  %666 = vmatprep.mubr.bf16.mxu0 %v294
  %667 = vmatmul.mubr.bf16.gmra.mxu0 %v293
  %v668 = vpop.f32.mrf.mxu0
  %v669 = vadd.f32 %v352, %v668
  %v670 = vpop.f32.mrf.mxu0
  %v671 = vpop.f32.mrf.mxu0
  %v672 = vadd.f32 %v352, %v671
  %v673 = vpop.f32.mrf.mxu0
  %674 = vmatprep.mubr.bf16.mxu0 %v296
  %675 = vmatmul.mubr.bf16.gmra.mxu0 %v295
  %v676 = vpop.f32.mrf.mxu0
  %v677 = vadd.f32 %v352, %v676
  %v678 = vpop.f32.mrf.mxu0
  %v679 = vpop.f32.mrf.mxu0
  %v680 = vadd.f32 %v352, %v679
  %v681 = vpop.f32.mrf.mxu0
  %682 = vmatprep.mubr.bf16.mxu0 %v298
  %683 = vmatmul.mubr.bf16.gmra.mxu0 %v297
  %v684 = vpop.f32.mrf.mxu0
  %v685 = vadd.f32 %v352, %v684
  %v686 = vpop.f32.mrf.mxu0
  %v687 = vpop.f32.mrf.mxu0
  %v688 = vadd.f32 %v352, %v687
  %v689 = vpop.f32.mrf.mxu0
  %690 = vmatprep.mubr.bf16.mxu0 %v300
  %691 = vmatmul.mubr.bf16.gmra.mxu0 %v299
  %v692 = vpop.f32.mrf.mxu0
  %v693 = vadd.f32 %v352, %v692
  %v694 = vpop.f32.mrf.mxu0
  %v695 = vpop.f32.mrf.mxu0
  %v696 = vadd.f32 %v352, %v695
  %v697 = vpop.f32.mrf.mxu0
  %698 = vmatprep.mubr.bf16.mxu0 %v302
  %699 = vmatmul.mubr.bf16.gmra.mxu0 %v301
  %v700 = vpop.f32.mrf.mxu0
  %v701 = vadd.f32 %v352, %v700
  %v702 = vpop.f32.mrf.mxu0
  %v703 = vpop.f32.mrf.mxu0
  %v704 = vadd.f32 %v352, %v703
  %v705 = vpop.f32.mrf.mxu0
  %706 = vmatprep.mubr.bf16.mxu0 %v304
  %707 = vmatmul.mubr.bf16.gmra.mxu0 %v303
  %v708 = vpop.f32.mrf.mxu0
  %v709 = vadd.f32 %v352, %v708
  %v710 = vpop.f32.mrf.mxu0
  %v711 = vpop.f32.mrf.mxu0
  %v712 = vadd.f32 %v352, %v711
  %v713 = vpop.f32.mrf.mxu0
  %714 = vmatprep.mubr.bf16.mxu0 %v306
  %715 = vmatmul.mubr.bf16.gmra.mxu0 %v305
  %v716 = vpop.f32.mrf.mxu0
  %v717 = vadd.f32 %v352, %v716
  %v718 = vpop.f32.mrf.mxu0
  %v719 = vpop.f32.mrf.mxu0
  %v720 = vadd.f32 %v352, %v719
  %v721 = vpop.f32.mrf.mxu0
  %722 = vmatprep.mubr.bf16.mxu0 %v308
  %723 = vmatmul.mubr.bf16.gmra.mxu0 %v307
  %v724 = vpop.f32.mrf.mxu0
  %v725 = vadd.f32 %v352, %v724
  %v726 = vpop.f32.mrf.mxu0
  %v727 = vpop.f32.mrf.mxu0
  %v728 = vadd.f32 %v352, %v727
  %v729 = vpop.f32.mrf.mxu0
  %730 = vmatprep.mubr.bf16.mxu0 %v310
  %731 = vmatmul.mubr.bf16.gmra.mxu0 %v309
  %v732 = vpop.f32.mrf.mxu0
  %v733 = vadd.f32 %v352, %v732
  %v734 = vpop.f32.mrf.mxu0
  %v735 = vpop.f32.mrf.mxu0
  %v736 = vadd.f32 %v352, %v735
  %v737 = vpop.f32.mrf.mxu0
  %738 = vmatprep.mubr.bf16.mxu0 %v312
  %739 = vmatmul.mubr.bf16.gmra.mxu0 %v311
  %v740 = vpop.f32.mrf.mxu0
  %v741 = vadd.f32 %v352, %v740
  %v742 = vpop.f32.mrf.mxu0
  %v743 = vpop.f32.mrf.mxu0
  %v744 = vadd.f32 %v352, %v743
  %v745 = vpop.f32.mrf.mxu0
  %746 = vmatprep.mubr.bf16.mxu0 %v314
  %747 = vmatmul.mubr.bf16.gmra.mxu0 %v313
  %v748 = vpop.f32.mrf.mxu0
  %v749 = vadd.f32 %v352, %v748
  %v750 = vpop.f32.mrf.mxu0
  %v751 = vpop.f32.mrf.mxu0
  %v752 = vadd.f32 %v352, %v751
  %v753 = vpop.f32.mrf.mxu0
  %754 = vmatprep.mubr.bf16.mxu0 %v316
  %755 = vmatmul.mubr.bf16.gmra.mxu0 %v315
  %v756 = vpop.f32.mrf.mxu0
  %v757 = vadd.f32 %v352, %v756
  %v758 = vpop.f32.mrf.mxu0
  %v759 = vpop.f32.mrf.mxu0
  %v760 = vadd.f32 %v352, %v759
  %v761 = vpop.f32.mrf.mxu0
  %762 = vmatprep.mubr.bf16.mxu0 %v318
  %763 = vmatmul.mubr.bf16.gmra.mxu0 %v317
  %v764 = vpop.f32.mrf.mxu0
  %v765 = vadd.f32 %v352, %v764
  %v766 = vpop.f32.mrf.mxu0
  %v767 = vpop.f32.mrf.mxu0
  %v768 = vadd.f32 %v352, %v767
  %v769 = vpop.f32.mrf.mxu0
  %770 = vmatprep.mubr.bf16.mxu0 %v320
  %771 = vmatmul.mubr.bf16.gmra.mxu0 %v319
  %v772 = vpop.f32.mrf.mxu0
  %v773 = vadd.f32 %v352, %v772
  %v774 = vpop.f32.mrf.mxu0
  %v775 = vpop.f32.mrf.mxu0
  %v776 = vadd.f32 %v352, %v775
  %v777 = vpop.f32.mrf.mxu0
  %778 = vmatprep.mubr.bf16.mxu0 %v322
  %779 = vmatmul.mubr.bf16.gmra.mxu0 %v321
  %v780 = vpop.f32.mrf.mxu0
  %v781 = vadd.f32 %v352, %v780
  %v782 = vpop.f32.mrf.mxu0
  %v783 = vpop.f32.mrf.mxu0
  %v784 = vadd.f32 %v352, %v783
  %v785 = vpop.f32.mrf.mxu0
  %786 = vmatprep.mubr.bf16.mxu0 %v324
  %787 = vmatmul.mubr.bf16.gmra.mxu0 %v323
  %v788 = vpop.f32.mrf.mxu0
  %v789 = vadd.f32 %v352, %v788
  %v790 = vpop.f32.mrf.mxu0
  %v791 = vpop.f32.mrf.mxu0
  %v792 = vadd.f32 %v352, %v791
  %v793 = vpop.f32.mrf.mxu0
  %794 = vmatprep.mubr.bf16.mxu0 %v326
  %795 = vmatmul.mubr.bf16.gmra.mxu0 %v325
  %v796 = vpop.f32.mrf.mxu0
  %v797 = vadd.f32 %v352, %v796
  %v798 = vpop.f32.mrf.mxu0
  %v799 = vpop.f32.mrf.mxu0
  %v800 = vadd.f32 %v352, %v799
  %v801 = vpop.f32.mrf.mxu0
  %802 = vmatprep.mubr.bf16.mxu0 %v328
  %803 = vmatmul.mubr.bf16.gmra.mxu0 %v327
  %v804 = vpop.f32.mrf.mxu0
  %v805 = vadd.f32 %v352, %v804
  %v806 = vpop.f32.mrf.mxu0
  %v807 = vpop.f32.mrf.mxu0
  %v808 = vadd.f32 %v352, %v807
  %v809 = vpop.f32.mrf.mxu0
  %810 = vmatprep.mubr.bf16.mxu0 %v330
  %811 = vmatmul.mubr.bf16.gmra.mxu0 %v329
  %v812 = vpop.f32.mrf.mxu0
  %v813 = vadd.f32 %v352, %v812
  %v814 = vpop.f32.mrf.mxu0
  %v815 = vpop.f32.mrf.mxu0
  %v816 = vadd.f32 %v352, %v815
  %v817 = vpop.f32.mrf.mxu0
  %818 = vmatprep.mubr.bf16.mxu0 %v332
  %819 = vmatmul.mubr.bf16.gmra.mxu0 %v331
  %v820 = vpop.f32.mrf.mxu0
  %v821 = vadd.f32 %v352, %v820
  %v822 = vpop.f32.mrf.mxu0
  %v823 = vpop.f32.mrf.mxu0
  %v824 = vadd.f32 %v352, %v823
  %v825 = vpop.f32.mrf.mxu0
  %826 = vmatprep.mubr.bf16.mxu0 %v334
  %827 = vmatmul.mubr.bf16.gmra.mxu0 %v333
  %v828 = vpop.f32.mrf.mxu0
  %v829 = vadd.f32 %v352, %v828
  %v830 = vpop.f32.mrf.mxu0
  %v831 = vpop.f32.mrf.mxu0
  %v832 = vadd.f32 %v352, %v831
  %v833 = vpop.f32.mrf.mxu0
  %834 = vmatprep.mubr.bf16.mxu0 %v336
  %835 = vmatmul.mubr.bf16.gmra.mxu0 %v335
  %v836 = vpop.f32.mrf.mxu0
  %v837 = vadd.f32 %v352, %v836
  %v838 = vpop.f32.mrf.mxu0
  %v839 = vpop.f32.mrf.mxu0
  %v840 = vadd.f32 %v352, %v839
  %v841 = vpop.f32.mrf.mxu0
  %842 = vmatprep.mubr.bf16.mxu0 %v338
  %843 = vmatmul.mubr.bf16.gmra.mxu0 %v337
  %v844 = vpop.f32.mrf.mxu0
  %v845 = vadd.f32 %v352, %v844
  %v846 = vpop.f32.mrf.mxu0
  %v847 = vpop.f32.mrf.mxu0
  %v848 = vadd.f32 %v352, %v847
  %v849 = vpop.f32.mrf.mxu0
  %850 = vmatprep.mubr.bf16.mxu0 %v340
  %851 = vmatmul.mubr.bf16.gmra.mxu0 %v339
  %v852 = vpop.f32.mrf.mxu0
  %v853 = vadd.f32 %v352, %v852
  %v854 = vpop.f32.mrf.mxu0
  %v855 = vpop.f32.mrf.mxu0
  %v856 = vadd.f32 %v352, %v855
  %v857 = vpop.f32.mrf.mxu0
  %858 = vmatprep.mubr.bf16.mxu0 %v342
  %859 = vmatmul.mubr.bf16.gmra.mxu0 %v341
  %v860 = vpop.f32.mrf.mxu0
  %v861 = vadd.f32 %v352, %v860
  %v862 = vpop.f32.mrf.mxu0
  %v863 = vpop.f32.mrf.mxu0
  %v864 = vadd.f32 %v352, %v863
  %v865 = vpop.f32.mrf.mxu0
  %866 = vmatprep.mubr.bf16.mxu0 %v344
  %867 = vmatmul.mubr.bf16.gmra.mxu0 %v343
  %v868 = vpop.f32.mrf.mxu0
  %v869 = vadd.f32 %v352, %v868
  %v870 = vpop.f32.mrf.mxu0
  %v871 = vpop.f32.mrf.mxu0
  %v872 = vadd.f32 %v352, %v871
  %v873 = vpop.f32.mrf.mxu0
  %874 = vmatprep.mubr.bf16.mxu0 %v346
  %875 = vmatmul.mubr.bf16.gmra.mxu0 %v345
  %v876 = vpop.f32.mrf.mxu0
  %v877 = vadd.f32 %v352, %v876
  %v878 = vpop.f32.mrf.mxu0
  %v879 = vpop.f32.mrf.mxu0
  %v880 = vadd.f32 %v352, %v879
  %v881 = vpop.f32.mrf.mxu0
  %882 = vdwg.mxu0
  %v883 = vmax.f32 %v485, 0.0
  %v884 = vmax.f32 %v488, 0.0
  %v885 = vmax.f32 %v493, 0.0
  %v886 = vmax.f32 %v496, 0.0
  %v887 = vmax.f32 %v501, 0.0
  %v888 = vmax.f32 %v504, 0.0
  %v889 = vmax.f32 %v509, 0.0
  %v890 = vmax.f32 %v512, 0.0
  %v891 = vmax.f32 %v517, 0.0
  %v892 = vmax.f32 %v520, 0.0
  %v893 = vmax.f32 %v525, 0.0
  %v894 = vmax.f32 %v528, 0.0
  %v895 = vmax.f32 %v533, 0.0
  %v896 = vmax.f32 %v536, 0.0
  %v897 = vmax.f32 %v541, 0.0
  %v898 = vmax.f32 %v544, 0.0
  %v899 = vmax.f32 %v549, 0.0
  %v900 = vmax.f32 %v552, 0.0
  %v901 = vmax.f32 %v557, 0.0
  %v902 = vmax.f32 %v560, 0.0
  %v903 = vmax.f32 %v565, 0.0
  %v904 = vmax.f32 %v568, 0.0
  %v905 = vmax.f32 %v573, 0.0
  %v906 = vmax.f32 %v576, 0.0
  %v907 = vmax.f32 %v581, 0.0
  %v908 = vmax.f32 %v584, 0.0
  %v909 = vmax.f32 %v589, 0.0
  %v910 = vmax.f32 %v592, 0.0
  %v911 = vmax.f32 %v597, 0.0
  %v912 = vmax.f32 %v600, 0.0
  %v913 = vmax.f32 %v605, 0.0
  %v914 = vmax.f32 %v608, 0.0
  %v915 = vmax.f32 %v613, 0.0
  %v916 = vmax.f32 %v616, 0.0
  %v917 = vmax.f32 %v621, 0.0
  %v918 = vmax.f32 %v624, 0.0
  %v919 = vmax.f32 %v629, 0.0
  %v920 = vmax.f32 %v632, 0.0
  %v921 = vmax.f32 %v637, 0.0
  %v922 = vmax.f32 %v640, 0.0
  %v923 = vmax.f32 %v645, 0.0
  %v924 = vmax.f32 %v648, 0.0
  %v925 = vmax.f32 %v653, 0.0
  %v926 = vmax.f32 %v656, 0.0
  %v927 = vmax.f32 %v661, 0.0
  %v928 = vmax.f32 %v664, 0.0
  %v929 = vmax.f32 %v669, 0.0
  %v930 = vmax.f32 %v672, 0.0
  %v931 = vmax.f32 %v677, 0.0
  %v932 = vmax.f32 %v680, 0.0
  %v933 = vmax.f32 %v685, 0.0
  %v934 = vmax.f32 %v688, 0.0
  %v935 = vmax.f32 %v693, 0.0
  %v936 = vmax.f32 %v696, 0.0
  %v937 = vmax.f32 %v701, 0.0
  %v938 = vmax.f32 %v704, 0.0
  %v939 = vmax.f32 %v709, 0.0
  %v940 = vmax.f32 %v712, 0.0
  %v941 = vmax.f32 %v717, 0.0
  %v942 = vmax.f32 %v720, 0.0
  %v943 = vmax.f32 %v725, 0.0
  %v944 = vmax.f32 %v728, 0.0
  %v945 = vmax.f32 %v733, 0.0
  %v946 = vmax.f32 %v736, 0.0
  %v947 = vmax.f32 %v741, 0.0
  %v948 = vmax.f32 %v744, 0.0
  %v949 = vmax.f32 %v749, 0.0
  %v950 = vmax.f32 %v752, 0.0
  %v951 = vmax.f32 %v757, 0.0
  %v952 = vmax.f32 %v760, 0.0
  %v953 = vmax.f32 %v765, 0.0
  %v954 = vmax.f32 %v768, 0.0
  %v955 = vmax.f32 %v773, 0.0
  %v956 = vmax.f32 %v776, 0.0
  %v957 = vmax.f32 %v781, 0.0
  %v958 = vmax.f32 %v784, 0.0
  %v959 = vmax.f32 %v789, 0.0
  %v960 = vmax.f32 %v792, 0.0
  %v961 = vmax.f32 %v797, 0.0
  %v962 = vmax.f32 %v800, 0.0
  %v963 = vmax.f32 %v805, 0.0
  %v964 = vmax.f32 %v808, 0.0
  %v965 = vmax.f32 %v813, 0.0
  %v966 = vmax.f32 %v816, 0.0
  %v967 = vmax.f32 %v821, 0.0
  %v968 = vmax.f32 %v824, 0.0
  %v969 = vmax.f32 %v829, 0.0
  %v970 = vmax.f32 %v832, 0.0
  %v971 = vmax.f32 %v837, 0.0
  %v972 = vmax.f32 %v840, 0.0
  %v973 = vmax.f32 %v845, 0.0
  %v974 = vmax.f32 %v848, 0.0
  %v975 = vmax.f32 %v853, 0.0
  %v976 = vmax.f32 %v856, 0.0
  %v977 = vmax.f32 %v861, 0.0
  %v978 = vmax.f32 %v864, 0.0
  %v979 = vmax.f32 %v869, 0.0
  %v980 = vmax.f32 %v872, 0.0
  %v981 = vmax.f32 %v877, 0.0
  %v982 = vmax.f32 %v880, 0.0
  %vm983 = vcmask 261120
  %984 = vst.msk [vmem:[%s3] sm:$0xff] %vm983, %v883
  %985 = vst.msk [vmem:[%s3 + $0x8] sm:$0xff] %vm983, %v884
  %986 = vst.msk [vmem:[%s3 + $0x10] sm:$0xff] %vm983, %v885
  %987 = vst.msk [vmem:[%s3 + $0x18] sm:$0xff] %vm983, %v886
  %988 = vst.msk [vmem:[%s3 + $0x20] sm:$0xff] %vm983, %v887
  %989 = vst.msk [vmem:[%s3 + $0x28] sm:$0xff] %vm983, %v888
  %990 = vst.msk [vmem:[%s3 + $0x30] sm:$0xff] %vm983, %v889
  %991 = vst.msk [vmem:[%s3 + $0x38] sm:$0xff] %vm983, %v890
  %992 = vst.msk [vmem:[%s3 + $0x40] sm:$0xff] %vm983, %v891
  %993 = vst.msk [vmem:[%s3 + $0x48] sm:$0xff] %vm983, %v892
  %994 = vst.msk [vmem:[%s3 + $0x50] sm:$0xff] %vm983, %v893
  %995 = vst.msk [vmem:[%s3 + $0x58] sm:$0xff] %vm983, %v894
  %996 = vst.msk [vmem:[%s3 + $0x60] sm:$0xff] %vm983, %v895
  %997 = vst.msk [vmem:[%s3 + $0x68] sm:$0xff] %vm983, %v896
  %998 = vst.msk [vmem:[%s3 + $0x70] sm:$0xff] %vm983, %v897
  %999 = vst.msk [vmem:[%s3 + $0x78] sm:$0xff] %vm983, %v898
  %1000 = vst.msk [vmem:[%s3 + $0x80] sm:$0xff] %vm983, %v899
  %1001 = vst.msk [vmem:[%s3 + $0x88] sm:$0xff] %vm983, %v900
  %1002 = vst.msk [vmem:[%s3 + $0x90] sm:$0xff] %vm983, %v901
  %1003 = vst.msk [vmem:[%s3 + $0x98] sm:$0xff] %vm983, %v902
  %1004 = vst.msk [vmem:[%s3 + $0xa0] sm:$0xff] %vm983, %v903
  %1005 = vst.msk [vmem:[%s3 + $0xa8] sm:$0xff] %vm983, %v904
  %1006 = vst.msk [vmem:[%s3 + $0xb0] sm:$0xff] %vm983, %v905
  %1007 = vst.msk [vmem:[%s3 + $0xb8] sm:$0xff] %vm983, %v906
  %1008 = vst.msk [vmem:[%s3 + $0xc0] sm:$0xff] %vm983, %v907
  %1009 = vst.msk [vmem:[%s3 + $0xc8] sm:$0xff] %vm983, %v908
  %1010 = vst.msk [vmem:[%s3 + $0xd0] sm:$0xff] %vm983, %v909
  %1011 = vst.msk [vmem:[%s3 + $0xd8] sm:$0xff] %vm983, %v910
  %1012 = vst.msk [vmem:[%s3 + $0xe0] sm:$0xff] %vm983, %v911
  %1013 = vst.msk [vmem:[%s3 + $0xe8] sm:$0xff] %vm983, %v912
  %1014 = vst.msk [vmem:[%s3 + $0xf0] sm:$0xff] %vm983, %v913
  %1015 = vst.msk [vmem:[%s3 + $0xf8] sm:$0xff] %vm983, %v914
  %1016 = vst.msk [vmem:[%s3 + $0x100] sm:$0xff] %vm983, %v915
  %1017 = vst.msk [vmem:[%s3 + $0x108] sm:$0xff] %vm983, %v916
  %1018 = vst.msk [vmem:[%s3 + $0x110] sm:$0xff] %vm983, %v917
  %1019 = vst.msk [vmem:[%s3 + $0x118] sm:$0xff] %vm983, %v918
  %1020 = vst.msk [vmem:[%s3 + $0x120] sm:$0xff] %vm983, %v919
  %1021 = vst.msk [vmem:[%s3 + $0x128] sm:$0xff] %vm983, %v920
  %1022 = vst.msk [vmem:[%s3 + $0x130] sm:$0xff] %vm983, %v921
  %1023 = vst.msk [vmem:[%s3 + $0x138] sm:$0xff] %vm983, %v922
  %1024 = vst.msk [vmem:[%s3 + $0x140] sm:$0xff] %vm983, %v923
  %1025 = vst.msk [vmem:[%s3 + $0x148] sm:$0xff] %vm983, %v924
  %1026 = vst.msk [vmem:[%s3 + $0x150] sm:$0xff] %vm983, %v925
  %1027 = vst.msk [vmem:[%s3 + $0x158] sm:$0xff] %vm983, %v926
  %1028 = vst.msk [vmem:[%s3 + $0x160] sm:$0xff] %vm983, %v927
  %1029 = vst.msk [vmem:[%s3 + $0x168] sm:$0xff] %vm983, %v928
  %1030 = vst.msk [vmem:[%s3 + $0x170] sm:$0xff] %vm983, %v929
  %1031 = vst.msk [vmem:[%s3 + $0x178] sm:$0xff] %vm983, %v930
  %1032 = vst.msk [vmem:[%s3 + $0x180] sm:$0xff] %vm983, %v931
  %1033 = vst.msk [vmem:[%s3 + $0x188] sm:$0xff] %vm983, %v932
  %1034 = vst.msk [vmem:[%s3 + $0x190] sm:$0xff] %vm983, %v933
  %1035 = vst.msk [vmem:[%s3 + $0x198] sm:$0xff] %vm983, %v934
  %1036 = vst.msk [vmem:[%s3 + $0x1a0] sm:$0xff] %vm983, %v935
  %1037 = vst.msk [vmem:[%s3 + $0x1a8] sm:$0xff] %vm983, %v936
  %1038 = vst.msk [vmem:[%s3 + $0x1b0] sm:$0xff] %vm983, %v937
  %1039 = vst.msk [vmem:[%s3 + $0x1b8] sm:$0xff] %vm983, %v938
  %1040 = vst.msk [vmem:[%s3 + $0x1c0] sm:$0xff] %vm983, %v939
  %1041 = vst.msk [vmem:[%s3 + $0x1c8] sm:$0xff] %vm983, %v940
  %1042 = vst.msk [vmem:[%s3 + $0x1d0] sm:$0xff] %vm983, %v941
  %1043 = vst.msk [vmem:[%s3 + $0x1d8] sm:$0xff] %vm983, %v942
  %1044 = vst.msk [vmem:[%s3 + $0x1e0] sm:$0xff] %vm983, %v943
  %1045 = vst.msk [vmem:[%s3 + $0x1e8] sm:$0xff] %vm983, %v944
  %1046 = vst.msk [vmem:[%s3 + $0x1f0] sm:$0xff] %vm983, %v945
  %1047 = vst.msk [vmem:[%s3 + $0x1f8] sm:$0xff] %vm983, %v946
  %1048 = vst.msk [vmem:[%s3 + $0x200] sm:$0xff] %vm983, %v947
  %1049 = vst.msk [vmem:[%s3 + $0x208] sm:$0xff] %vm983, %v948
  %1050 = vst.msk [vmem:[%s3 + $0x210] sm:$0xff] %vm983, %v949
  %1051 = vst.msk [vmem:[%s3 + $0x218] sm:$0xff] %vm983, %v950
  %1052 = vst.msk [vmem:[%s3 + $0x220] sm:$0xff] %vm983, %v951
  %1053 = vst.msk [vmem:[%s3 + $0x228] sm:$0xff] %vm983, %v952
  %1054 = vst.msk [vmem:[%s3 + $0x230] sm:$0xff] %vm983, %v953
  %1055 = vst.msk [vmem:[%s3 + $0x238] sm:$0xff] %vm983, %v954
  %1056 = vst.msk [vmem:[%s3 + $0x240] sm:$0xff] %vm983, %v955
  %1057 = vst.msk [vmem:[%s3 + $0x248] sm:$0xff] %vm983, %v956
  %1058 = vst.msk [vmem:[%s3 + $0x250] sm:$0xff] %vm983, %v957
  %1059 = vst.msk [vmem:[%s3 + $0x258] sm:$0xff] %vm983, %v958
  %1060 = vst.msk [vmem:[%s3 + $0x260] sm:$0xff] %vm983, %v959
  %1061 = vst.msk [vmem:[%s3 + $0x268] sm:$0xff] %vm983, %v960
  %1062 = vst.msk [vmem:[%s3 + $0x270] sm:$0xff] %vm983, %v961
  %1063 = vst.msk [vmem:[%s3 + $0x278] sm:$0xff] %vm983, %v962
  %1064 = vst.msk [vmem:[%s3 + $0x280] sm:$0xff] %vm983, %v963
  %1065 = vst.msk [vmem:[%s3 + $0x288] sm:$0xff] %vm983, %v964
  %1066 = vst.msk [vmem:[%s3 + $0x290] sm:$0xff] %vm983, %v965
  %1067 = vst.msk [vmem:[%s3 + $0x298] sm:$0xff] %vm983, %v966
  %1068 = vst.msk [vmem:[%s3 + $0x2a0] sm:$0xff] %vm983, %v967
  %1069 = vst.msk [vmem:[%s3 + $0x2a8] sm:$0xff] %vm983, %v968
  %1070 = vst.msk [vmem:[%s3 + $0x2b0] sm:$0xff] %vm983, %v969
  %1071 = vst.msk [vmem:[%s3 + $0x2b8] sm:$0xff] %vm983, %v970
  %1072 = vst.msk [vmem:[%s3 + $0x2c0] sm:$0xff] %vm983, %v971
  %1073 = vst.msk [vmem:[%s3 + $0x2c8] sm:$0xff] %vm983, %v972
  %1074 = vst.msk [vmem:[%s3 + $0x2d0] sm:$0xff] %vm983, %v973
  %1075 = vst.msk [vmem:[%s3 + $0x2d8] sm:$0xff] %vm983, %v974
  %1076 = vst.msk [vmem:[%s3 + $0x2e0] sm:$0xff] %vm983, %v975
  %1077 = vst.msk [vmem:[%s3 + $0x2e8] sm:$0xff] %vm983, %v976
  %1078 = vst.msk [vmem:[%s3 + $0x2f0] sm:$0xff] %vm983, %v977
  %1079 = vst.msk [vmem:[%s3 + $0x2f8] sm:$0xff] %vm983, %v978
  %1080 = vst.msk [vmem:[%s3 + $0x300] sm:$0xff] %vm983, %v979
  %1081 = vst.msk [vmem:[%s3 + $0x308] sm:$0xff] %vm983, %v980
  %1082 = vst.msk [vmem:[%s3 + $0x310] sm:$0xff] %vm983, %v981
  %1083 = vst.msk [vmem:[%s3 + $0x318] sm:$0xff] %vm983, %v982
  // Predicated region
  $region14: #{_cnn_forward.4} parent=0 // pred_check
    _
  $region15: #{_cnn_forward.4} parent=0 // pred_check_branch
    %1085 = sbr.rel (0) target = $region17
  $region16: #{_cnn_forward.4} parent=0 // pred_region
    _
  $region17: #{_cnn_forward.4} parent=0 // pred_fallthru
    _
  // Predicated region
  $region18: #{_cnn_forward.4} parent=0 // pred_check
    _
  $region19: #{_cnn_forward.4} parent=0 // pred_check_branch
    %1087 = sbr.rel (0) target = $region21
  $region20: #{_cnn_forward.4} parent=0 // pred_region
    _
  $region21: #{_cnn_forward.4} parent=0 // pred_fallthru
    _

// kernel: _cnn_forward.5
$region0: #{_cnn_forward.5}
  #allocation0 [shape = 'u32[]', space=smem, size = 0x4, offset = 0x4, fixed_abs, tag = 'smem constant byte address 0x4 - core index']
  #allocation1 [shape = 'u32[144,128]{1,0:T(1,128)}', space=vmem, size = 0x12000, scoped, tag = 'internal scratch']
  %s0 = inlined_call_operand.vmem [shape: f32[162,512], index: 0, kind: input, shape index: {}]
  %s1 = inlined_call_operand.vmem [shape: bf16[512,64], index: 1, kind: input, shape index: {}]
  %s2 = inlined_call_operand.vmem [shape: f32[1,64], index: 2, kind: input, shape index: {}]
  %s3 = inlined_call_operand.vmem [shape: f32[162,64], index: 3, kind: output, shape index: {}]
  %s4 = sld [smem:[#allocation0]]
  $region22: #{_cnn_forward.5} parent=0
    _
  %s6 = ssub.s32 1, %s4
  %s7 = scalar_select 0, %s6, %s4
  // Predicated region
  $region2: #{_cnn_forward.5} parent=0 // pred_check
    _
  $region3: #{_cnn_forward.5} parent=0 // pred_check_branch
    %9 = sbr.rel (0) target = $region5
  $region4: #{_cnn_forward.5} parent=0 // pred_region
    _
  $region5: #{_cnn_forward.5} parent=0 // pred_fallthru
    _
  // Predicated region
  $region6: #{_cnn_forward.5} parent=0 // pred_check
    _
  $region7: #{_cnn_forward.5} parent=0 // pred_check_branch
    %11 = sbr.rel (0) target = $region9
  $region8: #{_cnn_forward.5} parent=0 // pred_region
    _
  $region9: #{_cnn_forward.5} parent=0 // pred_fallthru
    _
  // Predicated region
  $region10: #{_cnn_forward.5} parent=0 // pred_check
    _
  $region11: #{_cnn_forward.5} parent=0 // pred_check_branch
    %13 = sbr.rel (0) target = $region13
  $region12: #{_cnn_forward.5} parent=0 // pred_region
    _
  $region13: #{_cnn_forward.5} parent=0 // pred_fallthru
    _
  %v15 = vld [vmem:[%s1] sm:$0xf]
  %v16 = vld [vmem:[%s1 + $0x4] sm:$0xf]
  %v17 = vld [vmem:[%s1 + $0x8] sm:$0xf]
  %v18 = vld [vmem:[%s1 + $0xc] sm:$0xf]
  %v19 = vld [vmem:[%s1 + $0x10] sm:$0xf]
  %v20 = vld [vmem:[%s1 + $0x14] sm:$0xf]
  %v21 = vld [vmem:[%s1 + $0x18] sm:$0xf]
  %v22 = vld [vmem:[%s1 + $0x1c] sm:$0xf]
  %v23 = vld [vmem:[%s1 + $0x20] sm:$0xf]
  %v24 = vld [vmem:[%s1 + $0x24] sm:$0xf]
  %v25 = vld [vmem:[%s1 + $0x28] sm:$0xf]
  %v26 = vld [vmem:[%s1 + $0x2c] sm:$0xf]
  %v27 = vld [vmem:[%s1 + $0x30] sm:$0xf]
  %v28 = vld [vmem:[%s1 + $0x34] sm:$0xf]
  %v29 = vld [vmem:[%s1 + $0x38] sm:$0xf]
  %v30 = vld [vmem:[%s1 + $0x3c] sm:$0xf]
  %v31 = vld [vmem:[%s1 + $0x40] sm:$0xf]
  %v32 = vld [vmem:[%s1 + $0x44] sm:$0xf]
  %v33 = vld [vmem:[%s1 + $0x48] sm:$0xf]
  %v34 = vld [vmem:[%s1 + $0x4c] sm:$0xf]
  %v35 = vld [vmem:[%s1 + $0x50] sm:$0xf]
  %v36 = vld [vmem:[%s1 + $0x54] sm:$0xf]
  %v37 = vld [vmem:[%s1 + $0x58] sm:$0xf]
  %v38 = vld [vmem:[%s1 + $0x5c] sm:$0xf]
  %v39 = vld [vmem:[%s1 + $0x60] sm:$0xf]
  %v40 = vld [vmem:[%s1 + $0x64] sm:$0xf]
  %v41 = vld [vmem:[%s1 + $0x68] sm:$0xf]
  %v42 = vld [vmem:[%s1 + $0x6c] sm:$0xf]
  %v43 = vld [vmem:[%s1 + $0x70] sm:$0xf]
  %v44 = vld [vmem:[%s1 + $0x74] sm:$0xf]
  %v45 = vld [vmem:[%s1 + $0x78] sm:$0xf]
  %v46 = vld [vmem:[%s1 + $0x7c] sm:$0xf]
  %v47 = vld [vmem:[%s1 + $0x80] sm:$0xf]
  %v48 = vld [vmem:[%s1 + $0x84] sm:$0xf]
  %v49 = vld [vmem:[%s1 + $0x88] sm:$0xf]
  %v50 = vld [vmem:[%s1 + $0x8c] sm:$0xf]
  %v51 = vld [vmem:[%s1 + $0x90] sm:$0xf]
  %v52 = vld [vmem:[%s1 + $0x94] sm:$0xf]
  %v53 = vld [vmem:[%s1 + $0x98] sm:$0xf]
  %v54 = vld [vmem:[%s1 + $0x9c] sm:$0xf]
  %v55 = vld [vmem:[%s1 + $0xa0] sm:$0xf]
  %v56 = vld [vmem:[%s1 + $0xa4] sm:$0xf]
  %v57 = vld [vmem:[%s1 + $0xa8] sm:$0xf]
  %v58 = vld [vmem:[%s1 + $0xac] sm:$0xf]
  %v59 = vld [vmem:[%s1 + $0xb0] sm:$0xf]
  %v60 = vld [vmem:[%s1 + $0xb4] sm:$0xf]
  %v61 = vld [vmem:[%s1 + $0xb8] sm:$0xf]
  %v62 = vld [vmem:[%s1 + $0xbc] sm:$0xf]
  %v63 = vld [vmem:[%s1 + $0xc0] sm:$0xf]
  %v64 = vld [vmem:[%s1 + $0xc4] sm:$0xf]
  %v65 = vld [vmem:[%s1 + $0xc8] sm:$0xf]
  %v66 = vld [vmem:[%s1 + $0xcc] sm:$0xf]
  %v67 = vld [vmem:[%s1 + $0xd0] sm:$0xf]
  %v68 = vld [vmem:[%s1 + $0xd4] sm:$0xf]
  %v69 = vld [vmem:[%s1 + $0xd8] sm:$0xf]
  %v70 = vld [vmem:[%s1 + $0xdc] sm:$0xf]
  %v71 = vld [vmem:[%s1 + $0xe0] sm:$0xf]
  %v72 = vld [vmem:[%s1 + $0xe4] sm:$0xf]
  %v73 = vld [vmem:[%s1 + $0xe8] sm:$0xf]
  %v74 = vld [vmem:[%s1 + $0xec] sm:$0xf]
  %v75 = vld [vmem:[%s1 + $0xf0] sm:$0xf]
  %v76 = vld [vmem:[%s1 + $0xf4] sm:$0xf]
  %v77 = vld [vmem:[%s1 + $0xf8] sm:$0xf]
  %v78 = vld [vmem:[%s1 + $0xfc] sm:$0xf]
  %v79 = vld [vmem:[%s0] sm:$0xff]
  %v80 = vld [vmem:[%s0 + $0x8] sm:$0xff]
  %v81 = vld [vmem:[%s0 + $0x10] sm:$0xff]
  %v82 = vld [vmem:[%s0 + $0x18] sm:$0xff]
  %v83 = vld [vmem:[%s0 + $0x20] sm:$0xff]
  %v84 = vld [vmem:[%s0 + $0x28] sm:$0xff]
  %v85 = vld [vmem:[%s0 + $0x30] sm:$0xff]
  %v86 = vld [vmem:[%s0 + $0x38] sm:$0xff]
  %v87 = vld [vmem:[%s0 + $0x40] sm:$0xff]
  %v88 = vld [vmem:[%s0 + $0x48] sm:$0xff]
  %v89 = vld [vmem:[%s0 + $0x50] sm:$0xff]
  %v90 = vld [vmem:[%s0 + $0x58] sm:$0xff]
  %v91 = vld [vmem:[%s0 + $0x60] sm:$0xff]
  %v92 = vld [vmem:[%s0 + $0x68] sm:$0xff]
  %v93 = vld [vmem:[%s0 + $0x70] sm:$0xff]
  %v94 = vld [vmem:[%s0 + $0x78] sm:$0xff]
  %v95 = vld [vmem:[%s0 + $0x80] sm:$0xff]
  %v96 = vld [vmem:[%s0 + $0x88] sm:$0xff]
  %v97 = vld [vmem:[%s0 + $0x90] sm:$0xff]
  %v98 = vld [vmem:[%s0 + $0x98] sm:$0xff]
  %v99 = vld [vmem:[%s0 + $0xa0] sm:$0xff]
  %v100 = vld [vmem:[%s0 + $0xa8] sm:$0xff]
  %v101 = vld [vmem:[%s0 + $0xb0] sm:$0xff]
  %v102 = vld [vmem:[%s0 + $0xb8] sm:$0xff]
  %v103 = vld [vmem:[%s0 + $0xc0] sm:$0xff]
  %v104 = vld [vmem:[%s0 + $0xc8] sm:$0xff]
  %v105 = vld [vmem:[%s0 + $0xd0] sm:$0xff]
  %v106 = vld [vmem:[%s0 + $0xd8] sm:$0xff]
  %v107 = vld [vmem:[%s0 + $0xe0] sm:$0xff]
  %v108 = vld [vmem:[%s0 + $0xe8] sm:$0xff]
  %v109 = vld [vmem:[%s0 + $0xf0] sm:$0xff]
  %v110 = vld [vmem:[%s0 + $0xf8] sm:$0xff]
  %v111 = vld [vmem:[%s0 + $0x100] sm:$0xff]
  %v112 = vld [vmem:[%s0 + $0x108] sm:$0xff]
  %v113 = vld [vmem:[%s0 + $0x110] sm:$0xff]
  %v114 = vld [vmem:[%s0 + $0x118] sm:$0xff]
  %v115 = vld [vmem:[%s0 + $0x120] sm:$0xff]
  %v116 = vld [vmem:[%s0 + $0x128] sm:$0xff]
  %v117 = vld [vmem:[%s0 + $0x130] sm:$0xff]
  %v118 = vld [vmem:[%s0 + $0x138] sm:$0xff]
  %v119 = vld [vmem:[%s0 + $0x140] sm:$0xff]
  %v120 = vld [vmem:[%s0 + $0x148] sm:$0xff]
  %v121 = vld [vmem:[%s0 + $0x150] sm:$0xff]
  %v122 = vld [vmem:[%s0 + $0x158] sm:$0xff]
  %v123 = vld [vmem:[%s0 + $0x160] sm:$0xff]
  %v124 = vld [vmem:[%s0 + $0x168] sm:$0xff]
  %v125 = vld [vmem:[%s0 + $0x170] sm:$0xff]
  %v126 = vld [vmem:[%s0 + $0x178] sm:$0xff]
  %v127 = vld [vmem:[%s0 + $0x180] sm:$0xff]
  %v128 = vld [vmem:[%s0 + $0x188] sm:$0xff]
  %v129 = vld [vmem:[%s0 + $0x190] sm:$0xff]
  %v130 = vld [vmem:[%s0 + $0x198] sm:$0xff]
  %v131 = vld [vmem:[%s0 + $0x1a0] sm:$0xff]
  %v132 = vld [vmem:[%s0 + $0x1a8] sm:$0xff]
  %v133 = vld [vmem:[%s0 + $0x1b0] sm:$0xff]
  %v134 = vld [vmem:[%s0 + $0x1b8] sm:$0xff]
  %v135 = vld [vmem:[%s0 + $0x1c0] sm:$0xff]
  %v136 = vld [vmem:[%s0 + $0x1c8] sm:$0xff]
  %v137 = vld [vmem:[%s0 + $0x1d0] sm:$0xff]
  %v138 = vld [vmem:[%s0 + $0x1d8] sm:$0xff]
  %v139 = vld [vmem:[%s0 + $0x1e0] sm:$0xff]
  %v140 = vld [vmem:[%s0 + $0x1e8] sm:$0xff]
  %v141 = vld [vmem:[%s0 + $0x1f0] sm:$0xff]
  %v142 = vld [vmem:[%s0 + $0x1f8] sm:$0xff]
  %v143 = vld [vmem:[%s0 + $0x200] sm:$0xff]
  %v144 = vld [vmem:[%s0 + $0x208] sm:$0xff]
  %v145 = vld [vmem:[%s0 + $0x210] sm:$0xff]
  %v146 = vld [vmem:[%s0 + $0x218] sm:$0xff]
  %v147 = vld [vmem:[%s0 + $0x220] sm:$0xff]
  %v148 = vld [vmem:[%s0 + $0x228] sm:$0xff]
  %v149 = vld [vmem:[%s0 + $0x230] sm:$0xff]
  %v150 = vld [vmem:[%s0 + $0x238] sm:$0xff]
  %v151 = vld [vmem:[%s0 + $0x240] sm:$0xff]
  %v152 = vld [vmem:[%s0 + $0x248] sm:$0xff]
  %v153 = vld [vmem:[%s0 + $0x250] sm:$0xff]
  %v154 = vld [vmem:[%s0 + $0x258] sm:$0xff]
  %v155 = vld [vmem:[%s0 + $0x260] sm:$0xff]
  %v156 = vld [vmem:[%s0 + $0x268] sm:$0xff]
  %v157 = vld [vmem:[%s0 + $0x270] sm:$0xff]
  %v158 = vld [vmem:[%s0 + $0x278] sm:$0xff]
  %v159 = vld [vmem:[%s0 + $0x280] sm:$0x3]
  %v160 = vld [vmem:[%s0 + $0x288] sm:$0x3]
  %v161 = vld [vmem:[%s0 + $0x290] sm:$0x3]
  %v162 = vld [vmem:[%s0 + $0x298] sm:$0x3]
  %v163 = vpack.c.bf16 %v83, %v79
  %v164 = vpack.c.bf16 %v84, %v80
  %v165 = vpack.c.bf16 %v85, %v81
  %v166 = vpack.c.bf16 %v86, %v82
  %v167 = vpack.c.bf16 %v91, %v87
  %v168 = vpack.c.bf16 %v92, %v88
  %v169 = vpack.c.bf16 %v93, %v89
  %v170 = vpack.c.bf16 %v94, %v90
  %v171 = vpack.c.bf16 %v99, %v95
  %v172 = vpack.c.bf16 %v100, %v96
  %v173 = vpack.c.bf16 %v101, %v97
  %v174 = vpack.c.bf16 %v102, %v98
  %v175 = vpack.c.bf16 %v107, %v103
  %v176 = vpack.c.bf16 %v108, %v104
  %v177 = vpack.c.bf16 %v109, %v105
  %v178 = vpack.c.bf16 %v110, %v106
  %v179 = vpack.c.bf16 %v115, %v111
  %v180 = vpack.c.bf16 %v116, %v112
  %v181 = vpack.c.bf16 %v117, %v113
  %v182 = vpack.c.bf16 %v118, %v114
  %v183 = vpack.c.bf16 %v123, %v119
  %v184 = vpack.c.bf16 %v124, %v120
  %v185 = vpack.c.bf16 %v125, %v121
  %v186 = vpack.c.bf16 %v126, %v122
  %v187 = vpack.c.bf16 %v131, %v127
  %v188 = vpack.c.bf16 %v132, %v128
  %v189 = vpack.c.bf16 %v133, %v129
  %v190 = vpack.c.bf16 %v134, %v130
  %v191 = vpack.c.bf16 %v139, %v135
  %v192 = vpack.c.bf16 %v140, %v136
  %v193 = vpack.c.bf16 %v141, %v137
  %v194 = vpack.c.bf16 %v142, %v138
  %v195 = vpack.c.bf16 %v147, %v143
  %v196 = vpack.c.bf16 %v148, %v144
  %v197 = vpack.c.bf16 %v149, %v145
  %v198 = vpack.c.bf16 %v150, %v146
  %v199 = vpack.c.bf16 %v155, %v151
  %v200 = vpack.c.bf16 %v156, %v152
  %v201 = vpack.c.bf16 %v157, %v153
  %v202 = vpack.c.bf16 %v158, %v154
  %v203 = vpack.c.bf16 %v159, %v159
  %v204 = vpack.c.bf16 %v160, %v160
  %v205 = vpack.c.bf16 %v161, %v161
  %v206 = vpack.c.bf16 %v162, %v162
  %v207 = vld [vmem:[%s2] sm:$0x1]
  %v209 = vlaneseq
  %v210 = vshrl.u32 %v209, 7
  %v211 = vsub.s32 0, %v210
  %v212 = vrot.slane %v207, %v211
  %v278 = vunpack.c.l.b16 %v15
  %v279 = vunpack.c.l.b16 %v16
  %v280 = vunpack.c.l.b16 %v17
  %v281 = vunpack.c.l.b16 %v18
  %v282 = vunpack.c.l.b16 %v19
  %v283 = vunpack.c.l.b16 %v20
  %v284 = vunpack.c.l.b16 %v21
  %v285 = vunpack.c.l.b16 %v22
  %v286 = vunpack.c.l.b16 %v23
  %v287 = vunpack.c.l.b16 %v24
  %v288 = vunpack.c.l.b16 %v25
  %v289 = vunpack.c.l.b16 %v26
  %v290 = vunpack.c.l.b16 %v27
  %v291 = vunpack.c.l.b16 %v28
  %v292 = vunpack.c.l.b16 %v29
  %v293 = vunpack.c.l.b16 %v30
  %v294 = vunpack.c.l.b16 %v31
  %v295 = vunpack.c.l.b16 %v32
  %v296 = vunpack.c.l.b16 %v33
  %v297 = vunpack.c.l.b16 %v34
  %v298 = vunpack.c.l.b16 %v35
  %v299 = vunpack.c.l.b16 %v36
  %v300 = vunpack.c.l.b16 %v37
  %v301 = vunpack.c.l.b16 %v38
  %v302 = vunpack.c.l.b16 %v39
  %v303 = vunpack.c.l.b16 %v40
  %v304 = vunpack.c.l.b16 %v41
  %v305 = vunpack.c.l.b16 %v42
  %v306 = vunpack.c.l.b16 %v43
  %v307 = vunpack.c.l.b16 %v44
  %v308 = vunpack.c.l.b16 %v45
  %v309 = vunpack.c.l.b16 %v46
  %v310 = vunpack.c.l.b16 %v47
  %v311 = vunpack.c.l.b16 %v48
  %v312 = vunpack.c.l.b16 %v49
  %v313 = vunpack.c.l.b16 %v50
  %v314 = vunpack.c.l.b16 %v51
  %v315 = vunpack.c.l.b16 %v52
  %v316 = vunpack.c.l.b16 %v53
  %v317 = vunpack.c.l.b16 %v54
  %v318 = vunpack.c.l.b16 %v55
  %v319 = vunpack.c.l.b16 %v56
  %v320 = vunpack.c.l.b16 %v57
  %v321 = vunpack.c.l.b16 %v58
  %v322 = vunpack.c.l.b16 %v59
  %v323 = vunpack.c.l.b16 %v60
  %v324 = vunpack.c.l.b16 %v61
  %v325 = vunpack.c.l.b16 %v62
  %v326 = vunpack.c.l.b16 %v63
  %v327 = vunpack.c.l.b16 %v64
  %v328 = vunpack.c.l.b16 %v65
  %v329 = vunpack.c.l.b16 %v66
  %v330 = vunpack.c.l.b16 %v67
  %v331 = vunpack.c.l.b16 %v68
  %v332 = vunpack.c.l.b16 %v69
  %v333 = vunpack.c.l.b16 %v70
  %v334 = vunpack.c.l.b16 %v71
  %v335 = vunpack.c.l.b16 %v72
  %v336 = vunpack.c.l.b16 %v73
  %v337 = vunpack.c.l.b16 %v74
  %v338 = vunpack.c.l.b16 %v75
  %v339 = vunpack.c.l.b16 %v76
  %v340 = vunpack.c.l.b16 %v77
  %v341 = vunpack.c.l.b16 %v78
  %v342 = vpack.c.b16 %v279, %v278
  %v343 = vpack.c.b16 %v281, %v280
  %v344 = vpack.c.b16 %v283, %v282
  %v345 = vpack.c.b16 %v285, %v284
  %v346 = vpack.c.b16 %v287, %v286
  %v347 = vpack.c.b16 %v289, %v288
  %v348 = vpack.c.b16 %v291, %v290
  %v349 = vpack.c.b16 %v293, %v292
  %v350 = vpack.c.b16 %v295, %v294
  %v351 = vpack.c.b16 %v297, %v296
  %v352 = vpack.c.b16 %v299, %v298
  %v353 = vpack.c.b16 %v301, %v300
  %v354 = vpack.c.b16 %v303, %v302
  %v355 = vpack.c.b16 %v305, %v304
  %v356 = vpack.c.b16 %v307, %v306
  %v357 = vpack.c.b16 %v309, %v308
  %v358 = vpack.c.b16 %v311, %v310
  %v359 = vpack.c.b16 %v313, %v312
  %v360 = vpack.c.b16 %v315, %v314
  %v361 = vpack.c.b16 %v317, %v316
  %v362 = vpack.c.b16 %v319, %v318
  %v363 = vpack.c.b16 %v321, %v320
  %v364 = vpack.c.b16 %v323, %v322
  %v365 = vpack.c.b16 %v325, %v324
  %v366 = vpack.c.b16 %v327, %v326
  %v367 = vpack.c.b16 %v329, %v328
  %v368 = vpack.c.b16 %v331, %v330
  %v369 = vpack.c.b16 %v333, %v332
  %v370 = vpack.c.b16 %v335, %v334
  %v371 = vpack.c.b16 %v337, %v336
  %v372 = vpack.c.b16 %v339, %v338
  %v373 = vpack.c.b16 %v341, %v340
  %406 = vmatprep.subr.bf16.mxu0 0
  %407 = vmatpush1.bf16.msra.mxu0 %v349
  %408 = vmatprep.subr.bf16.mxu0 0
  %409 = vmatpush1.bf16.msra.mxu0 %v348
  %410 = vmatprep.subr.bf16.mxu0 0
  %411 = vmatpush1.bf16.msra.mxu0 %v347
  %412 = vmatprep.subr.bf16.mxu0 0
  %413 = vmatpush1.bf16.msra.mxu0 %v346
  %414 = vmatprep.subr.bf16.mxu0 0
  %415 = vmatpush1.bf16.msra.mxu0 %v345
  %416 = vmatprep.subr.bf16.mxu0 0
  %417 = vmatpush1.bf16.msra.mxu0 %v344
  %418 = vmatprep.subr.bf16.mxu0 0
  %419 = vmatpush1.bf16.msra.mxu0 %v343
  %420 = vmatprep.subr.bf16.mxu0 0
  %421 = vmatpush1.bf16.msra.mxu0 %v342
  %422 = vmatprep.subr.bf16.mxu0 0
  %423 = vmatpush2.bf16.msra.mxu0 %v357
  %424 = vmatprep.subr.bf16.mxu0 0
  %425 = vmatpush2.bf16.msra.mxu0 %v356
  %426 = vmatprep.subr.bf16.mxu0 0
  %427 = vmatpush2.bf16.msra.mxu0 %v355
  %428 = vmatprep.subr.bf16.mxu0 0
  %429 = vmatpush2.bf16.msra.mxu0 %v354
  %430 = vmatprep.subr.bf16.mxu0 0
  %431 = vmatpush2.bf16.msra.mxu0 %v353
  %432 = vmatprep.subr.bf16.mxu0 0
  %433 = vmatpush2.bf16.msra.mxu0 %v352
  %434 = vmatprep.subr.bf16.mxu0 0
  %435 = vmatpush2.bf16.msra.mxu0 %v351
  %436 = vmatprep.subr.bf16.mxu0 0
  %437 = vmatpush2.bf16.msra.mxu0 %v350
  %438 = vmatprep.mubr.bf16.mxu0 %v164
  %439 = vmatmul.mubr.bf16.gmra.mxu0 %v163
  %v440 = vpop.f32.mrf.mxu0
  %v441 = vadd.f32 %v212, %v440
  %v442 = vpop.f32.mrf.mxu0
  %v443 = vpop.f32.mrf.mxu0
  %v444 = vadd.f32 %v212, %v443
  %v445 = vpop.f32.mrf.mxu0
  %446 = vmatprep.mubr.bf16.mxu0 %v168
  %447 = vmatmul.mubr.bf16.gmra.mxu0 %v167
  %v448 = vpop.f32.mrf.mxu0
  %v449 = vadd.f32 %v212, %v448
  %v450 = vpop.f32.mrf.mxu0
  %v451 = vpop.f32.mrf.mxu0
  %v452 = vadd.f32 %v212, %v451
  %v453 = vpop.f32.mrf.mxu0
  %454 = vmatprep.mubr.bf16.mxu0 %v172
  %455 = vmatmul.mubr.bf16.gmra.mxu0 %v171
  %v456 = vpop.f32.mrf.mxu0
  %v457 = vadd.f32 %v212, %v456
  %v458 = vpop.f32.mrf.mxu0
  %v459 = vpop.f32.mrf.mxu0
  %v460 = vadd.f32 %v212, %v459
  %v461 = vpop.f32.mrf.mxu0
  %462 = vmatprep.mubr.bf16.mxu0 %v176
  %463 = vmatmul.mubr.bf16.gmra.mxu0 %v175
  %v464 = vpop.f32.mrf.mxu0
  %v465 = vadd.f32 %v212, %v464
  %v466 = vpop.f32.mrf.mxu0
  %v467 = vpop.f32.mrf.mxu0
  %v468 = vadd.f32 %v212, %v467
  %v469 = vpop.f32.mrf.mxu0
  %470 = vmatprep.mubr.bf16.mxu0 %v180
  %471 = vmatmul.mubr.bf16.gmra.mxu0 %v179
  %v472 = vpop.f32.mrf.mxu0
  %v473 = vadd.f32 %v212, %v472
  %v474 = vpop.f32.mrf.mxu0
  %v475 = vpop.f32.mrf.mxu0
  %v476 = vadd.f32 %v212, %v475
  %v477 = vpop.f32.mrf.mxu0
  %478 = vmatprep.mubr.bf16.mxu0 %v184
  %479 = vmatmul.mubr.bf16.gmra.mxu0 %v183
  %v480 = vpop.f32.mrf.mxu0
  %v481 = vadd.f32 %v212, %v480
  %v482 = vpop.f32.mrf.mxu0
  %v483 = vpop.f32.mrf.mxu0
  %v484 = vadd.f32 %v212, %v483
  %v485 = vpop.f32.mrf.mxu0
  %486 = vmatprep.mubr.bf16.mxu0 %v188
  %487 = vmatmul.mubr.bf16.gmra.mxu0 %v187
  %v488 = vpop.f32.mrf.mxu0
  %v489 = vadd.f32 %v212, %v488
  %v490 = vpop.f32.mrf.mxu0
  %v491 = vpop.f32.mrf.mxu0
  %v492 = vadd.f32 %v212, %v491
  %v493 = vpop.f32.mrf.mxu0
  %494 = vmatprep.mubr.bf16.mxu0 %v192
  %495 = vmatmul.mubr.bf16.gmra.mxu0 %v191
  %v496 = vpop.f32.mrf.mxu0
  %v497 = vadd.f32 %v212, %v496
  %v498 = vpop.f32.mrf.mxu0
  %v499 = vpop.f32.mrf.mxu0
  %v500 = vadd.f32 %v212, %v499
  %v501 = vpop.f32.mrf.mxu0
  %502 = vmatprep.mubr.bf16.mxu0 %v196
  %503 = vmatmul.mubr.bf16.gmra.mxu0 %v195
  %v504 = vpop.f32.mrf.mxu0
  %v505 = vadd.f32 %v212, %v504
  %v506 = vpop.f32.mrf.mxu0
  %v507 = vpop.f32.mrf.mxu0
  %v508 = vadd.f32 %v212, %v507
  %v509 = vpop.f32.mrf.mxu0
  %510 = vmatprep.mubr.bf16.mxu0 %v200
  %511 = vmatmul.mubr.bf16.gmra.mxu0 %v199
  %v512 = vpop.f32.mrf.mxu0
  %v513 = vadd.f32 %v212, %v512
  %v514 = vpop.f32.mrf.mxu0
  %v515 = vpop.f32.mrf.mxu0
  %v516 = vadd.f32 %v212, %v515
  %v517 = vpop.f32.mrf.mxu0
  %518 = vmatprep.mubr.bf16.mxu0 %v204
  %519 = vmatmul.mubr.bf16.gmra.mxu0 %v203
  %v520 = vpop.f32.mrf.mxu0
  %v521 = vadd.f32 %v212, %v520
  %v522 = vpop.f32.mrf.mxu0
  %v523 = vpop.f32.mrf.mxu0
  %v524 = vpop.f32.mrf.mxu0
  %525 = vdwg.mxu0
  %526 = vmatprep.subr.bf16.mxu0 0
  %527 = vmatpush1.bf16.msra.mxu0 %v365
  %528 = vmatprep.subr.bf16.mxu0 0
  %529 = vmatpush1.bf16.msra.mxu0 %v364
  %530 = vmatprep.subr.bf16.mxu0 0
  %531 = vmatpush1.bf16.msra.mxu0 %v363
  %532 = vmatprep.subr.bf16.mxu0 0
  %533 = vmatpush1.bf16.msra.mxu0 %v362
  %534 = vmatprep.subr.bf16.mxu0 0
  %535 = vmatpush1.bf16.msra.mxu0 %v361
  %536 = vmatprep.subr.bf16.mxu0 0
  %537 = vmatpush1.bf16.msra.mxu0 %v360
  %538 = vmatprep.subr.bf16.mxu0 0
  %539 = vmatpush1.bf16.msra.mxu0 %v359
  %540 = vmatprep.subr.bf16.mxu0 0
  %541 = vmatpush1.bf16.msra.mxu0 %v358
  %542 = vmatprep.subr.bf16.mxu0 0
  %543 = vmatpush2.bf16.msra.mxu0 %v373
  %544 = vmatprep.subr.bf16.mxu0 0
  %545 = vmatpush2.bf16.msra.mxu0 %v372
  %546 = vmatprep.subr.bf16.mxu0 0
  %547 = vmatpush2.bf16.msra.mxu0 %v371
  %548 = vmatprep.subr.bf16.mxu0 0
  %549 = vmatpush2.bf16.msra.mxu0 %v370
  %550 = vmatprep.subr.bf16.mxu0 0
  %551 = vmatpush2.bf16.msra.mxu0 %v369
  %552 = vmatprep.subr.bf16.mxu0 0
  %553 = vmatpush2.bf16.msra.mxu0 %v368
  %554 = vmatprep.subr.bf16.mxu0 0
  %555 = vmatpush2.bf16.msra.mxu0 %v367
  %556 = vmatprep.subr.bf16.mxu0 0
  %557 = vmatpush2.bf16.msra.mxu0 %v366
  %558 = vmatprep.mubr.bf16.mxu0 %v166
  %559 = vmatmul.mubr.bf16.gmra.mxu0 %v165
  %v560 = vpop.f32.mrf.mxu0
  %v561 = vadd.f32 %v441, %v560
  %v562 = vpop.f32.mrf.mxu0
  %v563 = vpop.f32.mrf.mxu0
  %v564 = vadd.f32 %v444, %v563
  %v565 = vpop.f32.mrf.mxu0
  %566 = vmatprep.mubr.bf16.mxu0 %v170
  %567 = vmatmul.mubr.bf16.gmra.mxu0 %v169
  %v568 = vpop.f32.mrf.mxu0
  %v569 = vadd.f32 %v449, %v568
  %v570 = vpop.f32.mrf.mxu0
  %v571 = vpop.f32.mrf.mxu0
  %v572 = vadd.f32 %v452, %v571
  %v573 = vpop.f32.mrf.mxu0
  %574 = vmatprep.mubr.bf16.mxu0 %v174
  %575 = vmatmul.mubr.bf16.gmra.mxu0 %v173
  %v576 = vpop.f32.mrf.mxu0
  %v577 = vadd.f32 %v457, %v576
  %v578 = vpop.f32.mrf.mxu0
  %v579 = vpop.f32.mrf.mxu0
  %v580 = vadd.f32 %v460, %v579
  %v581 = vpop.f32.mrf.mxu0
  %582 = vmatprep.mubr.bf16.mxu0 %v178
  %583 = vmatmul.mubr.bf16.gmra.mxu0 %v177
  %v584 = vpop.f32.mrf.mxu0
  %v585 = vadd.f32 %v465, %v584
  %v586 = vpop.f32.mrf.mxu0
  %v587 = vpop.f32.mrf.mxu0
  %v588 = vadd.f32 %v468, %v587
  %v589 = vpop.f32.mrf.mxu0
  %590 = vmatprep.mubr.bf16.mxu0 %v182
  %591 = vmatmul.mubr.bf16.gmra.mxu0 %v181
  %v592 = vpop.f32.mrf.mxu0
  %v593 = vadd.f32 %v473, %v592
  %v594 = vpop.f32.mrf.mxu0
  %v595 = vpop.f32.mrf.mxu0
  %v596 = vadd.f32 %v476, %v595
  %v597 = vpop.f32.mrf.mxu0
  %598 = vmatprep.mubr.bf16.mxu0 %v186
  %599 = vmatmul.mubr.bf16.gmra.mxu0 %v185
  %v600 = vpop.f32.mrf.mxu0
  %v601 = vadd.f32 %v481, %v600
  %v602 = vpop.f32.mrf.mxu0
  %v603 = vpop.f32.mrf.mxu0
  %v604 = vadd.f32 %v484, %v603
  %v605 = vpop.f32.mrf.mxu0
  %606 = vmatprep.mubr.bf16.mxu0 %v190
  %607 = vmatmul.mubr.bf16.gmra.mxu0 %v189
  %v608 = vpop.f32.mrf.mxu0
  %v609 = vadd.f32 %v489, %v608
  %v610 = vpop.f32.mrf.mxu0
  %v611 = vpop.f32.mrf.mxu0
  %v612 = vadd.f32 %v492, %v611
  %v613 = vpop.f32.mrf.mxu0
  %614 = vmatprep.mubr.bf16.mxu0 %v194
  %615 = vmatmul.mubr.bf16.gmra.mxu0 %v193
  %v616 = vpop.f32.mrf.mxu0
  %v617 = vadd.f32 %v497, %v616
  %v618 = vpop.f32.mrf.mxu0
  %v619 = vpop.f32.mrf.mxu0
  %v620 = vadd.f32 %v500, %v619
  %v621 = vpop.f32.mrf.mxu0
  %622 = vmatprep.mubr.bf16.mxu0 %v198
  %623 = vmatmul.mubr.bf16.gmra.mxu0 %v197
  %v624 = vpop.f32.mrf.mxu0
  %v625 = vadd.f32 %v505, %v624
  %v626 = vpop.f32.mrf.mxu0
  %v627 = vpop.f32.mrf.mxu0
  %v628 = vadd.f32 %v508, %v627
  %v629 = vpop.f32.mrf.mxu0
  %630 = vmatprep.mubr.bf16.mxu0 %v202
  %631 = vmatmul.mubr.bf16.gmra.mxu0 %v201
  %v632 = vpop.f32.mrf.mxu0
  %v633 = vadd.f32 %v513, %v632
  %v634 = vpop.f32.mrf.mxu0
  %v635 = vpop.f32.mrf.mxu0
  %v636 = vadd.f32 %v516, %v635
  %v637 = vpop.f32.mrf.mxu0
  %638 = vmatprep.mubr.bf16.mxu0 %v206
  %639 = vmatmul.mubr.bf16.gmra.mxu0 %v205
  %v640 = vpop.f32.mrf.mxu0
  %v641 = vadd.f32 %v521, %v640
  %v642 = vpop.f32.mrf.mxu0
  %v643 = vpop.f32.mrf.mxu0
  %v644 = vpop.f32.mrf.mxu0
  %645 = vdwg.mxu0
  %v646 = vmax.f32 %v561, 0.0
  %v647 = vmax.f32 %v564, 0.0
  %v648 = vmax.f32 %v569, 0.0
  %v649 = vmax.f32 %v572, 0.0
  %v650 = vmax.f32 %v577, 0.0
  %v651 = vmax.f32 %v580, 0.0
  %v652 = vmax.f32 %v585, 0.0
  %v653 = vmax.f32 %v588, 0.0
  %v654 = vmax.f32 %v593, 0.0
  %v655 = vmax.f32 %v596, 0.0
  %v656 = vmax.f32 %v601, 0.0
  %v657 = vmax.f32 %v604, 0.0
  %v658 = vmax.f32 %v609, 0.0
  %v659 = vmax.f32 %v612, 0.0
  %v660 = vmax.f32 %v617, 0.0
  %v661 = vmax.f32 %v620, 0.0
  %v662 = vmax.f32 %v625, 0.0
  %v663 = vmax.f32 %v628, 0.0
  %v664 = vmax.f32 %v633, 0.0
  %v665 = vmax.f32 %v636, 0.0
  %v666 = vmax.f32 %v641, 0.0
  %vm667 = vcmask 523264
  %668 = vst.msk [vmem:[%s3] sm:$0xff] %vm667, %v646
  %669 = vst.msk [vmem:[%s3 + $0x8] sm:$0xff] %vm667, %v647
  %670 = vst.msk [vmem:[%s3 + $0x10] sm:$0xff] %vm667, %v648
  %671 = vst.msk [vmem:[%s3 + $0x18] sm:$0xff] %vm667, %v649
  %672 = vst.msk [vmem:[%s3 + $0x20] sm:$0xff] %vm667, %v650
  %673 = vst.msk [vmem:[%s3 + $0x28] sm:$0xff] %vm667, %v651
  %674 = vst.msk [vmem:[%s3 + $0x30] sm:$0xff] %vm667, %v652
  %675 = vst.msk [vmem:[%s3 + $0x38] sm:$0xff] %vm667, %v653
  %676 = vst.msk [vmem:[%s3 + $0x40] sm:$0xff] %vm667, %v654
  %677 = vst.msk [vmem:[%s3 + $0x48] sm:$0xff] %vm667, %v655
  %678 = vst.msk [vmem:[%s3 + $0x50] sm:$0xff] %vm667, %v656
  %679 = vst.msk [vmem:[%s3 + $0x58] sm:$0xff] %vm667, %v657
  %680 = vst.msk [vmem:[%s3 + $0x60] sm:$0xff] %vm667, %v658
  %681 = vst.msk [vmem:[%s3 + $0x68] sm:$0xff] %vm667, %v659
  %682 = vst.msk [vmem:[%s3 + $0x70] sm:$0xff] %vm667, %v660
  %683 = vst.msk [vmem:[%s3 + $0x78] sm:$0xff] %vm667, %v661
  %684 = vst.msk [vmem:[%s3 + $0x80] sm:$0xff] %vm667, %v662
  %685 = vst.msk [vmem:[%s3 + $0x88] sm:$0xff] %vm667, %v663
  %686 = vst.msk [vmem:[%s3 + $0x90] sm:$0xff] %vm667, %v664
  %687 = vst.msk [vmem:[%s3 + $0x98] sm:$0xff] %vm667, %v665
  %vm688 = vcmask 517120
  %689 = vst.msk [vmem:[%s3 + $0xa0] sm:$0x3] %vm688, %v666
  // Predicated region
  $region14: #{_cnn_forward.5} parent=0 // pred_check
    _
  $region15: #{_cnn_forward.5} parent=0 // pred_check_branch
    %691 = sbr.rel (0) target = $region17
  $region16: #{_cnn_forward.5} parent=0 // pred_region
    _
  $region17: #{_cnn_forward.5} parent=0 // pred_fallthru
    _
  // Predicated region
  $region18: #{_cnn_forward.5} parent=0 // pred_check
    _
  $region19: #{_cnn_forward.5} parent=0 // pred_check_branch
    %693 = sbr.rel (0) target = $region21
  $region20: #{_cnn_forward.5} parent=0 // pred_region
    _
  $region21: #{_cnn_forward.5} parent=0 // pred_fallthru
    _

// kernel: _cnn_forward.6
$region0: #{_cnn_forward.6}
  #allocation0 [shape = 'u32[]', space=smem, size = 0x4, offset = 0x4, fixed_abs, tag = 'smem constant byte address 0x4 - core index']
  #allocation1 [shape = 'u32[144,128]{1,0:T(1,128)}', space=vmem, size = 0x12000, scoped, tag = 'internal scratch']
  %s0 = inlined_call_operand.vmem [shape: f32[98,576], index: 0, kind: input, shape index: {}]
  %s1 = inlined_call_operand.vmem [shape: bf16[576,32], index: 1, kind: input, shape index: {}]
  %s2 = inlined_call_operand.vmem [shape: f32[1,32], index: 2, kind: input, shape index: {}]
  %s3 = inlined_call_operand.vmem [shape: f32[98,32], index: 3, kind: output, shape index: {}]
  %s4 = sld [smem:[#allocation0]]
  $region22: #{_cnn_forward.6} parent=0
    _
  %s6 = ssub.s32 1, %s4
  %s7 = scalar_select 0, %s6, %s4
  // Predicated region
  $region2: #{_cnn_forward.6} parent=0 // pred_check
    _
  $region3: #{_cnn_forward.6} parent=0 // pred_check_branch
    %9 = sbr.rel (0) target = $region5
  $region4: #{_cnn_forward.6} parent=0 // pred_region
    _
  $region5: #{_cnn_forward.6} parent=0 // pred_fallthru
    _
  // Predicated region
  $region6: #{_cnn_forward.6} parent=0 // pred_check
    _
  $region7: #{_cnn_forward.6} parent=0 // pred_check_branch
    %11 = sbr.rel (0) target = $region9
  $region8: #{_cnn_forward.6} parent=0 // pred_region
    _
  $region9: #{_cnn_forward.6} parent=0 // pred_fallthru
    _
  // Predicated region
  $region10: #{_cnn_forward.6} parent=0 // pred_check
    _
  $region11: #{_cnn_forward.6} parent=0 // pred_check_branch
    %13 = sbr.rel (0) target = $region13
  $region12: #{_cnn_forward.6} parent=0 // pred_region
    _
  $region13: #{_cnn_forward.6} parent=0 // pred_fallthru
    _
  %v15 = vld [vmem:[%s1] sm:$0xf]
  %v16 = vld [vmem:[%s1 + $0x4] sm:$0xf]
  %v17 = vld [vmem:[%s1 + $0x8] sm:$0xf]
  %v18 = vld [vmem:[%s1 + $0xc] sm:$0xf]
  %v19 = vld [vmem:[%s1 + $0x10] sm:$0xf]
  %v20 = vld [vmem:[%s1 + $0x14] sm:$0xf]
  %v21 = vld [vmem:[%s1 + $0x18] sm:$0xf]
  %v22 = vld [vmem:[%s1 + $0x1c] sm:$0xf]
  %v23 = vld [vmem:[%s1 + $0x20] sm:$0xf]
  %v24 = vld [vmem:[%s1 + $0x24] sm:$0xf]
  %v25 = vld [vmem:[%s1 + $0x28] sm:$0xf]
  %v26 = vld [vmem:[%s1 + $0x2c] sm:$0xf]
  %v27 = vld [vmem:[%s1 + $0x30] sm:$0xf]
  %v28 = vld [vmem:[%s1 + $0x34] sm:$0xf]
  %v29 = vld [vmem:[%s1 + $0x38] sm:$0xf]
  %v30 = vld [vmem:[%s1 + $0x3c] sm:$0xf]
  %v31 = vld [vmem:[%s1 + $0x40] sm:$0xf]
  %v32 = vld [vmem:[%s1 + $0x44] sm:$0xf]
  %v33 = vld [vmem:[%s1 + $0x48] sm:$0xf]
  %v34 = vld [vmem:[%s1 + $0x4c] sm:$0xf]
  %v35 = vld [vmem:[%s1 + $0x50] sm:$0xf]
  %v36 = vld [vmem:[%s1 + $0x54] sm:$0xf]
  %v37 = vld [vmem:[%s1 + $0x58] sm:$0xf]
  %v38 = vld [vmem:[%s1 + $0x5c] sm:$0xf]
  %v39 = vld [vmem:[%s1 + $0x60] sm:$0xf]
  %v40 = vld [vmem:[%s1 + $0x64] sm:$0xf]
  %v41 = vld [vmem:[%s1 + $0x68] sm:$0xf]
  %v42 = vld [vmem:[%s1 + $0x6c] sm:$0xf]
  %v43 = vld [vmem:[%s1 + $0x70] sm:$0xf]
  %v44 = vld [vmem:[%s1 + $0x74] sm:$0xf]
  %v45 = vld [vmem:[%s1 + $0x78] sm:$0xf]
  %v46 = vld [vmem:[%s1 + $0x7c] sm:$0xf]
  %v47 = vld [vmem:[%s1 + $0x80] sm:$0xf]
  %v48 = vld [vmem:[%s1 + $0x84] sm:$0xf]
  %v49 = vld [vmem:[%s1 + $0x88] sm:$0xf]
  %v50 = vld [vmem:[%s1 + $0x8c] sm:$0xf]
  %v51 = vld [vmem:[%s1 + $0x90] sm:$0xf]
  %v52 = vld [vmem:[%s1 + $0x94] sm:$0xf]
  %v53 = vld [vmem:[%s1 + $0x98] sm:$0xf]
  %v54 = vld [vmem:[%s1 + $0x9c] sm:$0xf]
  %v55 = vld [vmem:[%s1 + $0xa0] sm:$0xf]
  %v56 = vld [vmem:[%s1 + $0xa4] sm:$0xf]
  %v57 = vld [vmem:[%s1 + $0xa8] sm:$0xf]
  %v58 = vld [vmem:[%s1 + $0xac] sm:$0xf]
  %v59 = vld [vmem:[%s1 + $0xb0] sm:$0xf]
  %v60 = vld [vmem:[%s1 + $0xb4] sm:$0xf]
  %v61 = vld [vmem:[%s1 + $0xb8] sm:$0xf]
  %v62 = vld [vmem:[%s1 + $0xbc] sm:$0xf]
  %v63 = vld [vmem:[%s1 + $0xc0] sm:$0xf]
  %v64 = vld [vmem:[%s1 + $0xc4] sm:$0xf]
  %v65 = vld [vmem:[%s1 + $0xc8] sm:$0xf]
  %v66 = vld [vmem:[%s1 + $0xcc] sm:$0xf]
  %v67 = vld [vmem:[%s1 + $0xd0] sm:$0xf]
  %v68 = vld [vmem:[%s1 + $0xd4] sm:$0xf]
  %v69 = vld [vmem:[%s1 + $0xd8] sm:$0xf]
  %v70 = vld [vmem:[%s1 + $0xdc] sm:$0xf]
  %v71 = vld [vmem:[%s1 + $0xe0] sm:$0xf]
  %v72 = vld [vmem:[%s1 + $0xe4] sm:$0xf]
  %v73 = vld [vmem:[%s1 + $0xe8] sm:$0xf]
  %v74 = vld [vmem:[%s1 + $0xec] sm:$0xf]
  %v75 = vld [vmem:[%s1 + $0xf0] sm:$0xf]
  %v76 = vld [vmem:[%s1 + $0xf4] sm:$0xf]
  %v77 = vld [vmem:[%s1 + $0xf8] sm:$0xf]
  %v78 = vld [vmem:[%s1 + $0xfc] sm:$0xf]
  %v79 = vld [vmem:[%s1 + $0x100] sm:$0xf]
  %v80 = vld [vmem:[%s1 + $0x104] sm:$0xf]
  %v81 = vld [vmem:[%s1 + $0x108] sm:$0xf]
  %v82 = vld [vmem:[%s1 + $0x10c] sm:$0xf]
  %v83 = vld [vmem:[%s1 + $0x110] sm:$0xf]
  %v84 = vld [vmem:[%s1 + $0x114] sm:$0xf]
  %v85 = vld [vmem:[%s1 + $0x118] sm:$0xf]
  %v86 = vld [vmem:[%s1 + $0x11c] sm:$0xf]
  %v87 = vld [vmem:[%s0] sm:$0xff]
  %v88 = vld [vmem:[%s0 + $0x8] sm:$0xff]
  %v89 = vld [vmem:[%s0 + $0x10] sm:$0xff]
  %v90 = vld [vmem:[%s0 + $0x18] sm:$0xff]
  %v91 = vld [vmem:[%s0 + $0x20] sm:$0xff]
  %v92 = vld [vmem:[%s0 + $0x28] sm:$0xff]
  %v93 = vld [vmem:[%s0 + $0x30] sm:$0xff]
  %v94 = vld [vmem:[%s0 + $0x38] sm:$0xff]
  %v95 = vld [vmem:[%s0 + $0x40] sm:$0xff]
  %v96 = vld [vmem:[%s0 + $0x48] sm:$0xff]
  %v97 = vld [vmem:[%s0 + $0x50] sm:$0xff]
  %v98 = vld [vmem:[%s0 + $0x58] sm:$0xff]
  %v99 = vld [vmem:[%s0 + $0x60] sm:$0xff]
  %v100 = vld [vmem:[%s0 + $0x68] sm:$0xff]
  %v101 = vld [vmem:[%s0 + $0x70] sm:$0xff]
  %v102 = vld [vmem:[%s0 + $0x78] sm:$0xff]
  %v103 = vld [vmem:[%s0 + $0x80] sm:$0xff]
  %v104 = vld [vmem:[%s0 + $0x88] sm:$0xff]
  %v105 = vld [vmem:[%s0 + $0x90] sm:$0xff]
  %v106 = vld [vmem:[%s0 + $0x98] sm:$0xff]
  %v107 = vld [vmem:[%s0 + $0xa0] sm:$0xff]
  %v108 = vld [vmem:[%s0 + $0xa8] sm:$0xff]
  %v109 = vld [vmem:[%s0 + $0xb0] sm:$0xff]
  %v110 = vld [vmem:[%s0 + $0xb8] sm:$0xff]
  %v111 = vld [vmem:[%s0 + $0xc0] sm:$0xff]
  %v112 = vld [vmem:[%s0 + $0xc8] sm:$0xff]
  %v113 = vld [vmem:[%s0 + $0xd0] sm:$0xff]
  %v114 = vld [vmem:[%s0 + $0xd8] sm:$0xff]
  %v115 = vld [vmem:[%s0 + $0xe0] sm:$0xff]
  %v116 = vld [vmem:[%s0 + $0xe8] sm:$0xff]
  %v117 = vld [vmem:[%s0 + $0xf0] sm:$0xff]
  %v118 = vld [vmem:[%s0 + $0xf8] sm:$0xff]
  %v119 = vld [vmem:[%s0 + $0x100] sm:$0xff]
  %v120 = vld [vmem:[%s0 + $0x108] sm:$0xff]
  %v121 = vld [vmem:[%s0 + $0x110] sm:$0xff]
  %v122 = vld [vmem:[%s0 + $0x118] sm:$0xff]
  %v123 = vld [vmem:[%s0 + $0x120] sm:$0xff]
  %v124 = vld [vmem:[%s0 + $0x128] sm:$0xff]
  %v125 = vld [vmem:[%s0 + $0x130] sm:$0xff]
  %v126 = vld [vmem:[%s0 + $0x138] sm:$0xff]
  %v127 = vld [vmem:[%s0 + $0x140] sm:$0xff]
  %v128 = vld [vmem:[%s0 + $0x148] sm:$0xff]
  %v129 = vld [vmem:[%s0 + $0x150] sm:$0xff]
  %v130 = vld [vmem:[%s0 + $0x158] sm:$0xff]
  %v131 = vld [vmem:[%s0 + $0x160] sm:$0xff]
  %v132 = vld [vmem:[%s0 + $0x168] sm:$0xff]
  %v133 = vld [vmem:[%s0 + $0x170] sm:$0xff]
  %v134 = vld [vmem:[%s0 + $0x178] sm:$0xff]
  %v135 = vld [vmem:[%s0 + $0x180] sm:$0xff]
  %v136 = vld [vmem:[%s0 + $0x188] sm:$0xff]
  %v137 = vld [vmem:[%s0 + $0x190] sm:$0xff]
  %v138 = vld [vmem:[%s0 + $0x198] sm:$0xff]
  %v139 = vld [vmem:[%s0 + $0x1a0] sm:$0xff]
  %v140 = vld [vmem:[%s0 + $0x1a8] sm:$0xff]
  %v141 = vld [vmem:[%s0 + $0x1b0] sm:$0xff]
  %v142 = vld [vmem:[%s0 + $0x1b8] sm:$0xff]
  %v143 = vld [vmem:[%s0 + $0x1c0] sm:$0xff]
  %v144 = vld [vmem:[%s0 + $0x1c8] sm:$0xff]
  %v145 = vld [vmem:[%s0 + $0x1d0] sm:$0xff]
  %v146 = vld [vmem:[%s0 + $0x1d8] sm:$0xff]
  %v147 = vld [vmem:[%s0 + $0x1e0] sm:$0x3]
  %v148 = vld [vmem:[%s0 + $0x1e8] sm:$0x3]
  %v149 = vld [vmem:[%s0 + $0x1f0] sm:$0x3]
  %v150 = vld [vmem:[%s0 + $0x1f8] sm:$0x3]
  %v151 = vld [vmem:[%s0 + $0x200] sm:$0x3]
  %v152 = vpack.c.bf16 %v92, %v87
  %v153 = vpack.c.bf16 %v93, %v88
  %v154 = vpack.c.bf16 %v94, %v89
  %v155 = vpack.c.bf16 %v95, %v90
  %v156 = vpack.c.bf16 %v96, %v91
  %v157 = vpack.c.bf16 %v102, %v97
  %v158 = vpack.c.bf16 %v103, %v98
  %v159 = vpack.c.bf16 %v104, %v99
  %v160 = vpack.c.bf16 %v105, %v100
  %v161 = vpack.c.bf16 %v106, %v101
  %v162 = vpack.c.bf16 %v112, %v107
  %v163 = vpack.c.bf16 %v113, %v108
  %v164 = vpack.c.bf16 %v114, %v109
  %v165 = vpack.c.bf16 %v115, %v110
  %v166 = vpack.c.bf16 %v116, %v111
  %v167 = vpack.c.bf16 %v122, %v117
  %v168 = vpack.c.bf16 %v123, %v118
  %v169 = vpack.c.bf16 %v124, %v119
  %v170 = vpack.c.bf16 %v125, %v120
  %v171 = vpack.c.bf16 %v126, %v121
  %v172 = vpack.c.bf16 %v132, %v127
  %v173 = vpack.c.bf16 %v133, %v128
  %v174 = vpack.c.bf16 %v134, %v129
  %v175 = vpack.c.bf16 %v135, %v130
  %v176 = vpack.c.bf16 %v136, %v131
  %v177 = vpack.c.bf16 %v142, %v137
  %v178 = vpack.c.bf16 %v143, %v138
  %v179 = vpack.c.bf16 %v144, %v139
  %v180 = vpack.c.bf16 %v145, %v140
  %v181 = vpack.c.bf16 %v146, %v141
  %v182 = vpack.c.bf16 %v147, %v147
  %v183 = vpack.c.bf16 %v148, %v148
  %v184 = vpack.c.bf16 %v149, %v149
  %v185 = vpack.c.bf16 %v150, %v150
  %v186 = vpack.c.bf16 %v151, %v151
  %v187 = vld [vmem:[%s2] sm:$0x1]
  %v189 = vlaneseq
  %v190 = vshrl.u32 %v189, 7
  %v191 = vsub.s32 0, %v190
  %v192 = vrot.slane %v187, %v191
  %v266 = vunpack.c.l.b16 %v15
  %v267 = vunpack.c.l.b16 %v16
  %v268 = vunpack.c.l.b16 %v17
  %v269 = vunpack.c.l.b16 %v18
  %v270 = vunpack.c.l.b16 %v19
  %v271 = vunpack.c.l.b16 %v20
  %v272 = vunpack.c.l.b16 %v21
  %v273 = vunpack.c.l.b16 %v22
  %v274 = vunpack.c.l.b16 %v23
  %v275 = vunpack.c.l.b16 %v24
  %v276 = vunpack.c.l.b16 %v25
  %v277 = vunpack.c.l.b16 %v26
  %v278 = vunpack.c.l.b16 %v27
  %v279 = vunpack.c.l.b16 %v28
  %v280 = vunpack.c.l.b16 %v29
  %v281 = vunpack.c.l.b16 %v30
  %v282 = vunpack.c.l.b16 %v31
  %v283 = vunpack.c.l.b16 %v32
  %v284 = vunpack.c.l.b16 %v33
  %v285 = vunpack.c.l.b16 %v34
  %v286 = vunpack.c.l.b16 %v35
  %v287 = vunpack.c.l.b16 %v36
  %v288 = vunpack.c.l.b16 %v37
  %v289 = vunpack.c.l.b16 %v38
  %v290 = vunpack.c.l.b16 %v39
  %v291 = vunpack.c.l.b16 %v40
  %v292 = vunpack.c.l.b16 %v41
  %v293 = vunpack.c.l.b16 %v42
  %v294 = vunpack.c.l.b16 %v43
  %v295 = vunpack.c.l.b16 %v44
  %v296 = vunpack.c.l.b16 %v45
  %v297 = vunpack.c.l.b16 %v46
  %v298 = vunpack.c.l.b16 %v47
  %v299 = vunpack.c.l.b16 %v48
  %v300 = vunpack.c.l.b16 %v49
  %v301 = vunpack.c.l.b16 %v50
  %v302 = vunpack.c.l.b16 %v51
  %v303 = vunpack.c.l.b16 %v52
  %v304 = vunpack.c.l.b16 %v53
  %v305 = vunpack.c.l.b16 %v54
  %v306 = vunpack.c.l.b16 %v55
  %v307 = vunpack.c.l.b16 %v56
  %v308 = vunpack.c.l.b16 %v57
  %v309 = vunpack.c.l.b16 %v58
  %v310 = vunpack.c.l.b16 %v59
  %v311 = vunpack.c.l.b16 %v60
  %v312 = vunpack.c.l.b16 %v61
  %v313 = vunpack.c.l.b16 %v62
  %v314 = vunpack.c.l.b16 %v63
  %v315 = vunpack.c.l.b16 %v64
  %v316 = vunpack.c.l.b16 %v65
  %v317 = vunpack.c.l.b16 %v66
  %v318 = vunpack.c.l.b16 %v67
  %v319 = vunpack.c.l.b16 %v68
  %v320 = vunpack.c.l.b16 %v69
  %v321 = vunpack.c.l.b16 %v70
  %v322 = vunpack.c.l.b16 %v71
  %v323 = vunpack.c.l.b16 %v72
  %v324 = vunpack.c.l.b16 %v73
  %v325 = vunpack.c.l.b16 %v74
  %v326 = vunpack.c.l.b16 %v75
  %v327 = vunpack.c.l.b16 %v76
  %v328 = vunpack.c.l.b16 %v77
  %v329 = vunpack.c.l.b16 %v78
  %v330 = vunpack.c.l.b16 %v79
  %v331 = vunpack.c.l.b16 %v80
  %v332 = vunpack.c.l.b16 %v81
  %v333 = vunpack.c.l.b16 %v82
  %v334 = vunpack.c.l.b16 %v83
  %v335 = vunpack.c.l.b16 %v84
  %v336 = vunpack.c.l.b16 %v85
  %v337 = vunpack.c.l.b16 %v86
  %v338 = vpack.c.b16 %v267, %v266
  %v339 = vpack.c.b16 %v269, %v268
  %v340 = vpack.c.b16 %v271, %v270
  %v341 = vpack.c.b16 %v273, %v272
  %v342 = vpack.c.b16 %v275, %v274
  %v343 = vpack.c.b16 %v277, %v276
  %v344 = vpack.c.b16 %v279, %v278
  %v345 = vpack.c.b16 %v281, %v280
  %v346 = vpack.c.b16 %v283, %v282
  %v347 = vpack.c.b16 %v285, %v284
  %v348 = vpack.c.b16 %v287, %v286
  %v349 = vpack.c.b16 %v289, %v288
  %v350 = vpack.c.b16 %v291, %v290
  %v351 = vpack.c.b16 %v293, %v292
  %v352 = vpack.c.b16 %v295, %v294
  %v353 = vpack.c.b16 %v297, %v296
  %v354 = vpack.c.b16 %v299, %v298
  %v355 = vpack.c.b16 %v301, %v300
  %v356 = vpack.c.b16 %v303, %v302
  %v357 = vpack.c.b16 %v305, %v304
  %v358 = vpack.c.b16 %v307, %v306
  %v359 = vpack.c.b16 %v309, %v308
  %v360 = vpack.c.b16 %v311, %v310
  %v361 = vpack.c.b16 %v313, %v312
  %v362 = vpack.c.b16 %v315, %v314
  %v363 = vpack.c.b16 %v317, %v316
  %v364 = vpack.c.b16 %v319, %v318
  %v365 = vpack.c.b16 %v321, %v320
  %v366 = vpack.c.b16 %v323, %v322
  %v367 = vpack.c.b16 %v325, %v324
  %v368 = vpack.c.b16 %v327, %v326
  %v369 = vpack.c.b16 %v329, %v328
  %v370 = vpack.c.b16 %v331, %v330
  %v371 = vpack.c.b16 %v333, %v332
  %v372 = vpack.c.b16 %v335, %v334
  %v373 = vpack.c.b16 %v337, %v336
  %vm410 = vcmask 523264
  %v412 = vsel %vm410, %v156, 0
  %v415 = vsel %vm410, %v161, 0
  %v418 = vsel %vm410, %v166, 0
  %v421 = vsel %vm410, %v171, 0
  %v424 = vsel %vm410, %v176, 0
  %v427 = vsel %vm410, %v181, 0
  %v430 = vsel %vm410, %v186, 0
  %432 = vmatprep.subr.bf16.mxu0 0
  %433 = vmatpush1.bf16.msra.mxu0 %v345
  %434 = vmatprep.subr.bf16.mxu0 0
  %435 = vmatpush1.bf16.msra.mxu0 %v344
  %436 = vmatprep.subr.bf16.mxu0 0
  %437 = vmatpush1.bf16.msra.mxu0 %v343
  %438 = vmatprep.subr.bf16.mxu0 0
  %439 = vmatpush1.bf16.msra.mxu0 %v342
  %440 = vmatprep.subr.bf16.mxu0 0
  %441 = vmatpush1.bf16.msra.mxu0 %v341
  %442 = vmatprep.subr.bf16.mxu0 0
  %443 = vmatpush1.bf16.msra.mxu0 %v340
  %444 = vmatprep.subr.bf16.mxu0 0
  %445 = vmatpush1.bf16.msra.mxu0 %v339
  %446 = vmatprep.subr.bf16.mxu0 0
  %447 = vmatpush1.bf16.msra.mxu0 %v338
  %448 = vmatprep.subr.bf16.mxu0 0
  %449 = vmatpush2.bf16.msra.mxu0 %v353
  %450 = vmatprep.subr.bf16.mxu0 0
  %451 = vmatpush2.bf16.msra.mxu0 %v352
  %452 = vmatprep.subr.bf16.mxu0 0
  %453 = vmatpush2.bf16.msra.mxu0 %v351
  %454 = vmatprep.subr.bf16.mxu0 0
  %455 = vmatpush2.bf16.msra.mxu0 %v350
  %456 = vmatprep.subr.bf16.mxu0 0
  %457 = vmatpush2.bf16.msra.mxu0 %v349
  %458 = vmatprep.subr.bf16.mxu0 0
  %459 = vmatpush2.bf16.msra.mxu0 %v348
  %460 = vmatprep.subr.bf16.mxu0 0
  %461 = vmatpush2.bf16.msra.mxu0 %v347
  %462 = vmatprep.subr.bf16.mxu0 0
  %463 = vmatpush2.bf16.msra.mxu0 %v346
  %464 = vmatprep.mubr.bf16.mxu0 %v153
  %465 = vmatmul.mubr.bf16.gmra.mxu0 %v152
  %v466 = vpop.f32.mrf.mxu0
  %v467 = vadd.f32 %v192, %v466
  %v468 = vpop.f32.mrf.mxu0
  %v469 = vpop.f32.mrf.mxu0
  %v470 = vadd.f32 %v192, %v469
  %v471 = vpop.f32.mrf.mxu0
  %472 = vmatprep.mubr.bf16.mxu0 %v158
  %473 = vmatmul.mubr.bf16.gmra.mxu0 %v157
  %v474 = vpop.f32.mrf.mxu0
  %v475 = vadd.f32 %v192, %v474
  %v476 = vpop.f32.mrf.mxu0
  %v477 = vpop.f32.mrf.mxu0
  %v478 = vadd.f32 %v192, %v477
  %v479 = vpop.f32.mrf.mxu0
  %480 = vmatprep.mubr.bf16.mxu0 %v163
  %481 = vmatmul.mubr.bf16.gmra.mxu0 %v162
  %v482 = vpop.f32.mrf.mxu0
  %v483 = vadd.f32 %v192, %v482
  %v484 = vpop.f32.mrf.mxu0
  %v485 = vpop.f32.mrf.mxu0
  %v486 = vadd.f32 %v192, %v485
  %v487 = vpop.f32.mrf.mxu0
  %488 = vmatprep.mubr.bf16.mxu0 %v168
  %489 = vmatmul.mubr.bf16.gmra.mxu0 %v167
  %v490 = vpop.f32.mrf.mxu0
  %v491 = vadd.f32 %v192, %v490
  %v492 = vpop.f32.mrf.mxu0
  %v493 = vpop.f32.mrf.mxu0
  %v494 = vadd.f32 %v192, %v493
  %v495 = vpop.f32.mrf.mxu0
  %496 = vmatprep.mubr.bf16.mxu0 %v173
  %497 = vmatmul.mubr.bf16.gmra.mxu0 %v172
  %v498 = vpop.f32.mrf.mxu0
  %v499 = vadd.f32 %v192, %v498
  %v500 = vpop.f32.mrf.mxu0
  %v501 = vpop.f32.mrf.mxu0
  %v502 = vadd.f32 %v192, %v501
  %v503 = vpop.f32.mrf.mxu0
  %504 = vmatprep.mubr.bf16.mxu0 %v178
  %505 = vmatmul.mubr.bf16.gmra.mxu0 %v177
  %v506 = vpop.f32.mrf.mxu0
  %v507 = vadd.f32 %v192, %v506
  %v508 = vpop.f32.mrf.mxu0
  %v509 = vpop.f32.mrf.mxu0
  %v510 = vadd.f32 %v192, %v509
  %v511 = vpop.f32.mrf.mxu0
  %512 = vmatprep.mubr.bf16.mxu0 %v183
  %513 = vmatmul.mubr.bf16.gmra.mxu0 %v182
  %v514 = vpop.f32.mrf.mxu0
  %v515 = vadd.f32 %v192, %v514
  %v516 = vpop.f32.mrf.mxu0
  %v517 = vpop.f32.mrf.mxu0
  %v518 = vpop.f32.mrf.mxu0
  %519 = vdwg.mxu0
  %520 = vmatprep.subr.bf16.mxu0 0
  %521 = vmatpush1.bf16.msra.mxu0 %v361
  %522 = vmatprep.subr.bf16.mxu0 0
  %523 = vmatpush1.bf16.msra.mxu0 %v360
  %524 = vmatprep.subr.bf16.mxu0 0
  %525 = vmatpush1.bf16.msra.mxu0 %v359
  %526 = vmatprep.subr.bf16.mxu0 0
  %527 = vmatpush1.bf16.msra.mxu0 %v358
  %528 = vmatprep.subr.bf16.mxu0 0
  %529 = vmatpush1.bf16.msra.mxu0 %v357
  %530 = vmatprep.subr.bf16.mxu0 0
  %531 = vmatpush1.bf16.msra.mxu0 %v356
  %532 = vmatprep.subr.bf16.mxu0 0
  %533 = vmatpush1.bf16.msra.mxu0 %v355
  %534 = vmatprep.subr.bf16.mxu0 0
  %535 = vmatpush1.bf16.msra.mxu0 %v354
  %536 = vmatprep.subr.bf16.mxu0 0
  %537 = vmatpush2.bf16.msra.mxu0 %v369
  %538 = vmatprep.subr.bf16.mxu0 0
  %539 = vmatpush2.bf16.msra.mxu0 %v368
  %540 = vmatprep.subr.bf16.mxu0 0
  %541 = vmatpush2.bf16.msra.mxu0 %v367
  %542 = vmatprep.subr.bf16.mxu0 0
  %543 = vmatpush2.bf16.msra.mxu0 %v366
  %544 = vmatprep.subr.bf16.mxu0 0
  %545 = vmatpush2.bf16.msra.mxu0 %v365
  %546 = vmatprep.subr.bf16.mxu0 0
  %547 = vmatpush2.bf16.msra.mxu0 %v364
  %548 = vmatprep.subr.bf16.mxu0 0
  %549 = vmatpush2.bf16.msra.mxu0 %v363
  %550 = vmatprep.subr.bf16.mxu0 0
  %551 = vmatpush2.bf16.msra.mxu0 %v362
  %552 = vmatprep.mubr.bf16.mxu0 %v155
  %553 = vmatmul.mubr.bf16.gmra.mxu0 %v154
  %v554 = vpop.f32.mrf.mxu0
  %v555 = vadd.f32 %v467, %v554
  %v556 = vpop.f32.mrf.mxu0
  %v557 = vpop.f32.mrf.mxu0
  %v558 = vadd.f32 %v470, %v557
  %v559 = vpop.f32.mrf.mxu0
  %560 = vmatprep.mubr.bf16.mxu0 %v160
  %561 = vmatmul.mubr.bf16.gmra.mxu0 %v159
  %v562 = vpop.f32.mrf.mxu0
  %v563 = vadd.f32 %v475, %v562
  %v564 = vpop.f32.mrf.mxu0
  %v565 = vpop.f32.mrf.mxu0
  %v566 = vadd.f32 %v478, %v565
  %v567 = vpop.f32.mrf.mxu0
  %568 = vmatprep.mubr.bf16.mxu0 %v165
  %569 = vmatmul.mubr.bf16.gmra.mxu0 %v164
  %v570 = vpop.f32.mrf.mxu0
  %v571 = vadd.f32 %v483, %v570
  %v572 = vpop.f32.mrf.mxu0
  %v573 = vpop.f32.mrf.mxu0
  %v574 = vadd.f32 %v486, %v573
  %v575 = vpop.f32.mrf.mxu0
  %576 = vmatprep.mubr.bf16.mxu0 %v170
  %577 = vmatmul.mubr.bf16.gmra.mxu0 %v169
  %v578 = vpop.f32.mrf.mxu0
  %v579 = vadd.f32 %v491, %v578
  %v580 = vpop.f32.mrf.mxu0
  %v581 = vpop.f32.mrf.mxu0
  %v582 = vadd.f32 %v494, %v581
  %v583 = vpop.f32.mrf.mxu0
  %584 = vmatprep.mubr.bf16.mxu0 %v175
  %585 = vmatmul.mubr.bf16.gmra.mxu0 %v174
  %v586 = vpop.f32.mrf.mxu0
  %v587 = vadd.f32 %v499, %v586
  %v588 = vpop.f32.mrf.mxu0
  %v589 = vpop.f32.mrf.mxu0
  %v590 = vadd.f32 %v502, %v589
  %v591 = vpop.f32.mrf.mxu0
  %592 = vmatprep.mubr.bf16.mxu0 %v180
  %593 = vmatmul.mubr.bf16.gmra.mxu0 %v179
  %v594 = vpop.f32.mrf.mxu0
  %v595 = vadd.f32 %v507, %v594
  %v596 = vpop.f32.mrf.mxu0
  %v597 = vpop.f32.mrf.mxu0
  %v598 = vadd.f32 %v510, %v597
  %v599 = vpop.f32.mrf.mxu0
  %600 = vmatprep.mubr.bf16.mxu0 %v185
  %601 = vmatmul.mubr.bf16.gmra.mxu0 %v184
  %v602 = vpop.f32.mrf.mxu0
  %v603 = vadd.f32 %v515, %v602
  %v604 = vpop.f32.mrf.mxu0
  %v605 = vpop.f32.mrf.mxu0
  %v606 = vpop.f32.mrf.mxu0
  %607 = vdwg.mxu0
  %608 = vmatprep.subr.bf16.mxu0 0
  %609 = vmatpush1.bf16.msra.mxu0 0
  %610 = vmatprep.subr.bf16.mxu0 0
  %611 = vmatpush1.bf16.msra.mxu0 0
  %612 = vmatprep.subr.bf16.mxu0 0
  %613 = vmatpush1.bf16.msra.mxu0 0
  %614 = vmatprep.subr.bf16.mxu0 0
  %615 = vmatpush1.bf16.msra.mxu0 0
  %616 = vmatprep.subr.bf16.mxu0 0
  %617 = vmatpush1.bf16.msra.mxu0 %v373
  %618 = vmatprep.subr.bf16.mxu0 0
  %619 = vmatpush1.bf16.msra.mxu0 %v372
  %620 = vmatprep.subr.bf16.mxu0 0
  %621 = vmatpush1.bf16.msra.mxu0 %v371
  %622 = vmatprep.subr.bf16.mxu0 0
  %623 = vmatpush1.bf16.msra.mxu0 %v370
  %624 = vmatprep.subr.bf16.mxu0 0
  %625 = vmatpush2.bf16.msra.mxu0 0
  %626 = vmatprep.subr.bf16.mxu0 0
  %627 = vmatpush2.bf16.msra.mxu0 0
  %628 = vmatprep.subr.bf16.mxu0 0
  %629 = vmatpush2.bf16.msra.mxu0 0
  %630 = vmatprep.subr.bf16.mxu0 0
  %631 = vmatpush2.bf16.msra.mxu0 0
  %632 = vmatprep.subr.bf16.mxu0 0
  %633 = vmatpush2.bf16.msra.mxu0 0
  %634 = vmatprep.subr.bf16.mxu0 0
  %635 = vmatpush2.bf16.msra.mxu0 0
  %636 = vmatprep.subr.bf16.mxu0 0
  %637 = vmatpush2.bf16.msra.mxu0 0
  %638 = vmatprep.subr.bf16.mxu0 0
  %639 = vmatpush2.bf16.msra.mxu0 0
  %640 = vmatprep.mubr.bf16.mxu0 0
  %641 = vmatmul.mubr.bf16.gmra.mxu0 %v412
  %v642 = vpop.f32.mrf.mxu0
  %v643 = vadd.f32 %v555, %v642
  %v644 = vpop.f32.mrf.mxu0
  %v645 = vpop.f32.mrf.mxu0
  %v646 = vadd.f32 %v558, %v645
  %v647 = vpop.f32.mrf.mxu0
  %648 = vmatprep.mubr.bf16.mxu0 0
  %649 = vmatmul.mubr.bf16.gmra.mxu0 %v415
  %v650 = vpop.f32.mrf.mxu0
  %v651 = vadd.f32 %v563, %v650
  %v652 = vpop.f32.mrf.mxu0
  %v653 = vpop.f32.mrf.mxu0
  %v654 = vadd.f32 %v566, %v653
  %v655 = vpop.f32.mrf.mxu0
  %656 = vmatprep.mubr.bf16.mxu0 0
  %657 = vmatmul.mubr.bf16.gmra.mxu0 %v418
  %v658 = vpop.f32.mrf.mxu0
  %v659 = vadd.f32 %v571, %v658
  %v660 = vpop.f32.mrf.mxu0
  %v661 = vpop.f32.mrf.mxu0
  %v662 = vadd.f32 %v574, %v661
  %v663 = vpop.f32.mrf.mxu0
  %664 = vmatprep.mubr.bf16.mxu0 0
  %665 = vmatmul.mubr.bf16.gmra.mxu0 %v421
  %v666 = vpop.f32.mrf.mxu0
  %v667 = vadd.f32 %v579, %v666
  %v668 = vpop.f32.mrf.mxu0
  %v669 = vpop.f32.mrf.mxu0
  %v670 = vadd.f32 %v582, %v669
  %v671 = vpop.f32.mrf.mxu0
  %672 = vmatprep.mubr.bf16.mxu0 0
  %673 = vmatmul.mubr.bf16.gmra.mxu0 %v424
  %v674 = vpop.f32.mrf.mxu0
  %v675 = vadd.f32 %v587, %v674
  %v676 = vpop.f32.mrf.mxu0
  %v677 = vpop.f32.mrf.mxu0
  %v678 = vadd.f32 %v590, %v677
  %v679 = vpop.f32.mrf.mxu0
  %680 = vmatprep.mubr.bf16.mxu0 0
  %681 = vmatmul.mubr.bf16.gmra.mxu0 %v427
  %v682 = vpop.f32.mrf.mxu0
  %v683 = vadd.f32 %v595, %v682
  %v684 = vpop.f32.mrf.mxu0
  %v685 = vpop.f32.mrf.mxu0
  %v686 = vadd.f32 %v598, %v685
  %v687 = vpop.f32.mrf.mxu0
  %688 = vmatprep.mubr.bf16.mxu0 0
  %689 = vmatmul.mubr.bf16.gmra.mxu0 %v430
  %v690 = vpop.f32.mrf.mxu0
  %v691 = vadd.f32 %v603, %v690
  %v692 = vpop.f32.mrf.mxu0
  %v693 = vpop.f32.mrf.mxu0
  %v694 = vpop.f32.mrf.mxu0
  %695 = vdwg.mxu0
  %v696 = vmax.f32 %v643, 0.0
  %v697 = vmax.f32 %v646, 0.0
  %v698 = vmax.f32 %v651, 0.0
  %v699 = vmax.f32 %v654, 0.0
  %v700 = vmax.f32 %v659, 0.0
  %v701 = vmax.f32 %v662, 0.0
  %v702 = vmax.f32 %v667, 0.0
  %v703 = vmax.f32 %v670, 0.0
  %v704 = vmax.f32 %v675, 0.0
  %v705 = vmax.f32 %v678, 0.0
  %v706 = vmax.f32 %v683, 0.0
  %v707 = vmax.f32 %v686, 0.0
  %v708 = vmax.f32 %v691, 0.0
  %vm709 = vcmask 261120
  %710 = vst.msk [vmem:[%s3] sm:$0xff] %vm709, %v696
  %711 = vst.msk [vmem:[%s3 + $0x8] sm:$0xff] %vm709, %v697
  %712 = vst.msk [vmem:[%s3 + $0x10] sm:$0xff] %vm709, %v698
  %713 = vst.msk [vmem:[%s3 + $0x18] sm:$0xff] %vm709, %v699
  %714 = vst.msk [vmem:[%s3 + $0x20] sm:$0xff] %vm709, %v700
  %715 = vst.msk [vmem:[%s3 + $0x28] sm:$0xff] %vm709, %v701
  %716 = vst.msk [vmem:[%s3 + $0x30] sm:$0xff] %vm709, %v702
  %717 = vst.msk [vmem:[%s3 + $0x38] sm:$0xff] %vm709, %v703
  %718 = vst.msk [vmem:[%s3 + $0x40] sm:$0xff] %vm709, %v704
  %719 = vst.msk [vmem:[%s3 + $0x48] sm:$0xff] %vm709, %v705
  %720 = vst.msk [vmem:[%s3 + $0x50] sm:$0xff] %vm709, %v706
  %721 = vst.msk [vmem:[%s3 + $0x58] sm:$0xff] %vm709, %v707
  %vm722 = vcmask 254976
  %723 = vst.msk [vmem:[%s3 + $0x60] sm:$0x3] %vm722, %v708
  // Predicated region
  $region14: #{_cnn_forward.6} parent=0 // pred_check
    _
  $region15: #{_cnn_forward.6} parent=0 // pred_check_branch
    %725 = sbr.rel (0) target = $region17
  $region16: #{_cnn_forward.6} parent=0 // pred_region
    _
  $region17: #{_cnn_forward.6} parent=0 // pred_fallthru
    _
  // Predicated region
  $region18: #{_cnn_forward.6} parent=0 // pred_check
    _
  $region19: #{_cnn_forward.6} parent=0 // pred_check_branch
    %727 = sbr.rel (0) target = $region21
  $region20: #{_cnn_forward.6} parent=0 // pred_region
    _
  $region21: #{_cnn_forward.6} parent=0 // pred_fallthru
    _

// kernel: _cnn_forward.7
$region0: #{_cnn_forward.7}
  #allocation0 [shape = 'u32[]', space=smem, size = 0x4, offset = 0x4, fixed_abs, tag = 'smem constant byte address 0x4 - core index']
  #allocation1 [shape = 'u32[144,128]{1,0:T(1,128)}', space=vmem, size = 0x12000, scoped, tag = 'internal scratch']
  #allocation2 [shape = 'f32[1,1]{1,0:T(1,128)S(1)}', space=vmem, size = 0x200, scoped, tag = 'scoped memory for _cnn_forward.7']
  %s0 = inlined_call_operand.vmem [shape: f32[2,1568], index: 0, kind: input, shape index: {}]
  %s1 = inlined_call_operand.vmem [shape: bf16[1568,512], index: 1, kind: input, shape index: {}]
  %s2 = inlined_call_operand.vmem [shape: f32[1,512], index: 2, kind: input, shape index: {}]
  %s3 = inlined_call_operand.vmem [shape: f32[512,1], index: 3, kind: input, shape index: {}]
  %s4 = inlined_call_operand.<no memory space> [shape: f32[1,1], index: 4, kind: input, shape index: {}]
  %s5 = inlined_call_operand.hbm [shape: f32[2,512], index: 5, kind: output, shape index: {0}]
  %s6 = inlined_call_operand.vmem [shape: f32[2,1], index: 6, kind: output, shape index: {1}]
  %7 = xla_tuple %s5, %s6
  %s8 = sld [smem:[#allocation0]]
  $region38: #{_cnn_forward.7} parent=0
    _
  %s10 = ssub.s32 1, %s8
  %s11 = scalar_select 0, %s10, %s8
  %v12 = vstv %s4
  %13 = vst [vmem:[#allocation2] sm:$0x1] %v12
  $region1: #{_cnn_forward.7} parent=0
    #allocation3 [shape = 'u8[4096]{0}', space=vmem, size = 0x1000, scoped, tag = 'output window, operand 0, single buffered']
    #allocation4 [shape = 's32[1]{0}', space=sflag, size = 0x4, scoped, tag = 'scoped memory for _cnn_forward.7']
    %14 = vsyncpa [#allocation4], 0
    // Predicated region
    $region2: #{_cnn_forward.7} parent=1 // pred_check
      _
    $region3: #{_cnn_forward.7} parent=1 // pred_check_branch
      %16 = sbr.rel (0) target = $region5
    $region4: #{_cnn_forward.7} parent=1 // pred_region
      _
    $region5: #{_cnn_forward.7} parent=1 // pred_fallthru
      _
    // Predicated region
    $region6: #{_cnn_forward.7} parent=1 // pred_check
      _
    $region7: #{_cnn_forward.7} parent=1 // pred_check_branch
      %18 = sbr.rel (0) target = $region9
    $region8: #{_cnn_forward.7} parent=1 // pred_region
      _
    $region9: #{_cnn_forward.7} parent=1 // pred_fallthru
      _
    // Predicated region
    $region10: #{_cnn_forward.7} parent=1 // pred_check
      _
    $region11: #{_cnn_forward.7} parent=1 // pred_check_branch
      %20 = sbr.rel (0) target = $region13
    $region12: #{_cnn_forward.7} parent=1 // pred_region
      _
    $region13: #{_cnn_forward.7} parent=1 // pred_fallthru
      _
    // Predicated region
    $region14: #{_cnn_forward.7} parent=1 // pred_check
      _
    $region15: #{_cnn_forward.7} parent=1 // pred_check_branch
      %22 = sbr.rel (0) target = $region17
    $region16: #{_cnn_forward.7} parent=1 // pred_region
      _
    $region17: #{_cnn_forward.7} parent=1 // pred_fallthru
      _
    // Predicated region
    $region18: #{_cnn_forward.7} parent=1 // pred_check
      _
    $region19: #{_cnn_forward.7} parent=1 // pred_check_branch
      %24 = sbr.rel (0) target = $region21
    $region20: #{_cnn_forward.7} parent=1 // pred_region
      _
    $region21: #{_cnn_forward.7} parent=1 // pred_fallthru
      _
    %v26 = vld [vmem:[%s1] sm:$0xff]
    %v27 = vld [vmem:[%s1 + $0x8] sm:$0xff]
    %v28 = vld [vmem:[%s1 + $0x10] sm:$0xff]
    %v29 = vld [vmem:[%s1 + $0x18] sm:$0xff]
    %v30 = vld [vmem:[%s1 + $0x20] sm:$0xff]
    %v31 = vld [vmem:[%s1 + $0x28] sm:$0xff]
    %v32 = vld [vmem:[%s1 + $0x30] sm:$0xff]
    %v33 = vld [vmem:[%s1 + $0x38] sm:$0xff]
    %v34 = vld [vmem:[%s1 + $0x40] sm:$0xff]
    %v35 = vld [vmem:[%s1 + $0x48] sm:$0xff]
    %v36 = vld [vmem:[%s1 + $0x50] sm:$0xff]
    %v37 = vld [vmem:[%s1 + $0x58] sm:$0xff]
    %v38 = vld [vmem:[%s1 + $0x60] sm:$0xff]
    %v39 = vld [vmem:[%s1 + $0x68] sm:$0xff]
    %v40 = vld [vmem:[%s1 + $0x70] sm:$0xff]
    %v41 = vld [vmem:[%s1 + $0x78] sm:$0xff]
    %v42 = vld [vmem:[%s1 + $0x80] sm:$0xff]
    %v43 = vld [vmem:[%s1 + $0x88] sm:$0xff]
    %v44 = vld [vmem:[%s1 + $0x90] sm:$0xff]
    %v45 = vld [vmem:[%s1 + $0x98] sm:$0xff]
    %v46 = vld [vmem:[%s1 + $0xa0] sm:$0xff]
    %v47 = vld [vmem:[%s1 + $0xa8] sm:$0xff]
    %v48 = vld [vmem:[%s1 + $0xb0] sm:$0xff]
    %v49 = vld [vmem:[%s1 + $0xb8] sm:$0xff]
    %v50 = vld [vmem:[%s1 + $0xc0] sm:$0xff]
    %v51 = vld [vmem:[%s1 + $0xc8] sm:$0xff]
    %v52 = vld [vmem:[%s1 + $0xd0] sm:$0xff]
    %v53 = vld [vmem:[%s1 + $0xd8] sm:$0xff]
    %v54 = vld [vmem:[%s1 + $0xe0] sm:$0xff]
    %v55 = vld [vmem:[%s1 + $0xe8] sm:$0xff]
    %v56 = vld [vmem:[%s1 + $0xf0] sm:$0xff]
    %v57 = vld [vmem:[%s1 + $0xf8] sm:$0xff]
    %v58 = vld [vmem:[%s1 + $0x100] sm:$0xff]
    %v59 = vld [vmem:[%s1 + $0x108] sm:$0xff]
    %v60 = vld [vmem:[%s1 + $0x110] sm:$0xff]
    %v61 = vld [vmem:[%s1 + $0x118] sm:$0xff]
    %v62 = vld [vmem:[%s1 + $0x120] sm:$0xff]
    %v63 = vld [vmem:[%s1 + $0x128] sm:$0xff]
    %v64 = vld [vmem:[%s1 + $0x130] sm:$0xff]
    %v65 = vld [vmem:[%s1 + $0x138] sm:$0xff]
    %v66 = vld [vmem:[%s1 + $0x140] sm:$0xff]
    %v67 = vld [vmem:[%s1 + $0x148] sm:$0xff]
    %v68 = vld [vmem:[%s1 + $0x150] sm:$0xff]
    %v69 = vld [vmem:[%s1 + $0x158] sm:$0xff]
    %v70 = vld [vmem:[%s1 + $0x160] sm:$0xff]
    %v71 = vld [vmem:[%s1 + $0x168] sm:$0xff]
    %v72 = vld [vmem:[%s1 + $0x170] sm:$0xff]
    %v73 = vld [vmem:[%s1 + $0x178] sm:$0xff]
    %v74 = vld [vmem:[%s1 + $0x180] sm:$0xff]
    %v75 = vld [vmem:[%s1 + $0x188] sm:$0xff]
    %v76 = vld [vmem:[%s1 + $0x190] sm:$0xff]
    %v77 = vld [vmem:[%s1 + $0x198] sm:$0xff]
    %v78 = vld [vmem:[%s1 + $0x1a0] sm:$0xff]
    %v79 = vld [vmem:[%s1 + $0x1a8] sm:$0xff]
    %v80 = vld [vmem:[%s1 + $0x1b0] sm:$0xff]
    %v81 = vld [vmem:[%s1 + $0x1b8] sm:$0xff]
    %v82 = vld [vmem:[%s1 + $0x1c0] sm:$0xff]
    %v83 = vld [vmem:[%s1 + $0x1c8] sm:$0xff]
    %v84 = vld [vmem:[%s1 + $0x1d0] sm:$0xff]
    %v85 = vld [vmem:[%s1 + $0x1d8] sm:$0xff]
    %v86 = vld [vmem:[%s1 + $0x1e0] sm:$0xff]
    %v87 = vld [vmem:[%s1 + $0x1e8] sm:$0xff]
    %v88 = vld [vmem:[%s1 + $0x1f0] sm:$0xff]
    %v89 = vld [vmem:[%s1 + $0x1f8] sm:$0xff]
    %v90 = vld [vmem:[%s1 + $0x200] sm:$0xff]
    %v91 = vld [vmem:[%s1 + $0x208] sm:$0xff]
    %v92 = vld [vmem:[%s1 + $0x210] sm:$0xff]
    %v93 = vld [vmem:[%s1 + $0x218] sm:$0xff]
    %v94 = vld [vmem:[%s1 + $0x220] sm:$0xff]
    %v95 = vld [vmem:[%s1 + $0x228] sm:$0xff]
    %v96 = vld [vmem:[%s1 + $0x230] sm:$0xff]
    %v97 = vld [vmem:[%s1 + $0x238] sm:$0xff]
    %v98 = vld [vmem:[%s1 + $0x240] sm:$0xff]
    %v99 = vld [vmem:[%s1 + $0x248] sm:$0xff]
    %v100 = vld [vmem:[%s1 + $0x250] sm:$0xff]
    %v101 = vld [vmem:[%s1 + $0x258] sm:$0xff]
    %v102 = vld [vmem:[%s1 + $0x260] sm:$0xff]
    %v103 = vld [vmem:[%s1 + $0x268] sm:$0xff]
    %v104 = vld [vmem:[%s1 + $0x270] sm:$0xff]
    %v105 = vld [vmem:[%s1 + $0x278] sm:$0xff]
    %v106 = vld [vmem:[%s1 + $0x280] sm:$0xff]
    %v107 = vld [vmem:[%s1 + $0x288] sm:$0xff]
    %v108 = vld [vmem:[%s1 + $0x290] sm:$0xff]
    %v109 = vld [vmem:[%s1 + $0x298] sm:$0xff]
    %v110 = vld [vmem:[%s1 + $0x2a0] sm:$0xff]
    %v111 = vld [vmem:[%s1 + $0x2a8] sm:$0xff]
    %v112 = vld [vmem:[%s1 + $0x2b0] sm:$0xff]
    %v113 = vld [vmem:[%s1 + $0x2b8] sm:$0xff]
    %v114 = vld [vmem:[%s1 + $0x2c0] sm:$0xff]
    %v115 = vld [vmem:[%s1 + $0x2c8] sm:$0xff]
    %v116 = vld [vmem:[%s1 + $0x2d0] sm:$0xff]
    %v117 = vld [vmem:[%s1 + $0x2d8] sm:$0xff]
    %v118 = vld [vmem:[%s1 + $0x2e0] sm:$0xff]
    %v119 = vld [vmem:[%s1 + $0x2e8] sm:$0xff]
    %v120 = vld [vmem:[%s1 + $0x2f0] sm:$0xff]
    %v121 = vld [vmem:[%s1 + $0x2f8] sm:$0xff]
    %v122 = vld [vmem:[%s1 + $0x300] sm:$0xff]
    %v123 = vld [vmem:[%s1 + $0x308] sm:$0xff]
    %v124 = vld [vmem:[%s1 + $0x310] sm:$0xff]
    %v125 = vld [vmem:[%s1 + $0x318] sm:$0xff]
    %v126 = vld [vmem:[%s1 + $0x320] sm:$0xff]
    %v127 = vld [vmem:[%s1 + $0x328] sm:$0xff]
    %v128 = vld [vmem:[%s1 + $0x330] sm:$0xff]
    %v129 = vld [vmem:[%s1 + $0x338] sm:$0xff]
    %v130 = vld [vmem:[%s1 + $0x340] sm:$0xff]
    %v131 = vld [vmem:[%s1 + $0x348] sm:$0xff]
    %v132 = vld [vmem:[%s1 + $0x350] sm:$0xff]
    %v133 = vld [vmem:[%s1 + $0x358] sm:$0xff]
    %v134 = vld [vmem:[%s1 + $0x360] sm:$0xff]
    %v135 = vld [vmem:[%s1 + $0x368] sm:$0xff]
    %v136 = vld [vmem:[%s1 + $0x370] sm:$0xff]
    %v137 = vld [vmem:[%s1 + $0x378] sm:$0xff]
    %v138 = vld [vmem:[%s1 + $0x380] sm:$0xff]
    %v139 = vld [vmem:[%s1 + $0x388] sm:$0xff]
    %v140 = vld [vmem:[%s1 + $0x390] sm:$0xff]
    %v141 = vld [vmem:[%s1 + $0x398] sm:$0xff]
    %v142 = vld [vmem:[%s1 + $0x3a0] sm:$0xff]
    %v143 = vld [vmem:[%s1 + $0x3a8] sm:$0xff]
    %v144 = vld [vmem:[%s1 + $0x3b0] sm:$0xff]
    %v145 = vld [vmem:[%s1 + $0x3b8] sm:$0xff]
    %v146 = vld [vmem:[%s1 + $0x3c0] sm:$0xff]
    %v147 = vld [vmem:[%s1 + $0x3c8] sm:$0xff]
    %v148 = vld [vmem:[%s1 + $0x3d0] sm:$0xff]
    %v149 = vld [vmem:[%s1 + $0x3d8] sm:$0xff]
    %v150 = vld [vmem:[%s1 + $0x3e0] sm:$0xff]
    %v151 = vld [vmem:[%s1 + $0x3e8] sm:$0xff]
    %v152 = vld [vmem:[%s1 + $0x3f0] sm:$0xff]
    %v153 = vld [vmem:[%s1 + $0x3f8] sm:$0xff]
    %v154 = vld [vmem:[%s1 + $0x400] sm:$0xff]
    %v155 = vld [vmem:[%s1 + $0x408] sm:$0xff]
    %v156 = vld [vmem:[%s1 + $0x410] sm:$0xff]
    %v157 = vld [vmem:[%s1 + $0x418] sm:$0xff]
    %v158 = vld [vmem:[%s1 + $0x420] sm:$0xff]
    %v159 = vld [vmem:[%s1 + $0x428] sm:$0xff]
    %v160 = vld [vmem:[%s1 + $0x430] sm:$0xff]
    %v161 = vld [vmem:[%s1 + $0x438] sm:$0xff]
    %v162 = vld [vmem:[%s1 + $0x440] sm:$0xff]
    %v163 = vld [vmem:[%s1 + $0x448] sm:$0xff]
    %v164 = vld [vmem:[%s1 + $0x450] sm:$0xff]
    %v165 = vld [vmem:[%s1 + $0x458] sm:$0xff]
    %v166 = vld [vmem:[%s1 + $0x460] sm:$0xff]
    %v167 = vld [vmem:[%s1 + $0x468] sm:$0xff]
    %v168 = vld [vmem:[%s1 + $0x470] sm:$0xff]
    %v169 = vld [vmem:[%s1 + $0x478] sm:$0xff]
    %v170 = vld [vmem:[%s1 + $0x480] sm:$0xff]
    %v171 = vld [vmem:[%s1 + $0x488] sm:$0xff]
    %v172 = vld [vmem:[%s1 + $0x490] sm:$0xff]
    %v173 = vld [vmem:[%s1 + $0x498] sm:$0xff]
    %v174 = vld [vmem:[%s1 + $0x4a0] sm:$0xff]
    %v175 = vld [vmem:[%s1 + $0x4a8] sm:$0xff]
    %v176 = vld [vmem:[%s1 + $0x4b0] sm:$0xff]
    %v177 = vld [vmem:[%s1 + $0x4b8] sm:$0xff]
    %v178 = vld [vmem:[%s1 + $0x4c0] sm:$0xff]
    %v179 = vld [vmem:[%s1 + $0x4c8] sm:$0xff]
    %v180 = vld [vmem:[%s1 + $0x4d0] sm:$0xff]
    %v181 = vld [vmem:[%s1 + $0x4d8] sm:$0xff]
    %v182 = vld [vmem:[%s1 + $0x4e0] sm:$0xff]
    %v183 = vld [vmem:[%s1 + $0x4e8] sm:$0xff]
    %v184 = vld [vmem:[%s1 + $0x4f0] sm:$0xff]
    %v185 = vld [vmem:[%s1 + $0x4f8] sm:$0xff]
    %v186 = vld [vmem:[%s1 + $0x500] sm:$0xff]
    %v187 = vld [vmem:[%s1 + $0x508] sm:$0xff]
    %v188 = vld [vmem:[%s1 + $0x510] sm:$0xff]
    %v189 = vld [vmem:[%s1 + $0x518] sm:$0xff]
    %v190 = vld [vmem:[%s1 + $0x520] sm:$0xff]
    %v191 = vld [vmem:[%s1 + $0x528] sm:$0xff]
    %v192 = vld [vmem:[%s1 + $0x530] sm:$0xff]
    %v193 = vld [vmem:[%s1 + $0x538] sm:$0xff]
    %v194 = vld [vmem:[%s1 + $0x540] sm:$0xff]
    %v195 = vld [vmem:[%s1 + $0x548] sm:$0xff]
    %v196 = vld [vmem:[%s1 + $0x550] sm:$0xff]
    %v197 = vld [vmem:[%s1 + $0x558] sm:$0xff]
    %v198 = vld [vmem:[%s1 + $0x560] sm:$0xff]
    %v199 = vld [vmem:[%s1 + $0x568] sm:$0xff]
    %v200 = vld [vmem:[%s1 + $0x570] sm:$0xff]
    %v201 = vld [vmem:[%s1 + $0x578] sm:$0xff]
    %v202 = vld [vmem:[%s1 + $0x580] sm:$0xff]
    %v203 = vld [vmem:[%s1 + $0x588] sm:$0xff]
    %v204 = vld [vmem:[%s1 + $0x590] sm:$0xff]
    %v205 = vld [vmem:[%s1 + $0x598] sm:$0xff]
    %v206 = vld [vmem:[%s1 + $0x5a0] sm:$0xff]
    %v207 = vld [vmem:[%s1 + $0x5a8] sm:$0xff]
    %v208 = vld [vmem:[%s1 + $0x5b0] sm:$0xff]
    %v209 = vld [vmem:[%s1 + $0x5b8] sm:$0xff]
    %v210 = vld [vmem:[%s1 + $0x5c0] sm:$0xff]
    %v211 = vld [vmem:[%s1 + $0x5c8] sm:$0xff]
    %v212 = vld [vmem:[%s1 + $0x5d0] sm:$0xff]
    %v213 = vld [vmem:[%s1 + $0x5d8] sm:$0xff]
    %v214 = vld [vmem:[%s1 + $0x5e0] sm:$0xff]
    %v215 = vld [vmem:[%s1 + $0x5e8] sm:$0xff]
    %v216 = vld [vmem:[%s1 + $0x5f0] sm:$0xff]
    %v217 = vld [vmem:[%s1 + $0x5f8] sm:$0xff]
    %v218 = vld [vmem:[%s1 + $0x600] sm:$0xff]
    %v219 = vld [vmem:[%s1 + $0x608] sm:$0xff]
    %v220 = vld [vmem:[%s1 + $0x610] sm:$0xff]
    %v221 = vld [vmem:[%s1 + $0x618] sm:$0xff]
    %v222 = vld [vmem:[%s1 + $0x620] sm:$0xff]
    %v223 = vld [vmem:[%s1 + $0x628] sm:$0xff]
    %v224 = vld [vmem:[%s1 + $0x630] sm:$0xff]
    %v225 = vld [vmem:[%s1 + $0x638] sm:$0xff]
    %v226 = vld [vmem:[%s1 + $0x640] sm:$0xff]
    %v227 = vld [vmem:[%s1 + $0x648] sm:$0xff]
    %v228 = vld [vmem:[%s1 + $0x650] sm:$0xff]
    %v229 = vld [vmem:[%s1 + $0x658] sm:$0xff]
    %v230 = vld [vmem:[%s1 + $0x660] sm:$0xff]
    %v231 = vld [vmem:[%s1 + $0x668] sm:$0xff]
    %v232 = vld [vmem:[%s1 + $0x670] sm:$0xff]
    %v233 = vld [vmem:[%s1 + $0x678] sm:$0xff]
    %v234 = vld [vmem:[%s1 + $0x680] sm:$0xff]
    %v235 = vld [vmem:[%s1 + $0x688] sm:$0xff]
    %v236 = vld [vmem:[%s1 + $0x690] sm:$0xff]
    %v237 = vld [vmem:[%s1 + $0x698] sm:$0xff]
    %v238 = vld [vmem:[%s1 + $0x6a0] sm:$0xff]
    %v239 = vld [vmem:[%s1 + $0x6a8] sm:$0xff]
    %v240 = vld [vmem:[%s1 + $0x6b0] sm:$0xff]
    %v241 = vld [vmem:[%s1 + $0x6b8] sm:$0xff]
    %v242 = vld [vmem:[%s1 + $0x6c0] sm:$0xff]
    %v243 = vld [vmem:[%s1 + $0x6c8] sm:$0xff]
    %v244 = vld [vmem:[%s1 + $0x6d0] sm:$0xff]
    %v245 = vld [vmem:[%s1 + $0x6d8] sm:$0xff]
    %v246 = vld [vmem:[%s1 + $0x6e0] sm:$0xff]
    %v247 = vld [vmem:[%s1 + $0x6e8] sm:$0xff]
    %v248 = vld [vmem:[%s1 + $0x6f0] sm:$0xff]
    %v249 = vld [vmem:[%s1 + $0x6f8] sm:$0xff]
    %v250 = vld [vmem:[%s1 + $0x700] sm:$0xff]
    %v251 = vld [vmem:[%s1 + $0x708] sm:$0xff]
    %v252 = vld [vmem:[%s1 + $0x710] sm:$0xff]
    %v253 = vld [vmem:[%s1 + $0x718] sm:$0xff]
    %v254 = vld [vmem:[%s1 + $0x720] sm:$0xff]
    %v255 = vld [vmem:[%s1 + $0x728] sm:$0xff]
    %v256 = vld [vmem:[%s1 + $0x730] sm:$0xff]
    %v257 = vld [vmem:[%s1 + $0x738] sm:$0xff]
    %v258 = vld [vmem:[%s1 + $0x740] sm:$0xff]
    %v259 = vld [vmem:[%s1 + $0x748] sm:$0xff]
    %v260 = vld [vmem:[%s1 + $0x750] sm:$0xff]
    %v261 = vld [vmem:[%s1 + $0x758] sm:$0xff]
    %v262 = vld [vmem:[%s1 + $0x760] sm:$0xff]
    %v263 = vld [vmem:[%s1 + $0x768] sm:$0xff]
    %v264 = vld [vmem:[%s1 + $0x770] sm:$0xff]
    %v265 = vld [vmem:[%s1 + $0x778] sm:$0xff]
    %v266 = vld [vmem:[%s1 + $0x780] sm:$0xff]
    %v267 = vld [vmem:[%s1 + $0x788] sm:$0xff]
    %v268 = vld [vmem:[%s1 + $0x790] sm:$0xff]
    %v269 = vld [vmem:[%s1 + $0x798] sm:$0xff]
    %v270 = vld [vmem:[%s1 + $0x7a0] sm:$0xff]
    %v271 = vld [vmem:[%s1 + $0x7a8] sm:$0xff]
    %v272 = vld [vmem:[%s1 + $0x7b0] sm:$0xff]
    %v273 = vld [vmem:[%s1 + $0x7b8] sm:$0xff]
    %v274 = vld [vmem:[%s1 + $0x7c0] sm:$0xff]
    %v275 = vld [vmem:[%s1 + $0x7c8] sm:$0xff]
    %v276 = vld [vmem:[%s1 + $0x7d0] sm:$0xff]
    %v277 = vld [vmem:[%s1 + $0x7d8] sm:$0xff]
    %v278 = vld [vmem:[%s1 + $0x7e0] sm:$0xff]
    %v279 = vld [vmem:[%s1 + $0x7e8] sm:$0xff]
    %v280 = vld [vmem:[%s1 + $0x7f0] sm:$0xff]
    %v281 = vld [vmem:[%s1 + $0x7f8] sm:$0xff]
    %v282 = vld [vmem:[%s1 + $0x800] sm:$0xff]
    %v283 = vld [vmem:[%s1 + $0x808] sm:$0xff]
    %v284 = vld [vmem:[%s1 + $0x810] sm:$0xff]
    %v285 = vld [vmem:[%s1 + $0x818] sm:$0xff]
    %v286 = vld [vmem:[%s1 + $0x820] sm:$0xff]
    %v287 = vld [vmem:[%s1 + $0x828] sm:$0xff]
    %v288 = vld [vmem:[%s1 + $0x830] sm:$0xff]
    %v289 = vld [vmem:[%s1 + $0x838] sm:$0xff]
    %v290 = vld [vmem:[%s1 + $0x840] sm:$0xff]
    %v291 = vld [vmem:[%s1 + $0x848] sm:$0xff]
    %v292 = vld [vmem:[%s1 + $0x850] sm:$0xff]
    %v293 = vld [vmem:[%s1 + $0x858] sm:$0xff]
    %v294 = vld [vmem:[%s1 + $0x860] sm:$0xff]
    %v295 = vld [vmem:[%s1 + $0x868] sm:$0xff]
    %v296 = vld [vmem:[%s1 + $0x870] sm:$0xff]
    %v297 = vld [vmem:[%s1 + $0x878] sm:$0xff]
    %v298 = vld [vmem:[%s1 + $0x880] sm:$0xff]
    %v299 = vld [vmem:[%s1 + $0x888] sm:$0xff]
    %v300 = vld [vmem:[%s1 + $0x890] sm:$0xff]
    %v301 = vld [vmem:[%s1 + $0x898] sm:$0xff]
    %v302 = vld [vmem:[%s1 + $0x8a0] sm:$0xff]
    %v303 = vld [vmem:[%s1 + $0x8a8] sm:$0xff]
    %v304 = vld [vmem:[%s1 + $0x8b0] sm:$0xff]
    %v305 = vld [vmem:[%s1 + $0x8b8] sm:$0xff]
    %v306 = vld [vmem:[%s1 + $0x8c0] sm:$0xff]
    %v307 = vld [vmem:[%s1 + $0x8c8] sm:$0xff]
    %v308 = vld [vmem:[%s1 + $0x8d0] sm:$0xff]
    %v309 = vld [vmem:[%s1 + $0x8d8] sm:$0xff]
    %v310 = vld [vmem:[%s1 + $0x8e0] sm:$0xff]
    %v311 = vld [vmem:[%s1 + $0x8e8] sm:$0xff]
    %v312 = vld [vmem:[%s1 + $0x8f0] sm:$0xff]
    %v313 = vld [vmem:[%s1 + $0x8f8] sm:$0xff]
    %v314 = vld [vmem:[%s1 + $0x900] sm:$0xff]
    %v315 = vld [vmem:[%s1 + $0x908] sm:$0xff]
    %v316 = vld [vmem:[%s1 + $0x910] sm:$0xff]
    %v317 = vld [vmem:[%s1 + $0x918] sm:$0xff]
    %v318 = vld [vmem:[%s1 + $0x920] sm:$0xff]
    %v319 = vld [vmem:[%s1 + $0x928] sm:$0xff]
    %v320 = vld [vmem:[%s1 + $0x930] sm:$0xff]
    %v321 = vld [vmem:[%s1 + $0x938] sm:$0xff]
    %v322 = vld [vmem:[%s1 + $0x940] sm:$0xff]
    %v323 = vld [vmem:[%s1 + $0x948] sm:$0xff]
    %v324 = vld [vmem:[%s1 + $0x950] sm:$0xff]
    %v325 = vld [vmem:[%s1 + $0x958] sm:$0xff]
    %v326 = vld [vmem:[%s1 + $0x960] sm:$0xff]
    %v327 = vld [vmem:[%s1 + $0x968] sm:$0xff]
    %v328 = vld [vmem:[%s1 + $0x970] sm:$0xff]
    %v329 = vld [vmem:[%s1 + $0x978] sm:$0xff]
    %v330 = vld [vmem:[%s1 + $0x980] sm:$0xff]
    %v331 = vld [vmem:[%s1 + $0x988] sm:$0xff]
    %v332 = vld [vmem:[%s1 + $0x990] sm:$0xff]
    %v333 = vld [vmem:[%s1 + $0x998] sm:$0xff]
    %v334 = vld [vmem:[%s1 + $0x9a0] sm:$0xff]
    %v335 = vld [vmem:[%s1 + $0x9a8] sm:$0xff]
    %v336 = vld [vmem:[%s1 + $0x9b0] sm:$0xff]
    %v337 = vld [vmem:[%s1 + $0x9b8] sm:$0xff]
    %v338 = vld [vmem:[%s1 + $0x9c0] sm:$0xff]
    %v339 = vld [vmem:[%s1 + $0x9c8] sm:$0xff]
    %v340 = vld [vmem:[%s1 + $0x9d0] sm:$0xff]
    %v341 = vld [vmem:[%s1 + $0x9d8] sm:$0xff]
    %v342 = vld [vmem:[%s1 + $0x9e0] sm:$0xff]
    %v343 = vld [vmem:[%s1 + $0x9e8] sm:$0xff]
    %v344 = vld [vmem:[%s1 + $0x9f0] sm:$0xff]
    %v345 = vld [vmem:[%s1 + $0x9f8] sm:$0xff]
    %v346 = vld [vmem:[%s1 + $0xa00] sm:$0xff]
    %v347 = vld [vmem:[%s1 + $0xa08] sm:$0xff]
    %v348 = vld [vmem:[%s1 + $0xa10] sm:$0xff]
    %v349 = vld [vmem:[%s1 + $0xa18] sm:$0xff]
    %v350 = vld [vmem:[%s1 + $0xa20] sm:$0xff]
    %v351 = vld [vmem:[%s1 + $0xa28] sm:$0xff]
    %v352 = vld [vmem:[%s1 + $0xa30] sm:$0xff]
    %v353 = vld [vmem:[%s1 + $0xa38] sm:$0xff]
    %v354 = vld [vmem:[%s1 + $0xa40] sm:$0xff]
    %v355 = vld [vmem:[%s1 + $0xa48] sm:$0xff]
    %v356 = vld [vmem:[%s1 + $0xa50] sm:$0xff]
    %v357 = vld [vmem:[%s1 + $0xa58] sm:$0xff]
    %v358 = vld [vmem:[%s1 + $0xa60] sm:$0xff]
    %v359 = vld [vmem:[%s1 + $0xa68] sm:$0xff]
    %v360 = vld [vmem:[%s1 + $0xa70] sm:$0xff]
    %v361 = vld [vmem:[%s1 + $0xa78] sm:$0xff]
    %v362 = vld [vmem:[%s1 + $0xa80] sm:$0xff]
    %v363 = vld [vmem:[%s1 + $0xa88] sm:$0xff]
    %v364 = vld [vmem:[%s1 + $0xa90] sm:$0xff]
    %v365 = vld [vmem:[%s1 + $0xa98] sm:$0xff]
    %v366 = vld [vmem:[%s1 + $0xaa0] sm:$0xff]
    %v367 = vld [vmem:[%s1 + $0xaa8] sm:$0xff]
    %v368 = vld [vmem:[%s1 + $0xab0] sm:$0xff]
    %v369 = vld [vmem:[%s1 + $0xab8] sm:$0xff]
    %v370 = vld [vmem:[%s1 + $0xac0] sm:$0xff]
    %v371 = vld [vmem:[%s1 + $0xac8] sm:$0xff]
    %v372 = vld [vmem:[%s1 + $0xad0] sm:$0xff]
    %v373 = vld [vmem:[%s1 + $0xad8] sm:$0xff]
    %v374 = vld [vmem:[%s1 + $0xae0] sm:$0xff]
    %v375 = vld [vmem:[%s1 + $0xae8] sm:$0xff]
    %v376 = vld [vmem:[%s1 + $0xaf0] sm:$0xff]
    %v377 = vld [vmem:[%s1 + $0xaf8] sm:$0xff]
    %v378 = vld [vmem:[%s1 + $0xb00] sm:$0xff]
    %v379 = vld [vmem:[%s1 + $0xb08] sm:$0xff]
    %v380 = vld [vmem:[%s1 + $0xb10] sm:$0xff]
    %v381 = vld [vmem:[%s1 + $0xb18] sm:$0xff]
    %v382 = vld [vmem:[%s1 + $0xb20] sm:$0xff]
    %v383 = vld [vmem:[%s1 + $0xb28] sm:$0xff]
    %v384 = vld [vmem:[%s1 + $0xb30] sm:$0xff]
    %v385 = vld [vmem:[%s1 + $0xb38] sm:$0xff]
    %v386 = vld [vmem:[%s1 + $0xb40] sm:$0xff]
    %v387 = vld [vmem:[%s1 + $0xb48] sm:$0xff]
    %v388 = vld [vmem:[%s1 + $0xb50] sm:$0xff]
    %v389 = vld [vmem:[%s1 + $0xb58] sm:$0xff]
    %v390 = vld [vmem:[%s1 + $0xb60] sm:$0xff]
    %v391 = vld [vmem:[%s1 + $0xb68] sm:$0xff]
    %v392 = vld [vmem:[%s1 + $0xb70] sm:$0xff]
    %v393 = vld [vmem:[%s1 + $0xb78] sm:$0xff]
    %v394 = vld [vmem:[%s1 + $0xb80] sm:$0xff]
    %v395 = vld [vmem:[%s1 + $0xb88] sm:$0xff]
    %v396 = vld [vmem:[%s1 + $0xb90] sm:$0xff]
    %v397 = vld [vmem:[%s1 + $0xb98] sm:$0xff]
    %v398 = vld [vmem:[%s1 + $0xba0] sm:$0xff]
    %v399 = vld [vmem:[%s1 + $0xba8] sm:$0xff]
    %v400 = vld [vmem:[%s1 + $0xbb0] sm:$0xff]
    %v401 = vld [vmem:[%s1 + $0xbb8] sm:$0xff]
    %v402 = vld [vmem:[%s1 + $0xbc0] sm:$0xff]
    %v403 = vld [vmem:[%s1 + $0xbc8] sm:$0xff]
    %v404 = vld [vmem:[%s1 + $0xbd0] sm:$0xff]
    %v405 = vld [vmem:[%s1 + $0xbd8] sm:$0xff]
    %v406 = vld [vmem:[%s1 + $0xbe0] sm:$0xff]
    %v407 = vld [vmem:[%s1 + $0xbe8] sm:$0xff]
    %v408 = vld [vmem:[%s1 + $0xbf0] sm:$0xff]
    %v409 = vld [vmem:[%s1 + $0xbf8] sm:$0xff]
    %v410 = vld [vmem:[%s1 + $0xc00] sm:$0xff]
    %v411 = vld [vmem:[%s1 + $0xc08] sm:$0xff]
    %v412 = vld [vmem:[%s1 + $0xc10] sm:$0xff]
    %v413 = vld [vmem:[%s1 + $0xc18] sm:$0xff]
    %v414 = vld [vmem:[%s1 + $0xc20] sm:$0xff]
    %v415 = vld [vmem:[%s1 + $0xc28] sm:$0xff]
    %v416 = vld [vmem:[%s1 + $0xc30] sm:$0xff]
    %v417 = vld [vmem:[%s1 + $0xc38] sm:$0xff]
    %v418 = vld [vmem:[%s0] sm:$0xff]
    %v419 = vld [vmem:[%s0 + $0x8] sm:$0xff]
    %v420 = vld [vmem:[%s0 + $0x10] sm:$0xff]
    %v421 = vld [vmem:[%s0 + $0x18] sm:$0x3]
    %v426 = vcombine.high %v418, %v418
    %v428 = vunpack.c.l.s4 1983009808
    %v429 = vunpack.c.0.s8 %v428
    %v430 = vlaneseq
    %v431 = vshrl.u32 %v430, 7
    %v432 = vsub.s32 %v429, %v431
    %v433 = vrot.slane %v418, %v432
    %v435 = vunpack.c.l.s4 1983009808
    %v436 = vunpack.c.0.s8 %v435
    %v437 = vlaneseq
    %v438 = vshrl.u32 %v437, 7
    %v439 = vsub.s32 %v436, %v438
    %v440 = vrot.slane %v426, %v439
    %v441 = vcombine.high %v433, %v433
    %v442 = vcombine.high %v440, %v440
    %v443 = vcombine.high %v419, %v419
    %v445 = vunpack.c.l.s4 1983009808
    %v446 = vunpack.c.0.s8 %v445
    %v447 = vlaneseq
    %v448 = vshrl.u32 %v447, 7
    %v449 = vsub.s32 %v446, %v448
    %v450 = vrot.slane %v419, %v449
    %v452 = vunpack.c.l.s4 1983009808
    %v453 = vunpack.c.0.s8 %v452
    %v454 = vlaneseq
    %v455 = vshrl.u32 %v454, 7
    %v456 = vsub.s32 %v453, %v455
    %v457 = vrot.slane %v443, %v456
    %v458 = vcombine.high %v450, %v450
    %v459 = vcombine.high %v457, %v457
    %v460 = vcombine.high %v420, %v420
    %v462 = vunpack.c.l.s4 1983009808
    %v463 = vunpack.c.0.s8 %v462
    %v464 = vlaneseq
    %v465 = vshrl.u32 %v464, 7
    %v466 = vsub.s32 %v463, %v465
    %v467 = vrot.slane %v420, %v466
    %v469 = vunpack.c.l.s4 1983009808
    %v470 = vunpack.c.0.s8 %v469
    %v471 = vlaneseq
    %v472 = vshrl.u32 %v471, 7
    %v473 = vsub.s32 %v470, %v472
    %v474 = vrot.slane %v460, %v473
    %v475 = vcombine.high %v467, %v467
    %v476 = vcombine.high %v474, %v474
    %v478 = vunpack.c.l.s4 1983009808
    %v479 = vunpack.c.0.s8 %v478
    %v480 = vlaneseq
    %v481 = vshrl.u32 %v480, 7
    %v482 = vsub.s32 %v479, %v481
    %v483 = vrot.slane %v421, %v482
    %v497 = vpack.c.bf16 %v433, %v433
    %v498 = vpack.c.bf16 %v441, %v441
    %v499 = vpack.c.bf16 %v440, %v440
    %v500 = vpack.c.bf16 %v442, %v442
    %v501 = vpack.c.bf16 %v450, %v450
    %v502 = vpack.c.bf16 %v458, %v458
    %v503 = vpack.c.bf16 %v457, %v457
    %v504 = vpack.c.bf16 %v459, %v459
    %v505 = vpack.c.bf16 %v467, %v467
    %v506 = vpack.c.bf16 %v475, %v475
    %v507 = vpack.c.bf16 %v474, %v474
    %v508 = vpack.c.bf16 %v476, %v476
    %v509 = vpack.c.bf16 %v483, %v483
    %v510 = vld [vmem:[%s2] sm:$0xf]
    %v512 = vlaneseq
    %v513 = vshrl.u32 %v512, 7
    %v514 = vsub.s32 0, %v513
    %v515 = vrot.slane %v510, %v514
    %v516 = vlaneseq
    %v517 = vshrl.u32 %v516, 7
    %v518 = vsub.s32 1, %v517
    %v519 = vrot.slane %v510, %v518
    %v520 = vlaneseq
    %v521 = vshrl.u32 %v520, 7
    %v522 = vsub.s32 2, %v521
    %v523 = vrot.slane %v510, %v522
    %v524 = vlaneseq
    %v525 = vshrl.u32 %v524, 7
    %v526 = vsub.s32 3, %v525
    %v527 = vrot.slane %v510, %v526
    %v924 = vunpack.c.l.b16 %v26
    %v925 = vunpack.c.h.b16 %v26
    %v926 = vunpack.c.l.b16 %v27
    %v927 = vunpack.c.h.b16 %v27
    %v928 = vunpack.c.l.b16 %v28
    %v929 = vunpack.c.h.b16 %v28
    %v930 = vunpack.c.l.b16 %v29
    %v931 = vunpack.c.h.b16 %v29
    %v932 = vunpack.c.l.b16 %v30
    %v933 = vunpack.c.h.b16 %v30
    %v934 = vunpack.c.l.b16 %v31
    %v935 = vunpack.c.h.b16 %v31
    %v936 = vunpack.c.l.b16 %v32
    %v937 = vunpack.c.h.b16 %v32
    %v938 = vunpack.c.l.b16 %v33
    %v939 = vunpack.c.h.b16 %v33
    %v940 = vunpack.c.l.b16 %v34
    %v941 = vunpack.c.h.b16 %v34
    %v942 = vunpack.c.l.b16 %v35
    %v943 = vunpack.c.h.b16 %v35
    %v944 = vunpack.c.l.b16 %v36
    %v945 = vunpack.c.h.b16 %v36
    %v946 = vunpack.c.l.b16 %v37
    %v947 = vunpack.c.h.b16 %v37
    %v948 = vunpack.c.l.b16 %v38
    %v949 = vunpack.c.h.b16 %v38
    %v950 = vunpack.c.l.b16 %v39
    %v951 = vunpack.c.h.b16 %v39
    %v952 = vunpack.c.l.b16 %v40
    %v953 = vunpack.c.h.b16 %v40
    %v954 = vunpack.c.l.b16 %v41
    %v955 = vunpack.c.h.b16 %v41
    %v956 = vunpack.c.l.b16 %v42
    %v957 = vunpack.c.h.b16 %v42
    %v958 = vunpack.c.l.b16 %v43
    %v959 = vunpack.c.h.b16 %v43
    %v960 = vunpack.c.l.b16 %v44
    %v961 = vunpack.c.h.b16 %v44
    %v962 = vunpack.c.l.b16 %v45
    %v963 = vunpack.c.h.b16 %v45
    %v964 = vunpack.c.l.b16 %v46
    %v965 = vunpack.c.h.b16 %v46
    %v966 = vunpack.c.l.b16 %v47
    %v967 = vunpack.c.h.b16 %v47
    %v968 = vunpack.c.l.b16 %v48
    %v969 = vunpack.c.h.b16 %v48
    %v970 = vunpack.c.l.b16 %v49
    %v971 = vunpack.c.h.b16 %v49
    %v972 = vunpack.c.l.b16 %v50
    %v973 = vunpack.c.h.b16 %v50
    %v974 = vunpack.c.l.b16 %v51
    %v975 = vunpack.c.h.b16 %v51
    %v976 = vunpack.c.l.b16 %v52
    %v977 = vunpack.c.h.b16 %v52
    %v978 = vunpack.c.l.b16 %v53
    %v979 = vunpack.c.h.b16 %v53
    %v980 = vunpack.c.l.b16 %v54
    %v981 = vunpack.c.h.b16 %v54
    %v982 = vunpack.c.l.b16 %v55
    %v983 = vunpack.c.h.b16 %v55
    %v984 = vunpack.c.l.b16 %v56
    %v985 = vunpack.c.h.b16 %v56
    %v986 = vunpack.c.l.b16 %v57
    %v987 = vunpack.c.h.b16 %v57
    %v988 = vunpack.c.l.b16 %v58
    %v989 = vunpack.c.h.b16 %v58
    %v990 = vunpack.c.l.b16 %v59
    %v991 = vunpack.c.h.b16 %v59
    %v992 = vunpack.c.l.b16 %v60
    %v993 = vunpack.c.h.b16 %v60
    %v994 = vunpack.c.l.b16 %v61
    %v995 = vunpack.c.h.b16 %v61
    %v996 = vunpack.c.l.b16 %v62
    %v997 = vunpack.c.h.b16 %v62
    %v998 = vunpack.c.l.b16 %v63
    %v999 = vunpack.c.h.b16 %v63
    %v1000 = vunpack.c.l.b16 %v64
    %v1001 = vunpack.c.h.b16 %v64
    %v1002 = vunpack.c.l.b16 %v65
    %v1003 = vunpack.c.h.b16 %v65
    %v1004 = vunpack.c.l.b16 %v66
    %v1005 = vunpack.c.h.b16 %v66
    %v1006 = vunpack.c.l.b16 %v67
    %v1007 = vunpack.c.h.b16 %v67
    %v1008 = vunpack.c.l.b16 %v68
    %v1009 = vunpack.c.h.b16 %v68
    %v1010 = vunpack.c.l.b16 %v69
    %v1011 = vunpack.c.h.b16 %v69
    %v1012 = vunpack.c.l.b16 %v70
    %v1013 = vunpack.c.h.b16 %v70
    %v1014 = vunpack.c.l.b16 %v71
    %v1015 = vunpack.c.h.b16 %v71
    %v1016 = vunpack.c.l.b16 %v72
    %v1017 = vunpack.c.h.b16 %v72
    %v1018 = vunpack.c.l.b16 %v73
    %v1019 = vunpack.c.h.b16 %v73
    %v1020 = vunpack.c.l.b16 %v74
    %v1021 = vunpack.c.h.b16 %v74
    %v1022 = vunpack.c.l.b16 %v75
    %v1023 = vunpack.c.h.b16 %v75
    %v1024 = vunpack.c.l.b16 %v76
    %v1025 = vunpack.c.h.b16 %v76
    %v1026 = vunpack.c.l.b16 %v77
    %v1027 = vunpack.c.h.b16 %v77
    %v1028 = vunpack.c.l.b16 %v78
    %v1029 = vunpack.c.h.b16 %v78
    %v1030 = vunpack.c.l.b16 %v79
    %v1031 = vunpack.c.h.b16 %v79
    %v1032 = vunpack.c.l.b16 %v80
    %v1033 = vunpack.c.h.b16 %v80
    %v1034 = vunpack.c.l.b16 %v81
    %v1035 = vunpack.c.h.b16 %v81
    %v1036 = vunpack.c.l.b16 %v82
    %v1037 = vunpack.c.h.b16 %v82
    %v1038 = vunpack.c.l.b16 %v83
    %v1039 = vunpack.c.h.b16 %v83
    %v1040 = vunpack.c.l.b16 %v84
    %v1041 = vunpack.c.h.b16 %v84
    %v1042 = vunpack.c.l.b16 %v85
    %v1043 = vunpack.c.h.b16 %v85
    %v1044 = vunpack.c.l.b16 %v86
    %v1045 = vunpack.c.h.b16 %v86
    %v1046 = vunpack.c.l.b16 %v87
    %v1047 = vunpack.c.h.b16 %v87
    %v1048 = vunpack.c.l.b16 %v88
    %v1049 = vunpack.c.h.b16 %v88
    %v1050 = vunpack.c.l.b16 %v89
    %v1051 = vunpack.c.h.b16 %v89
    %v1052 = vunpack.c.l.b16 %v90
    %v1053 = vunpack.c.h.b16 %v90
    %v1054 = vunpack.c.l.b16 %v91
    %v1055 = vunpack.c.h.b16 %v91
    %v1056 = vunpack.c.l.b16 %v92
    %v1057 = vunpack.c.h.b16 %v92
    %v1058 = vunpack.c.l.b16 %v93
    %v1059 = vunpack.c.h.b16 %v93
    %v1060 = vunpack.c.l.b16 %v94
    %v1061 = vunpack.c.h.b16 %v94
    %v1062 = vunpack.c.l.b16 %v95
    %v1063 = vunpack.c.h.b16 %v95
    %v1064 = vunpack.c.l.b16 %v96
    %v1065 = vunpack.c.h.b16 %v96
    %v1066 = vunpack.c.l.b16 %v97
    %v1067 = vunpack.c.h.b16 %v97
    %v1068 = vunpack.c.l.b16 %v98
    %v1069 = vunpack.c.h.b16 %v98
    %v1070 = vunpack.c.l.b16 %v99
    %v1071 = vunpack.c.h.b16 %v99
    %v1072 = vunpack.c.l.b16 %v100
    %v1073 = vunpack.c.h.b16 %v100
    %v1074 = vunpack.c.l.b16 %v101
    %v1075 = vunpack.c.h.b16 %v101
    %v1076 = vunpack.c.l.b16 %v102
    %v1077 = vunpack.c.h.b16 %v102
    %v1078 = vunpack.c.l.b16 %v103
    %v1079 = vunpack.c.h.b16 %v103
    %v1080 = vunpack.c.l.b16 %v104
    %v1081 = vunpack.c.h.b16 %v104
    %v1082 = vunpack.c.l.b16 %v105
    %v1083 = vunpack.c.h.b16 %v105
    %v1084 = vunpack.c.l.b16 %v106
    %v1085 = vunpack.c.h.b16 %v106
    %v1086 = vunpack.c.l.b16 %v107
    %v1087 = vunpack.c.h.b16 %v107
    %v1088 = vunpack.c.l.b16 %v108
    %v1089 = vunpack.c.h.b16 %v108
    %v1090 = vunpack.c.l.b16 %v109
    %v1091 = vunpack.c.h.b16 %v109
    %v1092 = vunpack.c.l.b16 %v110
    %v1093 = vunpack.c.h.b16 %v110
    %v1094 = vunpack.c.l.b16 %v111
    %v1095 = vunpack.c.h.b16 %v111
    %v1096 = vunpack.c.l.b16 %v112
    %v1097 = vunpack.c.h.b16 %v112
    %v1098 = vunpack.c.l.b16 %v113
    %v1099 = vunpack.c.h.b16 %v113
    %v1100 = vunpack.c.l.b16 %v114
    %v1101 = vunpack.c.h.b16 %v114
    %v1102 = vunpack.c.l.b16 %v115
    %v1103 = vunpack.c.h.b16 %v115
    %v1104 = vunpack.c.l.b16 %v116
    %v1105 = vunpack.c.h.b16 %v116
    %v1106 = vunpack.c.l.b16 %v117
    %v1107 = vunpack.c.h.b16 %v117
    %v1108 = vunpack.c.l.b16 %v118
    %v1109 = vunpack.c.h.b16 %v118
    %v1110 = vunpack.c.l.b16 %v119
    %v1111 = vunpack.c.h.b16 %v119
    %v1112 = vunpack.c.l.b16 %v120
    %v1113 = vunpack.c.h.b16 %v120
    %v1114 = vunpack.c.l.b16 %v121
    %v1115 = vunpack.c.h.b16 %v121
    %v1116 = vunpack.c.l.b16 %v122
    %v1117 = vunpack.c.h.b16 %v122
    %v1118 = vunpack.c.l.b16 %v123
    %v1119 = vunpack.c.h.b16 %v123
    %v1120 = vunpack.c.l.b16 %v124
    %v1121 = vunpack.c.h.b16 %v124
    %v1122 = vunpack.c.l.b16 %v125
    %v1123 = vunpack.c.h.b16 %v125
    %v1124 = vunpack.c.l.b16 %v126
    %v1125 = vunpack.c.h.b16 %v126
    %v1126 = vunpack.c.l.b16 %v127
    %v1127 = vunpack.c.h.b16 %v127
    %v1128 = vunpack.c.l.b16 %v128
    %v1129 = vunpack.c.h.b16 %v128
    %v1130 = vunpack.c.l.b16 %v129
    %v1131 = vunpack.c.h.b16 %v129
    %v1132 = vunpack.c.l.b16 %v130
    %v1133 = vunpack.c.h.b16 %v130
    %v1134 = vunpack.c.l.b16 %v131
    %v1135 = vunpack.c.h.b16 %v131
    %v1136 = vunpack.c.l.b16 %v132
    %v1137 = vunpack.c.h.b16 %v132
    %v1138 = vunpack.c.l.b16 %v133
    %v1139 = vunpack.c.h.b16 %v133
    %v1140 = vunpack.c.l.b16 %v134
    %v1141 = vunpack.c.h.b16 %v134
    %v1142 = vunpack.c.l.b16 %v135
    %v1143 = vunpack.c.h.b16 %v135
    %v1144 = vunpack.c.l.b16 %v136
    %v1145 = vunpack.c.h.b16 %v136
    %v1146 = vunpack.c.l.b16 %v137
    %v1147 = vunpack.c.h.b16 %v137
    %v1148 = vunpack.c.l.b16 %v138
    %v1149 = vunpack.c.h.b16 %v138
    %v1150 = vunpack.c.l.b16 %v139
    %v1151 = vunpack.c.h.b16 %v139
    %v1152 = vunpack.c.l.b16 %v140
    %v1153 = vunpack.c.h.b16 %v140
    %v1154 = vunpack.c.l.b16 %v141
    %v1155 = vunpack.c.h.b16 %v141
    %v1156 = vunpack.c.l.b16 %v142
    %v1157 = vunpack.c.h.b16 %v142
    %v1158 = vunpack.c.l.b16 %v143
    %v1159 = vunpack.c.h.b16 %v143
    %v1160 = vunpack.c.l.b16 %v144
    %v1161 = vunpack.c.h.b16 %v144
    %v1162 = vunpack.c.l.b16 %v145
    %v1163 = vunpack.c.h.b16 %v145
    %v1164 = vunpack.c.l.b16 %v146
    %v1165 = vunpack.c.h.b16 %v146
    %v1166 = vunpack.c.l.b16 %v147
    %v1167 = vunpack.c.h.b16 %v147
    %v1168 = vunpack.c.l.b16 %v148
    %v1169 = vunpack.c.h.b16 %v148
    %v1170 = vunpack.c.l.b16 %v149
    %v1171 = vunpack.c.h.b16 %v149
    %v1172 = vunpack.c.l.b16 %v150
    %v1173 = vunpack.c.h.b16 %v150
    %v1174 = vunpack.c.l.b16 %v151
    %v1175 = vunpack.c.h.b16 %v151
    %v1176 = vunpack.c.l.b16 %v152
    %v1177 = vunpack.c.h.b16 %v152
    %v1178 = vunpack.c.l.b16 %v153
    %v1179 = vunpack.c.h.b16 %v153
    %v1180 = vunpack.c.l.b16 %v154
    %v1181 = vunpack.c.h.b16 %v154
    %v1182 = vunpack.c.l.b16 %v155
    %v1183 = vunpack.c.h.b16 %v155
    %v1184 = vunpack.c.l.b16 %v156
    %v1185 = vunpack.c.h.b16 %v156
    %v1186 = vunpack.c.l.b16 %v157
    %v1187 = vunpack.c.h.b16 %v157
    %v1188 = vunpack.c.l.b16 %v158
    %v1189 = vunpack.c.h.b16 %v158
    %v1190 = vunpack.c.l.b16 %v159
    %v1191 = vunpack.c.h.b16 %v159
    %v1192 = vunpack.c.l.b16 %v160
    %v1193 = vunpack.c.h.b16 %v160
    %v1194 = vunpack.c.l.b16 %v161
    %v1195 = vunpack.c.h.b16 %v161
    %v1196 = vunpack.c.l.b16 %v162
    %v1197 = vunpack.c.h.b16 %v162
    %v1198 = vunpack.c.l.b16 %v163
    %v1199 = vunpack.c.h.b16 %v163
    %v1200 = vunpack.c.l.b16 %v164
    %v1201 = vunpack.c.h.b16 %v164
    %v1202 = vunpack.c.l.b16 %v165
    %v1203 = vunpack.c.h.b16 %v165
    %v1204 = vunpack.c.l.b16 %v166
    %v1205 = vunpack.c.h.b16 %v166
    %v1206 = vunpack.c.l.b16 %v167
    %v1207 = vunpack.c.h.b16 %v167
    %v1208 = vunpack.c.l.b16 %v168
    %v1209 = vunpack.c.h.b16 %v168
    %v1210 = vunpack.c.l.b16 %v169
    %v1211 = vunpack.c.h.b16 %v169
    %v1212 = vunpack.c.l.b16 %v170
    %v1213 = vunpack.c.h.b16 %v170
    %v1214 = vunpack.c.l.b16 %v171
    %v1215 = vunpack.c.h.b16 %v171
    %v1216 = vunpack.c.l.b16 %v172
    %v1217 = vunpack.c.h.b16 %v172
    %v1218 = vunpack.c.l.b16 %v173
    %v1219 = vunpack.c.h.b16 %v173
    %v1220 = vunpack.c.l.b16 %v174
    %v1221 = vunpack.c.h.b16 %v174
    %v1222 = vunpack.c.l.b16 %v175
    %v1223 = vunpack.c.h.b16 %v175
    %v1224 = vunpack.c.l.b16 %v176
    %v1225 = vunpack.c.h.b16 %v176
    %v1226 = vunpack.c.l.b16 %v177
    %v1227 = vunpack.c.h.b16 %v177
    %v1228 = vunpack.c.l.b16 %v178
    %v1229 = vunpack.c.h.b16 %v178
    %v1230 = vunpack.c.l.b16 %v179
    %v1231 = vunpack.c.h.b16 %v179
    %v1232 = vunpack.c.l.b16 %v180
    %v1233 = vunpack.c.h.b16 %v180
    %v1234 = vunpack.c.l.b16 %v181
    %v1235 = vunpack.c.h.b16 %v181
    %v1236 = vunpack.c.l.b16 %v182
    %v1237 = vunpack.c.h.b16 %v182
    %v1238 = vunpack.c.l.b16 %v183
    %v1239 = vunpack.c.h.b16 %v183
    %v1240 = vunpack.c.l.b16 %v184
    %v1241 = vunpack.c.h.b16 %v184
    %v1242 = vunpack.c.l.b16 %v185
    %v1243 = vunpack.c.h.b16 %v185
    %v1244 = vunpack.c.l.b16 %v186
    %v1245 = vunpack.c.h.b16 %v186
    %v1246 = vunpack.c.l.b16 %v187
    %v1247 = vunpack.c.h.b16 %v187
    %v1248 = vunpack.c.l.b16 %v188
    %v1249 = vunpack.c.h.b16 %v188
    %v1250 = vunpack.c.l.b16 %v189
    %v1251 = vunpack.c.h.b16 %v189
    %v1252 = vunpack.c.l.b16 %v190
    %v1253 = vunpack.c.h.b16 %v190
    %v1254 = vunpack.c.l.b16 %v191
    %v1255 = vunpack.c.h.b16 %v191
    %v1256 = vunpack.c.l.b16 %v192
    %v1257 = vunpack.c.h.b16 %v192
    %v1258 = vunpack.c.l.b16 %v193
    %v1259 = vunpack.c.h.b16 %v193
    %v1260 = vunpack.c.l.b16 %v194
    %v1261 = vunpack.c.h.b16 %v194
    %v1262 = vunpack.c.l.b16 %v195
    %v1263 = vunpack.c.h.b16 %v195
    %v1264 = vunpack.c.l.b16 %v196
    %v1265 = vunpack.c.h.b16 %v196
    %v1266 = vunpack.c.l.b16 %v197
    %v1267 = vunpack.c.h.b16 %v197
    %v1268 = vunpack.c.l.b16 %v198
    %v1269 = vunpack.c.h.b16 %v198
    %v1270 = vunpack.c.l.b16 %v199
    %v1271 = vunpack.c.h.b16 %v199
    %v1272 = vunpack.c.l.b16 %v200
    %v1273 = vunpack.c.h.b16 %v200
    %v1274 = vunpack.c.l.b16 %v201
    %v1275 = vunpack.c.h.b16 %v201
    %v1276 = vunpack.c.l.b16 %v202
    %v1277 = vunpack.c.h.b16 %v202
    %v1278 = vunpack.c.l.b16 %v203
    %v1279 = vunpack.c.h.b16 %v203
    %v1280 = vunpack.c.l.b16 %v204
    %v1281 = vunpack.c.h.b16 %v204
    %v1282 = vunpack.c.l.b16 %v205
    %v1283 = vunpack.c.h.b16 %v205
    %v1284 = vunpack.c.l.b16 %v206
    %v1285 = vunpack.c.h.b16 %v206
    %v1286 = vunpack.c.l.b16 %v207
    %v1287 = vunpack.c.h.b16 %v207
    %v1288 = vunpack.c.l.b16 %v208
    %v1289 = vunpack.c.h.b16 %v208
    %v1290 = vunpack.c.l.b16 %v209
    %v1291 = vunpack.c.h.b16 %v209
    %v1292 = vunpack.c.l.b16 %v210
    %v1293 = vunpack.c.h.b16 %v210
    %v1294 = vunpack.c.l.b16 %v211
    %v1295 = vunpack.c.h.b16 %v211
    %v1296 = vunpack.c.l.b16 %v212
    %v1297 = vunpack.c.h.b16 %v212
    %v1298 = vunpack.c.l.b16 %v213
    %v1299 = vunpack.c.h.b16 %v213
    %v1300 = vunpack.c.l.b16 %v214
    %v1301 = vunpack.c.h.b16 %v214
    %v1302 = vunpack.c.l.b16 %v215
    %v1303 = vunpack.c.h.b16 %v215
    %v1304 = vunpack.c.l.b16 %v216
    %v1305 = vunpack.c.h.b16 %v216
    %v1306 = vunpack.c.l.b16 %v217
    %v1307 = vunpack.c.h.b16 %v217
    %v1308 = vunpack.c.l.b16 %v218
    %v1309 = vunpack.c.h.b16 %v218
    %v1310 = vunpack.c.l.b16 %v219
    %v1311 = vunpack.c.h.b16 %v219
    %v1312 = vunpack.c.l.b16 %v220
    %v1313 = vunpack.c.h.b16 %v220
    %v1314 = vunpack.c.l.b16 %v221
    %v1315 = vunpack.c.h.b16 %v221
    %v1316 = vunpack.c.l.b16 %v222
    %v1317 = vunpack.c.h.b16 %v222
    %v1318 = vunpack.c.l.b16 %v223
    %v1319 = vunpack.c.h.b16 %v223
    %v1320 = vunpack.c.l.b16 %v224
    %v1321 = vunpack.c.h.b16 %v224
    %v1322 = vunpack.c.l.b16 %v225
    %v1323 = vunpack.c.h.b16 %v225
    %v1324 = vunpack.c.l.b16 %v226
    %v1325 = vunpack.c.h.b16 %v226
    %v1326 = vunpack.c.l.b16 %v227
    %v1327 = vunpack.c.h.b16 %v227
    %v1328 = vunpack.c.l.b16 %v228
    %v1329 = vunpack.c.h.b16 %v228
    %v1330 = vunpack.c.l.b16 %v229
    %v1331 = vunpack.c.h.b16 %v229
    %v1332 = vunpack.c.l.b16 %v230
    %v1333 = vunpack.c.h.b16 %v230
    %v1334 = vunpack.c.l.b16 %v231
    %v1335 = vunpack.c.h.b16 %v231
    %v1336 = vunpack.c.l.b16 %v232
    %v1337 = vunpack.c.h.b16 %v232
    %v1338 = vunpack.c.l.b16 %v233
    %v1339 = vunpack.c.h.b16 %v233
    %v1340 = vunpack.c.l.b16 %v234
    %v1341 = vunpack.c.h.b16 %v234
    %v1342 = vunpack.c.l.b16 %v235
    %v1343 = vunpack.c.h.b16 %v235
    %v1344 = vunpack.c.l.b16 %v236
    %v1345 = vunpack.c.h.b16 %v236
    %v1346 = vunpack.c.l.b16 %v237
    %v1347 = vunpack.c.h.b16 %v237
    %v1348 = vunpack.c.l.b16 %v238
    %v1349 = vunpack.c.h.b16 %v238
    %v1350 = vunpack.c.l.b16 %v239
    %v1351 = vunpack.c.h.b16 %v239
    %v1352 = vunpack.c.l.b16 %v240
    %v1353 = vunpack.c.h.b16 %v240
    %v1354 = vunpack.c.l.b16 %v241
    %v1355 = vunpack.c.h.b16 %v241
    %v1356 = vunpack.c.l.b16 %v242
    %v1357 = vunpack.c.h.b16 %v242
    %v1358 = vunpack.c.l.b16 %v243
    %v1359 = vunpack.c.h.b16 %v243
    %v1360 = vunpack.c.l.b16 %v244
    %v1361 = vunpack.c.h.b16 %v244
    %v1362 = vunpack.c.l.b16 %v245
    %v1363 = vunpack.c.h.b16 %v245
    %v1364 = vunpack.c.l.b16 %v246
    %v1365 = vunpack.c.h.b16 %v246
    %v1366 = vunpack.c.l.b16 %v247
    %v1367 = vunpack.c.h.b16 %v247
    %v1368 = vunpack.c.l.b16 %v248
    %v1369 = vunpack.c.h.b16 %v248
    %v1370 = vunpack.c.l.b16 %v249
    %v1371 = vunpack.c.h.b16 %v249
    %v1372 = vunpack.c.l.b16 %v250
    %v1373 = vunpack.c.h.b16 %v250
    %v1374 = vunpack.c.l.b16 %v251
    %v1375 = vunpack.c.h.b16 %v251
    %v1376 = vunpack.c.l.b16 %v252
    %v1377 = vunpack.c.h.b16 %v252
    %v1378 = vunpack.c.l.b16 %v253
    %v1379 = vunpack.c.h.b16 %v253
    %v1380 = vunpack.c.l.b16 %v254
    %v1381 = vunpack.c.h.b16 %v254
    %v1382 = vunpack.c.l.b16 %v255
    %v1383 = vunpack.c.h.b16 %v255
    %v1384 = vunpack.c.l.b16 %v256
    %v1385 = vunpack.c.h.b16 %v256
    %v1386 = vunpack.c.l.b16 %v257
    %v1387 = vunpack.c.h.b16 %v257
    %v1388 = vunpack.c.l.b16 %v258
    %v1389 = vunpack.c.h.b16 %v258
    %v1390 = vunpack.c.l.b16 %v259
    %v1391 = vunpack.c.h.b16 %v259
    %v1392 = vunpack.c.l.b16 %v260
    %v1393 = vunpack.c.h.b16 %v260
    %v1394 = vunpack.c.l.b16 %v261
    %v1395 = vunpack.c.h.b16 %v261
    %v1396 = vunpack.c.l.b16 %v262
    %v1397 = vunpack.c.h.b16 %v262
    %v1398 = vunpack.c.l.b16 %v263
    %v1399 = vunpack.c.h.b16 %v263
    %v1400 = vunpack.c.l.b16 %v264
    %v1401 = vunpack.c.h.b16 %v264
    %v1402 = vunpack.c.l.b16 %v265
    %v1403 = vunpack.c.h.b16 %v265
    %v1404 = vunpack.c.l.b16 %v266
    %v1405 = vunpack.c.h.b16 %v266
    %v1406 = vunpack.c.l.b16 %v267
    %v1407 = vunpack.c.h.b16 %v267
    %v1408 = vunpack.c.l.b16 %v268
    %v1409 = vunpack.c.h.b16 %v268
    %v1410 = vunpack.c.l.b16 %v269
    %v1411 = vunpack.c.h.b16 %v269
    %v1412 = vunpack.c.l.b16 %v270
    %v1413 = vunpack.c.h.b16 %v270
    %v1414 = vunpack.c.l.b16 %v271
    %v1415 = vunpack.c.h.b16 %v271
    %v1416 = vunpack.c.l.b16 %v272
    %v1417 = vunpack.c.h.b16 %v272
    %v1418 = vunpack.c.l.b16 %v273
    %v1419 = vunpack.c.h.b16 %v273
    %v1420 = vunpack.c.l.b16 %v274
    %v1421 = vunpack.c.h.b16 %v274
    %v1422 = vunpack.c.l.b16 %v275
    %v1423 = vunpack.c.h.b16 %v275
    %v1424 = vunpack.c.l.b16 %v276
    %v1425 = vunpack.c.h.b16 %v276
    %v1426 = vunpack.c.l.b16 %v277
    %v1427 = vunpack.c.h.b16 %v277
    %v1428 = vunpack.c.l.b16 %v278
    %v1429 = vunpack.c.h.b16 %v278
    %v1430 = vunpack.c.l.b16 %v279
    %v1431 = vunpack.c.h.b16 %v279
    %v1432 = vunpack.c.l.b16 %v280
    %v1433 = vunpack.c.h.b16 %v280
    %v1434 = vunpack.c.l.b16 %v281
    %v1435 = vunpack.c.h.b16 %v281
    %v1436 = vunpack.c.l.b16 %v282
    %v1437 = vunpack.c.h.b16 %v282
    %v1438 = vunpack.c.l.b16 %v283
    %v1439 = vunpack.c.h.b16 %v283
    %v1440 = vunpack.c.l.b16 %v284
    %v1441 = vunpack.c.h.b16 %v284
    %v1442 = vunpack.c.l.b16 %v285
    %v1443 = vunpack.c.h.b16 %v285
    %v1444 = vunpack.c.l.b16 %v286
    %v1445 = vunpack.c.h.b16 %v286
    %v1446 = vunpack.c.l.b16 %v287
    %v1447 = vunpack.c.h.b16 %v287
    %v1448 = vunpack.c.l.b16 %v288
    %v1449 = vunpack.c.h.b16 %v288
    %v1450 = vunpack.c.l.b16 %v289
    %v1451 = vunpack.c.h.b16 %v289
    %v1452 = vunpack.c.l.b16 %v290
    %v1453 = vunpack.c.h.b16 %v290
    %v1454 = vunpack.c.l.b16 %v291
    %v1455 = vunpack.c.h.b16 %v291
    %v1456 = vunpack.c.l.b16 %v292
    %v1457 = vunpack.c.h.b16 %v292
    %v1458 = vunpack.c.l.b16 %v293
    %v1459 = vunpack.c.h.b16 %v293
    %v1460 = vunpack.c.l.b16 %v294
    %v1461 = vunpack.c.h.b16 %v294
    %v1462 = vunpack.c.l.b16 %v295
    %v1463 = vunpack.c.h.b16 %v295
    %v1464 = vunpack.c.l.b16 %v296
    %v1465 = vunpack.c.h.b16 %v296
    %v1466 = vunpack.c.l.b16 %v297
    %v1467 = vunpack.c.h.b16 %v297
    %v1468 = vunpack.c.l.b16 %v298
    %v1469 = vunpack.c.h.b16 %v298
    %v1470 = vunpack.c.l.b16 %v299
    %v1471 = vunpack.c.h.b16 %v299
    %v1472 = vunpack.c.l.b16 %v300
    %v1473 = vunpack.c.h.b16 %v300
    %v1474 = vunpack.c.l.b16 %v301
    %v1475 = vunpack.c.h.b16 %v301
    %v1476 = vunpack.c.l.b16 %v302
    %v1477 = vunpack.c.h.b16 %v302
    %v1478 = vunpack.c.l.b16 %v303
    %v1479 = vunpack.c.h.b16 %v303
    %v1480 = vunpack.c.l.b16 %v304
    %v1481 = vunpack.c.h.b16 %v304
    %v1482 = vunpack.c.l.b16 %v305
    %v1483 = vunpack.c.h.b16 %v305
    %v1484 = vunpack.c.l.b16 %v306
    %v1485 = vunpack.c.h.b16 %v306
    %v1486 = vunpack.c.l.b16 %v307
    %v1487 = vunpack.c.h.b16 %v307
    %v1488 = vunpack.c.l.b16 %v308
    %v1489 = vunpack.c.h.b16 %v308
    %v1490 = vunpack.c.l.b16 %v309
    %v1491 = vunpack.c.h.b16 %v309
    %v1492 = vunpack.c.l.b16 %v310
    %v1493 = vunpack.c.h.b16 %v310
    %v1494 = vunpack.c.l.b16 %v311
    %v1495 = vunpack.c.h.b16 %v311
    %v1496 = vunpack.c.l.b16 %v312
    %v1497 = vunpack.c.h.b16 %v312
    %v1498 = vunpack.c.l.b16 %v313
    %v1499 = vunpack.c.h.b16 %v313
    %v1500 = vunpack.c.l.b16 %v314
    %v1501 = vunpack.c.h.b16 %v314
    %v1502 = vunpack.c.l.b16 %v315
    %v1503 = vunpack.c.h.b16 %v315
    %v1504 = vunpack.c.l.b16 %v316
    %v1505 = vunpack.c.h.b16 %v316
    %v1506 = vunpack.c.l.b16 %v317
    %v1507 = vunpack.c.h.b16 %v317
    %v1508 = vunpack.c.l.b16 %v318
    %v1509 = vunpack.c.h.b16 %v318
    %v1510 = vunpack.c.l.b16 %v319
    %v1511 = vunpack.c.h.b16 %v319
    %v1512 = vunpack.c.l.b16 %v320
    %v1513 = vunpack.c.h.b16 %v320
    %v1514 = vunpack.c.l.b16 %v321
    %v1515 = vunpack.c.h.b16 %v321
    %v1516 = vunpack.c.l.b16 %v322
    %v1517 = vunpack.c.h.b16 %v322
    %v1518 = vunpack.c.l.b16 %v323
    %v1519 = vunpack.c.h.b16 %v323
    %v1520 = vunpack.c.l.b16 %v324
    %v1521 = vunpack.c.h.b16 %v324
    %v1522 = vunpack.c.l.b16 %v325
    %v1523 = vunpack.c.h.b16 %v325
    %v1524 = vunpack.c.l.b16 %v326
    %v1525 = vunpack.c.h.b16 %v326
    %v1526 = vunpack.c.l.b16 %v327
    %v1527 = vunpack.c.h.b16 %v327
    %v1528 = vunpack.c.l.b16 %v328
    %v1529 = vunpack.c.h.b16 %v328
    %v1530 = vunpack.c.l.b16 %v329
    %v1531 = vunpack.c.h.b16 %v329
    %v1532 = vunpack.c.l.b16 %v330
    %v1533 = vunpack.c.h.b16 %v330
    %v1534 = vunpack.c.l.b16 %v331
    %v1535 = vunpack.c.h.b16 %v331
    %v1536 = vunpack.c.l.b16 %v332
    %v1537 = vunpack.c.h.b16 %v332
    %v1538 = vunpack.c.l.b16 %v333
    %v1539 = vunpack.c.h.b16 %v333
    %v1540 = vunpack.c.l.b16 %v334
    %v1541 = vunpack.c.h.b16 %v334
    %v1542 = vunpack.c.l.b16 %v335
    %v1543 = vunpack.c.h.b16 %v335
    %v1544 = vunpack.c.l.b16 %v336
    %v1545 = vunpack.c.h.b16 %v336
    %v1546 = vunpack.c.l.b16 %v337
    %v1547 = vunpack.c.h.b16 %v337
    %v1548 = vunpack.c.l.b16 %v338
    %v1549 = vunpack.c.h.b16 %v338
    %v1550 = vunpack.c.l.b16 %v339
    %v1551 = vunpack.c.h.b16 %v339
    %v1552 = vunpack.c.l.b16 %v340
    %v1553 = vunpack.c.h.b16 %v340
    %v1554 = vunpack.c.l.b16 %v341
    %v1555 = vunpack.c.h.b16 %v341
    %v1556 = vunpack.c.l.b16 %v342
    %v1557 = vunpack.c.h.b16 %v342
    %v1558 = vunpack.c.l.b16 %v343
    %v1559 = vunpack.c.h.b16 %v343
    %v1560 = vunpack.c.l.b16 %v344
    %v1561 = vunpack.c.h.b16 %v344
    %v1562 = vunpack.c.l.b16 %v345
    %v1563 = vunpack.c.h.b16 %v345
    %v1564 = vunpack.c.l.b16 %v346
    %v1565 = vunpack.c.h.b16 %v346
    %v1566 = vunpack.c.l.b16 %v347
    %v1567 = vunpack.c.h.b16 %v347
    %v1568 = vunpack.c.l.b16 %v348
    %v1569 = vunpack.c.h.b16 %v348
    %v1570 = vunpack.c.l.b16 %v349
    %v1571 = vunpack.c.h.b16 %v349
    %v1572 = vunpack.c.l.b16 %v350
    %v1573 = vunpack.c.h.b16 %v350
    %v1574 = vunpack.c.l.b16 %v351
    %v1575 = vunpack.c.h.b16 %v351
    %v1576 = vunpack.c.l.b16 %v352
    %v1577 = vunpack.c.h.b16 %v352
    %v1578 = vunpack.c.l.b16 %v353
    %v1579 = vunpack.c.h.b16 %v353
    %v1580 = vunpack.c.l.b16 %v354
    %v1581 = vunpack.c.h.b16 %v354
    %v1582 = vunpack.c.l.b16 %v355
    %v1583 = vunpack.c.h.b16 %v355
    %v1584 = vunpack.c.l.b16 %v356
    %v1585 = vunpack.c.h.b16 %v356
    %v1586 = vunpack.c.l.b16 %v357
    %v1587 = vunpack.c.h.b16 %v357
    %v1588 = vunpack.c.l.b16 %v358
    %v1589 = vunpack.c.h.b16 %v358
    %v1590 = vunpack.c.l.b16 %v359
    %v1591 = vunpack.c.h.b16 %v359
    %v1592 = vunpack.c.l.b16 %v360
    %v1593 = vunpack.c.h.b16 %v360
    %v1594 = vunpack.c.l.b16 %v361
    %v1595 = vunpack.c.h.b16 %v361
    %v1596 = vunpack.c.l.b16 %v362
    %v1597 = vunpack.c.h.b16 %v362
    %v1598 = vunpack.c.l.b16 %v363
    %v1599 = vunpack.c.h.b16 %v363
    %v1600 = vunpack.c.l.b16 %v364
    %v1601 = vunpack.c.h.b16 %v364
    %v1602 = vunpack.c.l.b16 %v365
    %v1603 = vunpack.c.h.b16 %v365
    %v1604 = vunpack.c.l.b16 %v366
    %v1605 = vunpack.c.h.b16 %v366
    %v1606 = vunpack.c.l.b16 %v367
    %v1607 = vunpack.c.h.b16 %v367
    %v1608 = vunpack.c.l.b16 %v368
    %v1609 = vunpack.c.h.b16 %v368
    %v1610 = vunpack.c.l.b16 %v369
    %v1611 = vunpack.c.h.b16 %v369
    %v1612 = vunpack.c.l.b16 %v370
    %v1613 = vunpack.c.h.b16 %v370
    %v1614 = vunpack.c.l.b16 %v371
    %v1615 = vunpack.c.h.b16 %v371
    %v1616 = vunpack.c.l.b16 %v372
    %v1617 = vunpack.c.h.b16 %v372
    %v1618 = vunpack.c.l.b16 %v373
    %v1619 = vunpack.c.h.b16 %v373
    %v1620 = vunpack.c.l.b16 %v374
    %v1621 = vunpack.c.h.b16 %v374
    %v1622 = vunpack.c.l.b16 %v375
    %v1623 = vunpack.c.h.b16 %v375
    %v1624 = vunpack.c.l.b16 %v376
    %v1625 = vunpack.c.h.b16 %v376
    %v1626 = vunpack.c.l.b16 %v377
    %v1627 = vunpack.c.h.b16 %v377
    %v1628 = vunpack.c.l.b16 %v378
    %v1629 = vunpack.c.h.b16 %v378
    %v1630 = vunpack.c.l.b16 %v379
    %v1631 = vunpack.c.h.b16 %v379
    %v1632 = vunpack.c.l.b16 %v380
    %v1633 = vunpack.c.h.b16 %v380
    %v1634 = vunpack.c.l.b16 %v381
    %v1635 = vunpack.c.h.b16 %v381
    %v1636 = vunpack.c.l.b16 %v382
    %v1637 = vunpack.c.h.b16 %v382
    %v1638 = vunpack.c.l.b16 %v383
    %v1639 = vunpack.c.h.b16 %v383
    %v1640 = vunpack.c.l.b16 %v384
    %v1641 = vunpack.c.h.b16 %v384
    %v1642 = vunpack.c.l.b16 %v385
    %v1643 = vunpack.c.h.b16 %v385
    %v1644 = vunpack.c.l.b16 %v386
    %v1645 = vunpack.c.h.b16 %v386
    %v1646 = vunpack.c.l.b16 %v387
    %v1647 = vunpack.c.h.b16 %v387
    %v1648 = vunpack.c.l.b16 %v388
    %v1649 = vunpack.c.h.b16 %v388
    %v1650 = vunpack.c.l.b16 %v389
    %v1651 = vunpack.c.h.b16 %v389
    %v1652 = vunpack.c.l.b16 %v390
    %v1653 = vunpack.c.h.b16 %v390
    %v1654 = vunpack.c.l.b16 %v391
    %v1655 = vunpack.c.h.b16 %v391
    %v1656 = vunpack.c.l.b16 %v392
    %v1657 = vunpack.c.h.b16 %v392
    %v1658 = vunpack.c.l.b16 %v393
    %v1659 = vunpack.c.h.b16 %v393
    %v1660 = vunpack.c.l.b16 %v394
    %v1661 = vunpack.c.h.b16 %v394
    %v1662 = vunpack.c.l.b16 %v395
    %v1663 = vunpack.c.h.b16 %v395
    %v1664 = vunpack.c.l.b16 %v396
    %v1665 = vunpack.c.h.b16 %v396
    %v1666 = vunpack.c.l.b16 %v397
    %v1667 = vunpack.c.h.b16 %v397
    %v1668 = vunpack.c.l.b16 %v398
    %v1669 = vunpack.c.h.b16 %v398
    %v1670 = vunpack.c.l.b16 %v399
    %v1671 = vunpack.c.h.b16 %v399
    %v1672 = vunpack.c.l.b16 %v400
    %v1673 = vunpack.c.h.b16 %v400
    %v1674 = vunpack.c.l.b16 %v401
    %v1675 = vunpack.c.h.b16 %v401
    %v1676 = vunpack.c.l.b16 %v402
    %v1677 = vunpack.c.h.b16 %v402
    %v1678 = vunpack.c.l.b16 %v403
    %v1679 = vunpack.c.h.b16 %v403
    %v1680 = vunpack.c.l.b16 %v404
    %v1681 = vunpack.c.h.b16 %v404
    %v1682 = vunpack.c.l.b16 %v405
    %v1683 = vunpack.c.h.b16 %v405
    %v1684 = vunpack.c.l.b16 %v406
    %v1685 = vunpack.c.h.b16 %v406
    %v1686 = vunpack.c.l.b16 %v407
    %v1687 = vunpack.c.h.b16 %v407
    %v1688 = vunpack.c.l.b16 %v408
    %v1689 = vunpack.c.h.b16 %v408
    %v1690 = vunpack.c.l.b16 %v409
    %v1691 = vunpack.c.h.b16 %v409
    %v1692 = vunpack.c.l.b16 %v410
    %v1693 = vunpack.c.h.b16 %v410
    %v1694 = vunpack.c.l.b16 %v411
    %v1695 = vunpack.c.h.b16 %v411
    %v1696 = vunpack.c.l.b16 %v412
    %v1697 = vunpack.c.h.b16 %v412
    %v1698 = vunpack.c.l.b16 %v413
    %v1699 = vunpack.c.h.b16 %v413
    %v1700 = vunpack.c.l.b16 %v414
    %v1701 = vunpack.c.h.b16 %v414
    %v1702 = vunpack.c.l.b16 %v415
    %v1703 = vunpack.c.h.b16 %v415
    %v1704 = vunpack.c.l.b16 %v416
    %v1705 = vunpack.c.h.b16 %v416
    %v1706 = vunpack.c.l.b16 %v417
    %v1707 = vunpack.c.h.b16 %v417
    %v1708 = vpack.c.b16 %v928, %v924
    %v1709 = vpack.c.b16 %v929, %v925
    %v1710 = vpack.c.b16 %v930, %v926
    %v1711 = vpack.c.b16 %v931, %v927
    %v1712 = vpack.c.b16 %v936, %v932
    %v1713 = vpack.c.b16 %v937, %v933
    %v1714 = vpack.c.b16 %v938, %v934
    %v1715 = vpack.c.b16 %v939, %v935
    %v1716 = vpack.c.b16 %v944, %v940
    %v1717 = vpack.c.b16 %v945, %v941
    %v1718 = vpack.c.b16 %v946, %v942
    %v1719 = vpack.c.b16 %v947, %v943
    %v1720 = vpack.c.b16 %v952, %v948
    %v1721 = vpack.c.b16 %v953, %v949
    %v1722 = vpack.c.b16 %v954, %v950
    %v1723 = vpack.c.b16 %v955, %v951
    %v1724 = vpack.c.b16 %v960, %v956
    %v1725 = vpack.c.b16 %v961, %v957
    %v1726 = vpack.c.b16 %v962, %v958
    %v1727 = vpack.c.b16 %v963, %v959
    %v1728 = vpack.c.b16 %v968, %v964
    %v1729 = vpack.c.b16 %v969, %v965
    %v1730 = vpack.c.b16 %v970, %v966
    %v1731 = vpack.c.b16 %v971, %v967
    %v1732 = vpack.c.b16 %v976, %v972
    %v1733 = vpack.c.b16 %v977, %v973
    %v1734 = vpack.c.b16 %v978, %v974
    %v1735 = vpack.c.b16 %v979, %v975
    %v1736 = vpack.c.b16 %v984, %v980
    %v1737 = vpack.c.b16 %v985, %v981
    %v1738 = vpack.c.b16 %v986, %v982
    %v1739 = vpack.c.b16 %v987, %v983
    %v1740 = vpack.c.b16 %v992, %v988
    %v1741 = vpack.c.b16 %v993, %v989
    %v1742 = vpack.c.b16 %v994, %v990
    %v1743 = vpack.c.b16 %v995, %v991
    %v1744 = vpack.c.b16 %v1000, %v996
    %v1745 = vpack.c.b16 %v1001, %v997
    %v1746 = vpack.c.b16 %v1002, %v998
    %v1747 = vpack.c.b16 %v1003, %v999
    %v1748 = vpack.c.b16 %v1008, %v1004
    %v1749 = vpack.c.b16 %v1009, %v1005
    %v1750 = vpack.c.b16 %v1010, %v1006
    %v1751 = vpack.c.b16 %v1011, %v1007
    %v1752 = vpack.c.b16 %v1016, %v1012
    %v1753 = vpack.c.b16 %v1017, %v1013
    %v1754 = vpack.c.b16 %v1018, %v1014
    %v1755 = vpack.c.b16 %v1019, %v1015
    %v1756 = vpack.c.b16 %v1024, %v1020
    %v1757 = vpack.c.b16 %v1025, %v1021
    %v1758 = vpack.c.b16 %v1026, %v1022
    %v1759 = vpack.c.b16 %v1027, %v1023
    %v1760 = vpack.c.b16 %v1032, %v1028
    %v1761 = vpack.c.b16 %v1033, %v1029
    %v1762 = vpack.c.b16 %v1034, %v1030
    %v1763 = vpack.c.b16 %v1035, %v1031
    %v1764 = vpack.c.b16 %v1040, %v1036
    %v1765 = vpack.c.b16 %v1041, %v1037
    %v1766 = vpack.c.b16 %v1042, %v1038
    %v1767 = vpack.c.b16 %v1043, %v1039
    %v1768 = vpack.c.b16 %v1048, %v1044
    %v1769 = vpack.c.b16 %v1049, %v1045
    %v1770 = vpack.c.b16 %v1050, %v1046
    %v1771 = vpack.c.b16 %v1051, %v1047
    %v1772 = vpack.c.b16 %v1056, %v1052
    %v1773 = vpack.c.b16 %v1057, %v1053
    %v1774 = vpack.c.b16 %v1058, %v1054
    %v1775 = vpack.c.b16 %v1059, %v1055
    %v1776 = vpack.c.b16 %v1064, %v1060
    %v1777 = vpack.c.b16 %v1065, %v1061
    %v1778 = vpack.c.b16 %v1066, %v1062
    %v1779 = vpack.c.b16 %v1067, %v1063
    %v1780 = vpack.c.b16 %v1072, %v1068
    %v1781 = vpack.c.b16 %v1073, %v1069
    %v1782 = vpack.c.b16 %v1074, %v1070
    %v1783 = vpack.c.b16 %v1075, %v1071
    %v1784 = vpack.c.b16 %v1080, %v1076
    %v1785 = vpack.c.b16 %v1081, %v1077
    %v1786 = vpack.c.b16 %v1082, %v1078
    %v1787 = vpack.c.b16 %v1083, %v1079
    %v1788 = vpack.c.b16 %v1088, %v1084
    %v1789 = vpack.c.b16 %v1089, %v1085
    %v1790 = vpack.c.b16 %v1090, %v1086
    %v1791 = vpack.c.b16 %v1091, %v1087
    %v1792 = vpack.c.b16 %v1096, %v1092
    %v1793 = vpack.c.b16 %v1097, %v1093
    %v1794 = vpack.c.b16 %v1098, %v1094
    %v1795 = vpack.c.b16 %v1099, %v1095
    %v1796 = vpack.c.b16 %v1104, %v1100
    %v1797 = vpack.c.b16 %v1105, %v1101
    %v1798 = vpack.c.b16 %v1106, %v1102
    %v1799 = vpack.c.b16 %v1107, %v1103
    %v1800 = vpack.c.b16 %v1112, %v1108
    %v1801 = vpack.c.b16 %v1113, %v1109
    %v1802 = vpack.c.b16 %v1114, %v1110
    %v1803 = vpack.c.b16 %v1115, %v1111
    %v1804 = vpack.c.b16 %v1120, %v1116
    %v1805 = vpack.c.b16 %v1121, %v1117
    %v1806 = vpack.c.b16 %v1122, %v1118
    %v1807 = vpack.c.b16 %v1123, %v1119
    %v1808 = vpack.c.b16 %v1128, %v1124
    %v1809 = vpack.c.b16 %v1129, %v1125
    %v1810 = vpack.c.b16 %v1130, %v1126
    %v1811 = vpack.c.b16 %v1131, %v1127
    %v1812 = vpack.c.b16 %v1136, %v1132
    %v1813 = vpack.c.b16 %v1137, %v1133
    %v1814 = vpack.c.b16 %v1138, %v1134
    %v1815 = vpack.c.b16 %v1139, %v1135
    %v1816 = vpack.c.b16 %v1144, %v1140
    %v1817 = vpack.c.b16 %v1145, %v1141
    %v1818 = vpack.c.b16 %v1146, %v1142
    %v1819 = vpack.c.b16 %v1147, %v1143
    %v1820 = vpack.c.b16 %v1152, %v1148
    %v1821 = vpack.c.b16 %v1153, %v1149
    %v1822 = vpack.c.b16 %v1154, %v1150
    %v1823 = vpack.c.b16 %v1155, %v1151
    %v1824 = vpack.c.b16 %v1160, %v1156
    %v1825 = vpack.c.b16 %v1161, %v1157
    %v1826 = vpack.c.b16 %v1162, %v1158
    %v1827 = vpack.c.b16 %v1163, %v1159
    %v1828 = vpack.c.b16 %v1168, %v1164
    %v1829 = vpack.c.b16 %v1169, %v1165
    %v1830 = vpack.c.b16 %v1170, %v1166
    %v1831 = vpack.c.b16 %v1171, %v1167
    %v1832 = vpack.c.b16 %v1176, %v1172
    %v1833 = vpack.c.b16 %v1177, %v1173
    %v1834 = vpack.c.b16 %v1178, %v1174
    %v1835 = vpack.c.b16 %v1179, %v1175
    %v1836 = vpack.c.b16 %v1184, %v1180
    %v1837 = vpack.c.b16 %v1185, %v1181
    %v1838 = vpack.c.b16 %v1186, %v1182
    %v1839 = vpack.c.b16 %v1187, %v1183
    %v1840 = vpack.c.b16 %v1192, %v1188
    %v1841 = vpack.c.b16 %v1193, %v1189
    %v1842 = vpack.c.b16 %v1194, %v1190
    %v1843 = vpack.c.b16 %v1195, %v1191
    %v1844 = vpack.c.b16 %v1200, %v1196
    %v1845 = vpack.c.b16 %v1201, %v1197
    %v1846 = vpack.c.b16 %v1202, %v1198
    %v1847 = vpack.c.b16 %v1203, %v1199
    %v1848 = vpack.c.b16 %v1208, %v1204
    %v1849 = vpack.c.b16 %v1209, %v1205
    %v1850 = vpack.c.b16 %v1210, %v1206
    %v1851 = vpack.c.b16 %v1211, %v1207
    %v1852 = vpack.c.b16 %v1216, %v1212
    %v1853 = vpack.c.b16 %v1217, %v1213
    %v1854 = vpack.c.b16 %v1218, %v1214
    %v1855 = vpack.c.b16 %v1219, %v1215
    %v1856 = vpack.c.b16 %v1224, %v1220
    %v1857 = vpack.c.b16 %v1225, %v1221
    %v1858 = vpack.c.b16 %v1226, %v1222
    %v1859 = vpack.c.b16 %v1227, %v1223
    %v1860 = vpack.c.b16 %v1232, %v1228
    %v1861 = vpack.c.b16 %v1233, %v1229
    %v1862 = vpack.c.b16 %v1234, %v1230
    %v1863 = vpack.c.b16 %v1235, %v1231
    %v1864 = vpack.c.b16 %v1240, %v1236
    %v1865 = vpack.c.b16 %v1241, %v1237
    %v1866 = vpack.c.b16 %v1242, %v1238
    %v1867 = vpack.c.b16 %v1243, %v1239
    %v1868 = vpack.c.b16 %v1248, %v1244
    %v1869 = vpack.c.b16 %v1249, %v1245
    %v1870 = vpack.c.b16 %v1250, %v1246
    %v1871 = vpack.c.b16 %v1251, %v1247
    %v1872 = vpack.c.b16 %v1256, %v1252
    %v1873 = vpack.c.b16 %v1257, %v1253
    %v1874 = vpack.c.b16 %v1258, %v1254
    %v1875 = vpack.c.b16 %v1259, %v1255
    %v1876 = vpack.c.b16 %v1264, %v1260
    %v1877 = vpack.c.b16 %v1265, %v1261
    %v1878 = vpack.c.b16 %v1266, %v1262
    %v1879 = vpack.c.b16 %v1267, %v1263
    %v1880 = vpack.c.b16 %v1272, %v1268
    %v1881 = vpack.c.b16 %v1273, %v1269
    %v1882 = vpack.c.b16 %v1274, %v1270
    %v1883 = vpack.c.b16 %v1275, %v1271
    %v1884 = vpack.c.b16 %v1280, %v1276
    %v1885 = vpack.c.b16 %v1281, %v1277
    %v1886 = vpack.c.b16 %v1282, %v1278
    %v1887 = vpack.c.b16 %v1283, %v1279
    %v1888 = vpack.c.b16 %v1288, %v1284
    %v1889 = vpack.c.b16 %v1289, %v1285
    %v1890 = vpack.c.b16 %v1290, %v1286
    %v1891 = vpack.c.b16 %v1291, %v1287
    %v1892 = vpack.c.b16 %v1296, %v1292
    %v1893 = vpack.c.b16 %v1297, %v1293
    %v1894 = vpack.c.b16 %v1298, %v1294
    %v1895 = vpack.c.b16 %v1299, %v1295
    %v1896 = vpack.c.b16 %v1304, %v1300
    %v1897 = vpack.c.b16 %v1305, %v1301
    %v1898 = vpack.c.b16 %v1306, %v1302
    %v1899 = vpack.c.b16 %v1307, %v1303
    %v1900 = vpack.c.b16 %v1312, %v1308
    %v1901 = vpack.c.b16 %v1313, %v1309
    %v1902 = vpack.c.b16 %v1314, %v1310
    %v1903 = vpack.c.b16 %v1315, %v1311
    %v1904 = vpack.c.b16 %v1320, %v1316
    %v1905 = vpack.c.b16 %v1321, %v1317
    %v1906 = vpack.c.b16 %v1322, %v1318
    %v1907 = vpack.c.b16 %v1323, %v1319
    %v1908 = vpack.c.b16 %v1328, %v1324
    %v1909 = vpack.c.b16 %v1329, %v1325
    %v1910 = vpack.c.b16 %v1330, %v1326
    %v1911 = vpack.c.b16 %v1331, %v1327
    %v1912 = vpack.c.b16 %v1336, %v1332
    %v1913 = vpack.c.b16 %v1337, %v1333
    %v1914 = vpack.c.b16 %v1338, %v1334
    %v1915 = vpack.c.b16 %v1339, %v1335
    %v1916 = vpack.c.b16 %v1344, %v1340
    %v1917 = vpack.c.b16 %v1345, %v1341
    %v1918 = vpack.c.b16 %v1346, %v1342
    %v1919 = vpack.c.b16 %v1347, %v1343
    %v1920 = vpack.c.b16 %v1352, %v1348
    %v1921 = vpack.c.b16 %v1353, %v1349
    %v1922 = vpack.c.b16 %v1354, %v1350
    %v1923 = vpack.c.b16 %v1355, %v1351
    %v1924 = vpack.c.b16 %v1360, %v1356
    %v1925 = vpack.c.b16 %v1361, %v1357
    %v1926 = vpack.c.b16 %v1362, %v1358
    %v1927 = vpack.c.b16 %v1363, %v1359
    %v1928 = vpack.c.b16 %v1368, %v1364
    %v1929 = vpack.c.b16 %v1369, %v1365
    %v1930 = vpack.c.b16 %v1370, %v1366
    %v1931 = vpack.c.b16 %v1371, %v1367
    %v1932 = vpack.c.b16 %v1376, %v1372
    %v1933 = vpack.c.b16 %v1377, %v1373
    %v1934 = vpack.c.b16 %v1378, %v1374
    %v1935 = vpack.c.b16 %v1379, %v1375
    %v1936 = vpack.c.b16 %v1384, %v1380
    %v1937 = vpack.c.b16 %v1385, %v1381
    %v1938 = vpack.c.b16 %v1386, %v1382
    %v1939 = vpack.c.b16 %v1387, %v1383
    %v1940 = vpack.c.b16 %v1392, %v1388
    %v1941 = vpack.c.b16 %v1393, %v1389
    %v1942 = vpack.c.b16 %v1394, %v1390
    %v1943 = vpack.c.b16 %v1395, %v1391
    %v1944 = vpack.c.b16 %v1400, %v1396
    %v1945 = vpack.c.b16 %v1401, %v1397
    %v1946 = vpack.c.b16 %v1402, %v1398
    %v1947 = vpack.c.b16 %v1403, %v1399
    %v1948 = vpack.c.b16 %v1408, %v1404
    %v1949 = vpack.c.b16 %v1409, %v1405
    %v1950 = vpack.c.b16 %v1410, %v1406
    %v1951 = vpack.c.b16 %v1411, %v1407
    %v1952 = vpack.c.b16 %v1416, %v1412
    %v1953 = vpack.c.b16 %v1417, %v1413
    %v1954 = vpack.c.b16 %v1418, %v1414
    %v1955 = vpack.c.b16 %v1419, %v1415
    %v1956 = vpack.c.b16 %v1424, %v1420
    %v1957 = vpack.c.b16 %v1425, %v1421
    %v1958 = vpack.c.b16 %v1426, %v1422
    %v1959 = vpack.c.b16 %v1427, %v1423
    %v1960 = vpack.c.b16 %v1432, %v1428
    %v1961 = vpack.c.b16 %v1433, %v1429
    %v1962 = vpack.c.b16 %v1434, %v1430
    %v1963 = vpack.c.b16 %v1435, %v1431
    %v1964 = vpack.c.b16 %v1440, %v1436
    %v1965 = vpack.c.b16 %v1441, %v1437
    %v1966 = vpack.c.b16 %v1442, %v1438
    %v1967 = vpack.c.b16 %v1443, %v1439
    %v1968 = vpack.c.b16 %v1448, %v1444
    %v1969 = vpack.c.b16 %v1449, %v1445
    %v1970 = vpack.c.b16 %v1450, %v1446
    %v1971 = vpack.c.b16 %v1451, %v1447
    %v1972 = vpack.c.b16 %v1456, %v1452
    %v1973 = vpack.c.b16 %v1457, %v1453
    %v1974 = vpack.c.b16 %v1458, %v1454
    %v1975 = vpack.c.b16 %v1459, %v1455
    %v1976 = vpack.c.b16 %v1464, %v1460
    %v1977 = vpack.c.b16 %v1465, %v1461
    %v1978 = vpack.c.b16 %v1466, %v1462
    %v1979 = vpack.c.b16 %v1467, %v1463
    %v1980 = vpack.c.b16 %v1472, %v1468
    %v1981 = vpack.c.b16 %v1473, %v1469
    %v1982 = vpack.c.b16 %v1474, %v1470
    %v1983 = vpack.c.b16 %v1475, %v1471
    %v1984 = vpack.c.b16 %v1480, %v1476
    %v1985 = vpack.c.b16 %v1481, %v1477
    %v1986 = vpack.c.b16 %v1482, %v1478
    %v1987 = vpack.c.b16 %v1483, %v1479
    %v1988 = vpack.c.b16 %v1488, %v1484
    %v1989 = vpack.c.b16 %v1489, %v1485
    %v1990 = vpack.c.b16 %v1490, %v1486
    %v1991 = vpack.c.b16 %v1491, %v1487
    %v1992 = vpack.c.b16 %v1496, %v1492
    %v1993 = vpack.c.b16 %v1497, %v1493
    %v1994 = vpack.c.b16 %v1498, %v1494
    %v1995 = vpack.c.b16 %v1499, %v1495
    %v1996 = vpack.c.b16 %v1504, %v1500
    %v1997 = vpack.c.b16 %v1505, %v1501
    %v1998 = vpack.c.b16 %v1506, %v1502
    %v1999 = vpack.c.b16 %v1507, %v1503
    %v2000 = vpack.c.b16 %v1512, %v1508
    %v2001 = vpack.c.b16 %v1513, %v1509
    %v2002 = vpack.c.b16 %v1514, %v1510
    %v2003 = vpack.c.b16 %v1515, %v1511
    %v2004 = vpack.c.b16 %v1520, %v1516
    %v2005 = vpack.c.b16 %v1521, %v1517
    %v2006 = vpack.c.b16 %v1522, %v1518
    %v2007 = vpack.c.b16 %v1523, %v1519
    %v2008 = vpack.c.b16 %v1528, %v1524
    %v2009 = vpack.c.b16 %v1529, %v1525
    %v2010 = vpack.c.b16 %v1530, %v1526
    %v2011 = vpack.c.b16 %v1531, %v1527
    %v2012 = vpack.c.b16 %v1536, %v1532
    %v2013 = vpack.c.b16 %v1537, %v1533
    %v2014 = vpack.c.b16 %v1538, %v1534
    %v2015 = vpack.c.b16 %v1539, %v1535
    %v2016 = vpack.c.b16 %v1544, %v1540
    %v2017 = vpack.c.b16 %v1545, %v1541
    %v2018 = vpack.c.b16 %v1546, %v1542
    %v2019 = vpack.c.b16 %v1547, %v1543
    %v2020 = vpack.c.b16 %v1552, %v1548
    %v2021 = vpack.c.b16 %v1553, %v1549
    %v2022 = vpack.c.b16 %v1554, %v1550
    %v2023 = vpack.c.b16 %v1555, %v1551
    %v2024 = vpack.c.b16 %v1560, %v1556
    %v2025 = vpack.c.b16 %v1561, %v1557
    %v2026 = vpack.c.b16 %v1562, %v1558
    %v2027 = vpack.c.b16 %v1563, %v1559
    %v2028 = vpack.c.b16 %v1568, %v1564
    %v2029 = vpack.c.b16 %v1569, %v1565
    %v2030 = vpack.c.b16 %v1570, %v1566
    %v2031 = vpack.c.b16 %v1571, %v1567
    %v2032 = vpack.c.b16 %v1576, %v1572
    %v2033 = vpack.c.b16 %v1577, %v1573
    %v2034 = vpack.c.b16 %v1578, %v1574
    %v2035 = vpack.c.b16 %v1579, %v1575
    %v2036 = vpack.c.b16 %v1584, %v1580
    %v2037 = vpack.c.b16 %v1585, %v1581
    %v2038 = vpack.c.b16 %v1586, %v1582
    %v2039 = vpack.c.b16 %v1587, %v1583
    %v2040 = vpack.c.b16 %v1592, %v1588
    %v2041 = vpack.c.b16 %v1593, %v1589
    %v2042 = vpack.c.b16 %v1594, %v1590
    %v2043 = vpack.c.b16 %v1595, %v1591
    %v2044 = vpack.c.b16 %v1600, %v1596
    %v2045 = vpack.c.b16 %v1601, %v1597
    %v2046 = vpack.c.b16 %v1602, %v1598
    %v2047 = vpack.c.b16 %v1603, %v1599
    %v2048 = vpack.c.b16 %v1608, %v1604
    %v2049 = vpack.c.b16 %v1609, %v1605
    %v2050 = vpack.c.b16 %v1610, %v1606
    %v2051 = vpack.c.b16 %v1611, %v1607
    %v2052 = vpack.c.b16 %v1616, %v1612
    %v2053 = vpack.c.b16 %v1617, %v1613
    %v2054 = vpack.c.b16 %v1618, %v1614
    %v2055 = vpack.c.b16 %v1619, %v1615
    %v2056 = vpack.c.b16 %v1624, %v1620
    %v2057 = vpack.c.b16 %v1625, %v1621
    %v2058 = vpack.c.b16 %v1626, %v1622
    %v2059 = vpack.c.b16 %v1627, %v1623
    %v2060 = vpack.c.b16 %v1632, %v1628
    %v2061 = vpack.c.b16 %v1633, %v1629
    %v2062 = vpack.c.b16 %v1634, %v1630
    %v2063 = vpack.c.b16 %v1635, %v1631
    %v2064 = vpack.c.b16 %v1640, %v1636
    %v2065 = vpack.c.b16 %v1641, %v1637
    %v2066 = vpack.c.b16 %v1642, %v1638
    %v2067 = vpack.c.b16 %v1643, %v1639
    %v2068 = vpack.c.b16 %v1648, %v1644
    %v2069 = vpack.c.b16 %v1649, %v1645
    %v2070 = vpack.c.b16 %v1650, %v1646
    %v2071 = vpack.c.b16 %v1651, %v1647
    %v2072 = vpack.c.b16 %v1656, %v1652
    %v2073 = vpack.c.b16 %v1657, %v1653
    %v2074 = vpack.c.b16 %v1658, %v1654
    %v2075 = vpack.c.b16 %v1659, %v1655
    %v2076 = vpack.c.b16 %v1664, %v1660
    %v2077 = vpack.c.b16 %v1665, %v1661
    %v2078 = vpack.c.b16 %v1666, %v1662
    %v2079 = vpack.c.b16 %v1667, %v1663
    %v2080 = vpack.c.b16 %v1672, %v1668
    %v2081 = vpack.c.b16 %v1673, %v1669
    %v2082 = vpack.c.b16 %v1674, %v1670
    %v2083 = vpack.c.b16 %v1675, %v1671
    %v2084 = vpack.c.b16 %v1680, %v1676
    %v2085 = vpack.c.b16 %v1681, %v1677
    %v2086 = vpack.c.b16 %v1682, %v1678
    %v2087 = vpack.c.b16 %v1683, %v1679
    %v2088 = vpack.c.b16 %v1688, %v1684
    %v2089 = vpack.c.b16 %v1689, %v1685
    %v2090 = vpack.c.b16 %v1690, %v1686
    %v2091 = vpack.c.b16 %v1691, %v1687
    %v2092 = vpack.c.b16 %v1696, %v1692
    %v2093 = vpack.c.b16 %v1697, %v1693
    %v2094 = vpack.c.b16 %v1698, %v1694
    %v2095 = vpack.c.b16 %v1699, %v1695
    %v2096 = vpack.c.b16 %v1704, %v1700
    %v2097 = vpack.c.b16 %v1705, %v1701
    %v2098 = vpack.c.b16 %v1706, %v1702
    %v2099 = vpack.c.b16 %v1707, %v1703
    %vm2492 = vcmask 261120
    %v2494 = vsel %vm2492, %v509, 0
    %2496 = vmatprep.subr.bf16.mxu0 %v1737
    %2497 = vmatpush1.bf16.msra.mxu0 %v1736
    %2498 = vmatprep.subr.bf16.mxu0 %v1733
    %2499 = vmatpush1.bf16.msra.mxu0 %v1732
    %2500 = vmatprep.subr.bf16.mxu0 %v1729
    %2501 = vmatpush1.bf16.msra.mxu0 %v1728
    %2502 = vmatprep.subr.bf16.mxu0 %v1725
    %2503 = vmatpush1.bf16.msra.mxu0 %v1724
    %2504 = vmatprep.subr.bf16.mxu0 %v1721
    %2505 = vmatpush1.bf16.msra.mxu0 %v1720
    %2506 = vmatprep.subr.bf16.mxu0 %v1717
    %2507 = vmatpush1.bf16.msra.mxu0 %v1716
    %2508 = vmatprep.subr.bf16.mxu0 %v1713
    %2509 = vmatpush1.bf16.msra.mxu0 %v1712
    %2510 = vmatprep.subr.bf16.mxu0 %v1709
    %2511 = vmatpush1.bf16.msra.mxu0 %v1708
    %2512 = vmatprep.subr.bf16.mxu0 %v1769
    %2513 = vmatpush2.bf16.msra.mxu0 %v1768
    %2514 = vmatprep.subr.bf16.mxu0 %v1765
    %2515 = vmatpush2.bf16.msra.mxu0 %v1764
    %2516 = vmatprep.subr.bf16.mxu0 %v1761
    %2517 = vmatpush2.bf16.msra.mxu0 %v1760
    %2518 = vmatprep.subr.bf16.mxu0 %v1757
    %2519 = vmatpush2.bf16.msra.mxu0 %v1756
    %2520 = vmatprep.subr.bf16.mxu0 %v1753
    %2521 = vmatpush2.bf16.msra.mxu0 %v1752
    %2522 = vmatprep.subr.bf16.mxu0 %v1749
    %2523 = vmatpush2.bf16.msra.mxu0 %v1748
    %2524 = vmatprep.subr.bf16.mxu0 %v1745
    %2525 = vmatpush2.bf16.msra.mxu0 %v1744
    %2526 = vmatprep.subr.bf16.mxu0 %v1741
    %2527 = vmatpush2.bf16.msra.mxu0 %v1740
    %2528 = vmatprep.mubr.bf16.mxu0 %v498
    %2529 = vmatmul.mubr.bf16.gmra.mxu0 %v497
    %v2530 = vpop.f32.mrf.mxu0
    %v2531 = vadd.f32 %v515, %v2530
    %v2532 = vpop.f32.mrf.mxu0
    %v2533 = vadd.f32 %v519, %v2532
    %v2534 = vpop.f32.mrf.mxu0
    %v2535 = vpop.f32.mrf.mxu0
    %2536 = vdwg.mxu0
    %2537 = vmatprep.subr.bf16.mxu0 %v1801
    %2538 = vmatpush1.bf16.msra.mxu0 %v1800
    %2539 = vmatprep.subr.bf16.mxu0 %v1797
    %2540 = vmatpush1.bf16.msra.mxu0 %v1796
    %2541 = vmatprep.subr.bf16.mxu0 %v1793
    %2542 = vmatpush1.bf16.msra.mxu0 %v1792
    %2543 = vmatprep.subr.bf16.mxu0 %v1789
    %2544 = vmatpush1.bf16.msra.mxu0 %v1788
    %2545 = vmatprep.subr.bf16.mxu0 %v1785
    %2546 = vmatpush1.bf16.msra.mxu0 %v1784
    %2547 = vmatprep.subr.bf16.mxu0 %v1781
    %2548 = vmatpush1.bf16.msra.mxu0 %v1780
    %2549 = vmatprep.subr.bf16.mxu0 %v1777
    %2550 = vmatpush1.bf16.msra.mxu0 %v1776
    %2551 = vmatprep.subr.bf16.mxu0 %v1773
    %2552 = vmatpush1.bf16.msra.mxu0 %v1772
    %2553 = vmatprep.subr.bf16.mxu0 %v1833
    %2554 = vmatpush2.bf16.msra.mxu0 %v1832
    %2555 = vmatprep.subr.bf16.mxu0 %v1829
    %2556 = vmatpush2.bf16.msra.mxu0 %v1828
    %2557 = vmatprep.subr.bf16.mxu0 %v1825
    %2558 = vmatpush2.bf16.msra.mxu0 %v1824
    %2559 = vmatprep.subr.bf16.mxu0 %v1821
    %2560 = vmatpush2.bf16.msra.mxu0 %v1820
    %2561 = vmatprep.subr.bf16.mxu0 %v1817
    %2562 = vmatpush2.bf16.msra.mxu0 %v1816
    %2563 = vmatprep.subr.bf16.mxu0 %v1813
    %2564 = vmatpush2.bf16.msra.mxu0 %v1812
    %2565 = vmatprep.subr.bf16.mxu0 %v1809
    %2566 = vmatpush2.bf16.msra.mxu0 %v1808
    %2567 = vmatprep.subr.bf16.mxu0 %v1805
    %2568 = vmatpush2.bf16.msra.mxu0 %v1804
    %2569 = vmatprep.mubr.bf16.mxu0 %v500
    %2570 = vmatmul.mubr.bf16.gmra.mxu0 %v499
    %v2571 = vpop.f32.mrf.mxu0
    %v2572 = vadd.f32 %v2531, %v2571
    %v2573 = vpop.f32.mrf.mxu0
    %v2574 = vadd.f32 %v2533, %v2573
    %v2575 = vpop.f32.mrf.mxu0
    %v2576 = vpop.f32.mrf.mxu0
    %2577 = vdwg.mxu0
    %2578 = vmatprep.subr.bf16.mxu0 %v1865
    %2579 = vmatpush1.bf16.msra.mxu0 %v1864
    %2580 = vmatprep.subr.bf16.mxu0 %v1861
    %2581 = vmatpush1.bf16.msra.mxu0 %v1860
    %2582 = vmatprep.subr.bf16.mxu0 %v1857
    %2583 = vmatpush1.bf16.msra.mxu0 %v1856
    %2584 = vmatprep.subr.bf16.mxu0 %v1853
    %2585 = vmatpush1.bf16.msra.mxu0 %v1852
    %2586 = vmatprep.subr.bf16.mxu0 %v1849
    %2587 = vmatpush1.bf16.msra.mxu0 %v1848
    %2588 = vmatprep.subr.bf16.mxu0 %v1845
    %2589 = vmatpush1.bf16.msra.mxu0 %v1844
    %2590 = vmatprep.subr.bf16.mxu0 %v1841
    %2591 = vmatpush1.bf16.msra.mxu0 %v1840
    %2592 = vmatprep.subr.bf16.mxu0 %v1837
    %2593 = vmatpush1.bf16.msra.mxu0 %v1836
    %2594 = vmatprep.subr.bf16.mxu0 %v1897
    %2595 = vmatpush2.bf16.msra.mxu0 %v1896
    %2596 = vmatprep.subr.bf16.mxu0 %v1893
    %2597 = vmatpush2.bf16.msra.mxu0 %v1892
    %2598 = vmatprep.subr.bf16.mxu0 %v1889
    %2599 = vmatpush2.bf16.msra.mxu0 %v1888
    %2600 = vmatprep.subr.bf16.mxu0 %v1885
    %2601 = vmatpush2.bf16.msra.mxu0 %v1884
    %2602 = vmatprep.subr.bf16.mxu0 %v1881
    %2603 = vmatpush2.bf16.msra.mxu0 %v1880
    %2604 = vmatprep.subr.bf16.mxu0 %v1877
    %2605 = vmatpush2.bf16.msra.mxu0 %v1876
    %2606 = vmatprep.subr.bf16.mxu0 %v1873
    %2607 = vmatpush2.bf16.msra.mxu0 %v1872
    %2608 = vmatprep.subr.bf16.mxu0 %v1869
    %2609 = vmatpush2.bf16.msra.mxu0 %v1868
    %2610 = vmatprep.mubr.bf16.mxu0 %v502
    %2611 = vmatmul.mubr.bf16.gmra.mxu0 %v501
    %v2612 = vpop.f32.mrf.mxu0
    %v2613 = vadd.f32 %v2572, %v2612
    %v2614 = vpop.f32.mrf.mxu0
    %v2615 = vadd.f32 %v2574, %v2614
    %v2616 = vpop.f32.mrf.mxu0
    %v2617 = vpop.f32.mrf.mxu0
    %2618 = vdwg.mxu0
    %2619 = vmatprep.subr.bf16.mxu0 %v1929
    %2620 = vmatpush1.bf16.msra.mxu0 %v1928
    %2621 = vmatprep.subr.bf16.mxu0 %v1925
    %2622 = vmatpush1.bf16.msra.mxu0 %v1924
    %2623 = vmatprep.subr.bf16.mxu0 %v1921
    %2624 = vmatpush1.bf16.msra.mxu0 %v1920
    %2625 = vmatprep.subr.bf16.mxu0 %v1917
    %2626 = vmatpush1.bf16.msra.mxu0 %v1916
    %2627 = vmatprep.subr.bf16.mxu0 %v1913
    %2628 = vmatpush1.bf16.msra.mxu0 %v1912
    %2629 = vmatprep.subr.bf16.mxu0 %v1909
    %2630 = vmatpush1.bf16.msra.mxu0 %v1908
    %2631 = vmatprep.subr.bf16.mxu0 %v1905
    %2632 = vmatpush1.bf16.msra.mxu0 %v1904
    %2633 = vmatprep.subr.bf16.mxu0 %v1901
    %2634 = vmatpush1.bf16.msra.mxu0 %v1900
    %2635 = vmatprep.subr.bf16.mxu0 %v1961
    %2636 = vmatpush2.bf16.msra.mxu0 %v1960
    %2637 = vmatprep.subr.bf16.mxu0 %v1957
    %2638 = vmatpush2.bf16.msra.mxu0 %v1956
    %2639 = vmatprep.subr.bf16.mxu0 %v1953
    %2640 = vmatpush2.bf16.msra.mxu0 %v1952
    %2641 = vmatprep.subr.bf16.mxu0 %v1949
    %2642 = vmatpush2.bf16.msra.mxu0 %v1948
    %2643 = vmatprep.subr.bf16.mxu0 %v1945
    %2644 = vmatpush2.bf16.msra.mxu0 %v1944
    %2645 = vmatprep.subr.bf16.mxu0 %v1941
    %2646 = vmatpush2.bf16.msra.mxu0 %v1940
    %2647 = vmatprep.subr.bf16.mxu0 %v1937
    %2648 = vmatpush2.bf16.msra.mxu0 %v1936
    %2649 = vmatprep.subr.bf16.mxu0 %v1933
    %2650 = vmatpush2.bf16.msra.mxu0 %v1932
    %2651 = vmatprep.mubr.bf16.mxu0 %v504
    %2652 = vmatmul.mubr.bf16.gmra.mxu0 %v503
    %v2653 = vpop.f32.mrf.mxu0
    %v2654 = vadd.f32 %v2613, %v2653
    %v2655 = vpop.f32.mrf.mxu0
    %v2656 = vadd.f32 %v2615, %v2655
    %v2657 = vpop.f32.mrf.mxu0
    %v2658 = vpop.f32.mrf.mxu0
    %2659 = vdwg.mxu0
    %2660 = vmatprep.subr.bf16.mxu0 %v1993
    %2661 = vmatpush1.bf16.msra.mxu0 %v1992
    %2662 = vmatprep.subr.bf16.mxu0 %v1989
    %2663 = vmatpush1.bf16.msra.mxu0 %v1988
    %2664 = vmatprep.subr.bf16.mxu0 %v1985
    %2665 = vmatpush1.bf16.msra.mxu0 %v1984
    %2666 = vmatprep.subr.bf16.mxu0 %v1981
    %2667 = vmatpush1.bf16.msra.mxu0 %v1980
    %2668 = vmatprep.subr.bf16.mxu0 %v1977
    %2669 = vmatpush1.bf16.msra.mxu0 %v1976
    %2670 = vmatprep.subr.bf16.mxu0 %v1973
    %2671 = vmatpush1.bf16.msra.mxu0 %v1972
    %2672 = vmatprep.subr.bf16.mxu0 %v1969
    %2673 = vmatpush1.bf16.msra.mxu0 %v1968
    %2674 = vmatprep.subr.bf16.mxu0 %v1965
    %2675 = vmatpush1.bf16.msra.mxu0 %v1964
    %2676 = vmatprep.subr.bf16.mxu0 %v2025
    %2677 = vmatpush2.bf16.msra.mxu0 %v2024
    %2678 = vmatprep.subr.bf16.mxu0 %v2021
    %2679 = vmatpush2.bf16.msra.mxu0 %v2020
    %2680 = vmatprep.subr.bf16.mxu0 %v2017
    %2681 = vmatpush2.bf16.msra.mxu0 %v2016
    %2682 = vmatprep.subr.bf16.mxu0 %v2013
    %2683 = vmatpush2.bf16.msra.mxu0 %v2012
    %2684 = vmatprep.subr.bf16.mxu0 %v2009
    %2685 = vmatpush2.bf16.msra.mxu0 %v2008
    %2686 = vmatprep.subr.bf16.mxu0 %v2005
    %2687 = vmatpush2.bf16.msra.mxu0 %v2004
    %2688 = vmatprep.subr.bf16.mxu0 %v2001
    %2689 = vmatpush2.bf16.msra.mxu0 %v2000
    %2690 = vmatprep.subr.bf16.mxu0 %v1997
    %2691 = vmatpush2.bf16.msra.mxu0 %v1996
    %2692 = vmatprep.mubr.bf16.mxu0 %v506
    %2693 = vmatmul.mubr.bf16.gmra.mxu0 %v505
    %v2694 = vpop.f32.mrf.mxu0
    %v2695 = vadd.f32 %v2654, %v2694
    %v2696 = vpop.f32.mrf.mxu0
    %v2697 = vadd.f32 %v2656, %v2696
    %v2698 = vpop.f32.mrf.mxu0
    %v2699 = vpop.f32.mrf.mxu0
    %2700 = vdwg.mxu0
    %2701 = vmatprep.subr.bf16.mxu0 %v2057
    %2702 = vmatpush1.bf16.msra.mxu0 %v2056
    %2703 = vmatprep.subr.bf16.mxu0 %v2053
    %2704 = vmatpush1.bf16.msra.mxu0 %v2052
    %2705 = vmatprep.subr.bf16.mxu0 %v2049
    %2706 = vmatpush1.bf16.msra.mxu0 %v2048
    %2707 = vmatprep.subr.bf16.mxu0 %v2045
    %2708 = vmatpush1.bf16.msra.mxu0 %v2044
    %2709 = vmatprep.subr.bf16.mxu0 %v2041
    %2710 = vmatpush1.bf16.msra.mxu0 %v2040
    %2711 = vmatprep.subr.bf16.mxu0 %v2037
    %2712 = vmatpush1.bf16.msra.mxu0 %v2036
    %2713 = vmatprep.subr.bf16.mxu0 %v2033
    %2714 = vmatpush1.bf16.msra.mxu0 %v2032
    %2715 = vmatprep.subr.bf16.mxu0 %v2029
    %2716 = vmatpush1.bf16.msra.mxu0 %v2028
    %2717 = vmatprep.subr.bf16.mxu0 %v2089
    %2718 = vmatpush2.bf16.msra.mxu0 %v2088
    %2719 = vmatprep.subr.bf16.mxu0 %v2085
    %2720 = vmatpush2.bf16.msra.mxu0 %v2084
    %2721 = vmatprep.subr.bf16.mxu0 %v2081
    %2722 = vmatpush2.bf16.msra.mxu0 %v2080
    %2723 = vmatprep.subr.bf16.mxu0 %v2077
    %2724 = vmatpush2.bf16.msra.mxu0 %v2076
    %2725 = vmatprep.subr.bf16.mxu0 %v2073
    %2726 = vmatpush2.bf16.msra.mxu0 %v2072
    %2727 = vmatprep.subr.bf16.mxu0 %v2069
    %2728 = vmatpush2.bf16.msra.mxu0 %v2068
    %2729 = vmatprep.subr.bf16.mxu0 %v2065
    %2730 = vmatpush2.bf16.msra.mxu0 %v2064
    %2731 = vmatprep.subr.bf16.mxu0 %v2061
    %2732 = vmatpush2.bf16.msra.mxu0 %v2060
    %2733 = vmatprep.mubr.bf16.mxu0 %v508
    %2734 = vmatmul.mubr.bf16.gmra.mxu0 %v507
    %v2735 = vpop.f32.mrf.mxu0
    %v2736 = vadd.f32 %v2695, %v2735
    %v2737 = vpop.f32.mrf.mxu0
    %v2738 = vadd.f32 %v2697, %v2737
    %v2739 = vpop.f32.mrf.mxu0
    %v2740 = vpop.f32.mrf.mxu0
    %2741 = vdwg.mxu0
    %2742 = vmatprep.subr.bf16.mxu0 0
    %2743 = vmatpush1.bf16.msra.mxu0 0
    %2744 = vmatprep.subr.bf16.mxu0 0
    %2745 = vmatpush1.bf16.msra.mxu0 0
    %2746 = vmatprep.subr.bf16.mxu0 0
    %2747 = vmatpush1.bf16.msra.mxu0 0
    %2748 = vmatprep.subr.bf16.mxu0 0
    %2749 = vmatpush1.bf16.msra.mxu0 0
    %2750 = vmatprep.subr.bf16.mxu0 0
    %2751 = vmatpush1.bf16.msra.mxu0 0
    %2752 = vmatprep.subr.bf16.mxu0 0
    %2753 = vmatpush1.bf16.msra.mxu0 0
    %2754 = vmatprep.subr.bf16.mxu0 %v2097
    %2755 = vmatpush1.bf16.msra.mxu0 %v2096
    %2756 = vmatprep.subr.bf16.mxu0 %v2093
    %2757 = vmatpush1.bf16.msra.mxu0 %v2092
    %2758 = vmatprep.subr.bf16.mxu0 0
    %2759 = vmatpush2.bf16.msra.mxu0 0
    %2760 = vmatprep.subr.bf16.mxu0 0
    %2761 = vmatpush2.bf16.msra.mxu0 0
    %2762 = vmatprep.subr.bf16.mxu0 0
    %2763 = vmatpush2.bf16.msra.mxu0 0
    %2764 = vmatprep.subr.bf16.mxu0 0
    %2765 = vmatpush2.bf16.msra.mxu0 0
    %2766 = vmatprep.subr.bf16.mxu0 0
    %2767 = vmatpush2.bf16.msra.mxu0 0
    %2768 = vmatprep.subr.bf16.mxu0 0
    %2769 = vmatpush2.bf16.msra.mxu0 0
    %2770 = vmatprep.subr.bf16.mxu0 0
    %2771 = vmatpush2.bf16.msra.mxu0 0
    %2772 = vmatprep.subr.bf16.mxu0 0
    %2773 = vmatpush2.bf16.msra.mxu0 0
    %2774 = vmatprep.mubr.bf16.mxu0 0
    %2775 = vmatmul.mubr.bf16.gmra.mxu0 %v2494
    %v2776 = vpop.f32.mrf.mxu0
    %v2777 = vadd.f32 %v2736, %v2776
    %v2778 = vpop.f32.mrf.mxu0
    %v2779 = vadd.f32 %v2738, %v2778
    %v2780 = vpop.f32.mrf.mxu0
    %v2781 = vpop.f32.mrf.mxu0
    %2782 = vdwg.mxu0
    %2783 = vmatprep.subr.bf16.mxu0 %v1739
    %2784 = vmatpush1.bf16.msra.mxu0 %v1738
    %2785 = vmatprep.subr.bf16.mxu0 %v1735
    %2786 = vmatpush1.bf16.msra.mxu0 %v1734
    %2787 = vmatprep.subr.bf16.mxu0 %v1731
    %2788 = vmatpush1.bf16.msra.mxu0 %v1730
    %2789 = vmatprep.subr.bf16.mxu0 %v1727
    %2790 = vmatpush1.bf16.msra.mxu0 %v1726
    %2791 = vmatprep.subr.bf16.mxu0 %v1723
    %2792 = vmatpush1.bf16.msra.mxu0 %v1722
    %2793 = vmatprep.subr.bf16.mxu0 %v1719
    %2794 = vmatpush1.bf16.msra.mxu0 %v1718
    %2795 = vmatprep.subr.bf16.mxu0 %v1715
    %2796 = vmatpush1.bf16.msra.mxu0 %v1714
    %2797 = vmatprep.subr.bf16.mxu0 %v1711
    %2798 = vmatpush1.bf16.msra.mxu0 %v1710
    %2799 = vmatprep.subr.bf16.mxu0 %v1771
    %2800 = vmatpush2.bf16.msra.mxu0 %v1770
    %2801 = vmatprep.subr.bf16.mxu0 %v1767
    %2802 = vmatpush2.bf16.msra.mxu0 %v1766
    %2803 = vmatprep.subr.bf16.mxu0 %v1763
    %2804 = vmatpush2.bf16.msra.mxu0 %v1762
    %2805 = vmatprep.subr.bf16.mxu0 %v1759
    %2806 = vmatpush2.bf16.msra.mxu0 %v1758
    %2807 = vmatprep.subr.bf16.mxu0 %v1755
    %2808 = vmatpush2.bf16.msra.mxu0 %v1754
    %2809 = vmatprep.subr.bf16.mxu0 %v1751
    %2810 = vmatpush2.bf16.msra.mxu0 %v1750
    %2811 = vmatprep.subr.bf16.mxu0 %v1747
    %2812 = vmatpush2.bf16.msra.mxu0 %v1746
    %2813 = vmatprep.subr.bf16.mxu0 %v1743
    %2814 = vmatpush2.bf16.msra.mxu0 %v1742
    %2815 = vmatprep.mubr.bf16.mxu0 %v498
    %2816 = vmatmul.mubr.bf16.gmra.mxu0 %v497
    %v2817 = vpop.f32.mrf.mxu0
    %v2818 = vadd.f32 %v523, %v2817
    %v2819 = vpop.f32.mrf.mxu0
    %v2820 = vadd.f32 %v527, %v2819
    %v2821 = vpop.f32.mrf.mxu0
    %v2822 = vpop.f32.mrf.mxu0
    %2823 = vdwg.mxu0
    %2824 = vmatprep.subr.bf16.mxu0 %v1803
    %2825 = vmatpush1.bf16.msra.mxu0 %v1802
    %2826 = vmatprep.subr.bf16.mxu0 %v1799
    %2827 = vmatpush1.bf16.msra.mxu0 %v1798
    %2828 = vmatprep.subr.bf16.mxu0 %v1795
    %2829 = vmatpush1.bf16.msra.mxu0 %v1794
    %2830 = vmatprep.subr.bf16.mxu0 %v1791
    %2831 = vmatpush1.bf16.msra.mxu0 %v1790
    %2832 = vmatprep.subr.bf16.mxu0 %v1787
    %2833 = vmatpush1.bf16.msra.mxu0 %v1786
    %2834 = vmatprep.subr.bf16.mxu0 %v1783
    %2835 = vmatpush1.bf16.msra.mxu0 %v1782
    %2836 = vmatprep.subr.bf16.mxu0 %v1779
    %2837 = vmatpush1.bf16.msra.mxu0 %v1778
    %2838 = vmatprep.subr.bf16.mxu0 %v1775
    %2839 = vmatpush1.bf16.msra.mxu0 %v1774
    %2840 = vmatprep.subr.bf16.mxu0 %v1835
    %2841 = vmatpush2.bf16.msra.mxu0 %v1834
    %2842 = vmatprep.subr.bf16.mxu0 %v1831
    %2843 = vmatpush2.bf16.msra.mxu0 %v1830
    %2844 = vmatprep.subr.bf16.mxu0 %v1827
    %2845 = vmatpush2.bf16.msra.mxu0 %v1826
    %2846 = vmatprep.subr.bf16.mxu0 %v1823
    %2847 = vmatpush2.bf16.msra.mxu0 %v1822
    %2848 = vmatprep.subr.bf16.mxu0 %v1819
    %2849 = vmatpush2.bf16.msra.mxu0 %v1818
    %2850 = vmatprep.subr.bf16.mxu0 %v1815
    %2851 = vmatpush2.bf16.msra.mxu0 %v1814
    %2852 = vmatprep.subr.bf16.mxu0 %v1811
    %2853 = vmatpush2.bf16.msra.mxu0 %v1810
    %2854 = vmatprep.subr.bf16.mxu0 %v1807
    %2855 = vmatpush2.bf16.msra.mxu0 %v1806
    %2856 = vmatprep.mubr.bf16.mxu0 %v500
    %2857 = vmatmul.mubr.bf16.gmra.mxu0 %v499
    %v2858 = vpop.f32.mrf.mxu0
    %v2859 = vadd.f32 %v2818, %v2858
    %v2860 = vpop.f32.mrf.mxu0
    %v2861 = vadd.f32 %v2820, %v2860
    %v2862 = vpop.f32.mrf.mxu0
    %v2863 = vpop.f32.mrf.mxu0
    %2864 = vdwg.mxu0
    %2865 = vmatprep.subr.bf16.mxu0 %v1867
    %2866 = vmatpush1.bf16.msra.mxu0 %v1866
    %2867 = vmatprep.subr.bf16.mxu0 %v1863
    %2868 = vmatpush1.bf16.msra.mxu0 %v1862
    %2869 = vmatprep.subr.bf16.mxu0 %v1859
    %2870 = vmatpush1.bf16.msra.mxu0 %v1858
    %2871 = vmatprep.subr.bf16.mxu0 %v1855
    %2872 = vmatpush1.bf16.msra.mxu0 %v1854
    %2873 = vmatprep.subr.bf16.mxu0 %v1851
    %2874 = vmatpush1.bf16.msra.mxu0 %v1850
    %2875 = vmatprep.subr.bf16.mxu0 %v1847
    %2876 = vmatpush1.bf16.msra.mxu0 %v1846
    %2877 = vmatprep.subr.bf16.mxu0 %v1843
    %2878 = vmatpush1.bf16.msra.mxu0 %v1842
    %2879 = vmatprep.subr.bf16.mxu0 %v1839
    %2880 = vmatpush1.bf16.msra.mxu0 %v1838
    %2881 = vmatprep.subr.bf16.mxu0 %v1899
    %2882 = vmatpush2.bf16.msra.mxu0 %v1898
    %2883 = vmatprep.subr.bf16.mxu0 %v1895
    %2884 = vmatpush2.bf16.msra.mxu0 %v1894
    %2885 = vmatprep.subr.bf16.mxu0 %v1891
    %2886 = vmatpush2.bf16.msra.mxu0 %v1890
    %2887 = vmatprep.subr.bf16.mxu0 %v1887
    %2888 = vmatpush2.bf16.msra.mxu0 %v1886
    %2889 = vmatprep.subr.bf16.mxu0 %v1883
    %2890 = vmatpush2.bf16.msra.mxu0 %v1882
    %2891 = vmatprep.subr.bf16.mxu0 %v1879
    %2892 = vmatpush2.bf16.msra.mxu0 %v1878
    %2893 = vmatprep.subr.bf16.mxu0 %v1875
    %2894 = vmatpush2.bf16.msra.mxu0 %v1874
    %2895 = vmatprep.subr.bf16.mxu0 %v1871
    %2896 = vmatpush2.bf16.msra.mxu0 %v1870
    %2897 = vmatprep.mubr.bf16.mxu0 %v502
    %2898 = vmatmul.mubr.bf16.gmra.mxu0 %v501
    %v2899 = vpop.f32.mrf.mxu0
    %v2900 = vadd.f32 %v2859, %v2899
    %v2901 = vpop.f32.mrf.mxu0
    %v2902 = vadd.f32 %v2861, %v2901
    %v2903 = vpop.f32.mrf.mxu0
    %v2904 = vpop.f32.mrf.mxu0
    %2905 = vdwg.mxu0
    %2906 = vmatprep.subr.bf16.mxu0 %v1931
    %2907 = vmatpush1.bf16.msra.mxu0 %v1930
    %2908 = vmatprep.subr.bf16.mxu0 %v1927
    %2909 = vmatpush1.bf16.msra.mxu0 %v1926
    %2910 = vmatprep.subr.bf16.mxu0 %v1923
    %2911 = vmatpush1.bf16.msra.mxu0 %v1922
    %2912 = vmatprep.subr.bf16.mxu0 %v1919
    %2913 = vmatpush1.bf16.msra.mxu0 %v1918
    %2914 = vmatprep.subr.bf16.mxu0 %v1915
    %2915 = vmatpush1.bf16.msra.mxu0 %v1914
    %2916 = vmatprep.subr.bf16.mxu0 %v1911
    %2917 = vmatpush1.bf16.msra.mxu0 %v1910
    %2918 = vmatprep.subr.bf16.mxu0 %v1907
    %2919 = vmatpush1.bf16.msra.mxu0 %v1906
    %2920 = vmatprep.subr.bf16.mxu0 %v1903
    %2921 = vmatpush1.bf16.msra.mxu0 %v1902
    %2922 = vmatprep.subr.bf16.mxu0 %v1963
    %2923 = vmatpush2.bf16.msra.mxu0 %v1962
    %2924 = vmatprep.subr.bf16.mxu0 %v1959
    %2925 = vmatpush2.bf16.msra.mxu0 %v1958
    %2926 = vmatprep.subr.bf16.mxu0 %v1955
    %2927 = vmatpush2.bf16.msra.mxu0 %v1954
    %2928 = vmatprep.subr.bf16.mxu0 %v1951
    %2929 = vmatpush2.bf16.msra.mxu0 %v1950
    %2930 = vmatprep.subr.bf16.mxu0 %v1947
    %2931 = vmatpush2.bf16.msra.mxu0 %v1946
    %2932 = vmatprep.subr.bf16.mxu0 %v1943
    %2933 = vmatpush2.bf16.msra.mxu0 %v1942
    %2934 = vmatprep.subr.bf16.mxu0 %v1939
    %2935 = vmatpush2.bf16.msra.mxu0 %v1938
    %2936 = vmatprep.subr.bf16.mxu0 %v1935
    %2937 = vmatpush2.bf16.msra.mxu0 %v1934
    %2938 = vmatprep.mubr.bf16.mxu0 %v504
    %2939 = vmatmul.mubr.bf16.gmra.mxu0 %v503
    %v2940 = vpop.f32.mrf.mxu0
    %v2941 = vadd.f32 %v2900, %v2940
    %v2942 = vpop.f32.mrf.mxu0
    %v2943 = vadd.f32 %v2902, %v2942
    %v2944 = vpop.f32.mrf.mxu0
    %v2945 = vpop.f32.mrf.mxu0
    %2946 = vdwg.mxu0
    %2947 = vmatprep.subr.bf16.mxu0 %v1995
    %2948 = vmatpush1.bf16.msra.mxu0 %v1994
    %2949 = vmatprep.subr.bf16.mxu0 %v1991
    %2950 = vmatpush1.bf16.msra.mxu0 %v1990
    %2951 = vmatprep.subr.bf16.mxu0 %v1987
    %2952 = vmatpush1.bf16.msra.mxu0 %v1986
    %2953 = vmatprep.subr.bf16.mxu0 %v1983
    %2954 = vmatpush1.bf16.msra.mxu0 %v1982
    %2955 = vmatprep.subr.bf16.mxu0 %v1979
    %2956 = vmatpush1.bf16.msra.mxu0 %v1978
    %2957 = vmatprep.subr.bf16.mxu0 %v1975
    %2958 = vmatpush1.bf16.msra.mxu0 %v1974
    %2959 = vmatprep.subr.bf16.mxu0 %v1971
    %2960 = vmatpush1.bf16.msra.mxu0 %v1970
    %2961 = vmatprep.subr.bf16.mxu0 %v1967
    %2962 = vmatpush1.bf16.msra.mxu0 %v1966
    %2963 = vmatprep.subr.bf16.mxu0 %v2027
    %2964 = vmatpush2.bf16.msra.mxu0 %v2026
    %2965 = vmatprep.subr.bf16.mxu0 %v2023
    %2966 = vmatpush2.bf16.msra.mxu0 %v2022
    %2967 = vmatprep.subr.bf16.mxu0 %v2019
    %2968 = vmatpush2.bf16.msra.mxu0 %v2018
    %2969 = vmatprep.subr.bf16.mxu0 %v2015
    %2970 = vmatpush2.bf16.msra.mxu0 %v2014
    %2971 = vmatprep.subr.bf16.mxu0 %v2011
    %2972 = vmatpush2.bf16.msra.mxu0 %v2010
    %2973 = vmatprep.subr.bf16.mxu0 %v2007
    %2974 = vmatpush2.bf16.msra.mxu0 %v2006
    %2975 = vmatprep.subr.bf16.mxu0 %v2003
    %2976 = vmatpush2.bf16.msra.mxu0 %v2002
    %2977 = vmatprep.subr.bf16.mxu0 %v1999
    %2978 = vmatpush2.bf16.msra.mxu0 %v1998
    %2979 = vmatprep.mubr.bf16.mxu0 %v506
    %2980 = vmatmul.mubr.bf16.gmra.mxu0 %v505
    %v2981 = vpop.f32.mrf.mxu0
    %v2982 = vadd.f32 %v2941, %v2981
    %v2983 = vpop.f32.mrf.mxu0
    %v2984 = vadd.f32 %v2943, %v2983
    %v2985 = vpop.f32.mrf.mxu0
    %v2986 = vpop.f32.mrf.mxu0
    %2987 = vdwg.mxu0
    %2988 = vmatprep.subr.bf16.mxu0 %v2059
    %2989 = vmatpush1.bf16.msra.mxu0 %v2058
    %2990 = vmatprep.subr.bf16.mxu0 %v2055
    %2991 = vmatpush1.bf16.msra.mxu0 %v2054
    %2992 = vmatprep.subr.bf16.mxu0 %v2051
    %2993 = vmatpush1.bf16.msra.mxu0 %v2050
    %2994 = vmatprep.subr.bf16.mxu0 %v2047
    %2995 = vmatpush1.bf16.msra.mxu0 %v2046
    %2996 = vmatprep.subr.bf16.mxu0 %v2043
    %2997 = vmatpush1.bf16.msra.mxu0 %v2042
    %2998 = vmatprep.subr.bf16.mxu0 %v2039
    %2999 = vmatpush1.bf16.msra.mxu0 %v2038
    %3000 = vmatprep.subr.bf16.mxu0 %v2035
    %3001 = vmatpush1.bf16.msra.mxu0 %v2034
    %3002 = vmatprep.subr.bf16.mxu0 %v2031
    %3003 = vmatpush1.bf16.msra.mxu0 %v2030
    %3004 = vmatprep.subr.bf16.mxu0 %v2091
    %3005 = vmatpush2.bf16.msra.mxu0 %v2090
    %3006 = vmatprep.subr.bf16.mxu0 %v2087
    %3007 = vmatpush2.bf16.msra.mxu0 %v2086
    %3008 = vmatprep.subr.bf16.mxu0 %v2083
    %3009 = vmatpush2.bf16.msra.mxu0 %v2082
    %3010 = vmatprep.subr.bf16.mxu0 %v2079
    %3011 = vmatpush2.bf16.msra.mxu0 %v2078
    %3012 = vmatprep.subr.bf16.mxu0 %v2075
    %3013 = vmatpush2.bf16.msra.mxu0 %v2074
    %3014 = vmatprep.subr.bf16.mxu0 %v2071
    %3015 = vmatpush2.bf16.msra.mxu0 %v2070
    %3016 = vmatprep.subr.bf16.mxu0 %v2067
    %3017 = vmatpush2.bf16.msra.mxu0 %v2066
    %3018 = vmatprep.subr.bf16.mxu0 %v2063
    %3019 = vmatpush2.bf16.msra.mxu0 %v2062
    %3020 = vmatprep.mubr.bf16.mxu0 %v508
    %3021 = vmatmul.mubr.bf16.gmra.mxu0 %v507
    %v3022 = vpop.f32.mrf.mxu0
    %v3023 = vadd.f32 %v2982, %v3022
    %v3024 = vpop.f32.mrf.mxu0
    %v3025 = vadd.f32 %v2984, %v3024
    %v3026 = vpop.f32.mrf.mxu0
    %v3027 = vpop.f32.mrf.mxu0
    %3028 = vdwg.mxu0
    %3029 = vmatprep.subr.bf16.mxu0 0
    %3030 = vmatpush1.bf16.msra.mxu0 0
    %3031 = vmatprep.subr.bf16.mxu0 0
    %3032 = vmatpush1.bf16.msra.mxu0 0
    %3033 = vmatprep.subr.bf16.mxu0 0
    %3034 = vmatpush1.bf16.msra.mxu0 0
    %3035 = vmatprep.subr.bf16.mxu0 0
    %3036 = vmatpush1.bf16.msra.mxu0 0
    %3037 = vmatprep.subr.bf16.mxu0 0
    %3038 = vmatpush1.bf16.msra.mxu0 0
    %3039 = vmatprep.subr.bf16.mxu0 0
    %3040 = vmatpush1.bf16.msra.mxu0 0
    %3041 = vmatprep.subr.bf16.mxu0 %v2099
    %3042 = vmatpush1.bf16.msra.mxu0 %v2098
    %3043 = vmatprep.subr.bf16.mxu0 %v2095
    %3044 = vmatpush1.bf16.msra.mxu0 %v2094
    %3045 = vmatprep.subr.bf16.mxu0 0
    %3046 = vmatpush2.bf16.msra.mxu0 0
    %3047 = vmatprep.subr.bf16.mxu0 0
    %3048 = vmatpush2.bf16.msra.mxu0 0
    %3049 = vmatprep.subr.bf16.mxu0 0
    %3050 = vmatpush2.bf16.msra.mxu0 0
    %3051 = vmatprep.subr.bf16.mxu0 0
    %3052 = vmatpush2.bf16.msra.mxu0 0
    %3053 = vmatprep.subr.bf16.mxu0 0
    %3054 = vmatpush2.bf16.msra.mxu0 0
    %3055 = vmatprep.subr.bf16.mxu0 0
    %3056 = vmatpush2.bf16.msra.mxu0 0
    %3057 = vmatprep.subr.bf16.mxu0 0
    %3058 = vmatpush2.bf16.msra.mxu0 0
    %3059 = vmatprep.subr.bf16.mxu0 0
    %3060 = vmatpush2.bf16.msra.mxu0 0
    %3061 = vmatprep.mubr.bf16.mxu0 0
    %3062 = vmatmul.mubr.bf16.gmra.mxu0 %v2494
    %v3063 = vpop.f32.mrf.mxu0
    %v3064 = vadd.f32 %v3023, %v3063
    %v3065 = vpop.f32.mrf.mxu0
    %v3066 = vadd.f32 %v3025, %v3065
    %v3067 = vpop.f32.mrf.mxu0
    %v3068 = vpop.f32.mrf.mxu0
    %3069 = vdwg.mxu0
    %v3070 = vmax.f32 %v2777, 0.0
    %v3071 = vmax.f32 %v2779, 0.0
    %v3072 = vmax.f32 %v3064, 0.0
    %v3073 = vmax.f32 %v3066, 0.0
    %v3078 = vcombine.low %v3070, %v3071
    %v3079 = vcombine.low %v3072, %v3073
    %v3081 = vunpack.c.l.s4 1983009808
    %v3082 = vunpack.c.0.s8 %v3081
    %v3083 = vlaneseq
    %v3084 = vshrl.u32 %v3083, 7
    %v3085 = vsub.s32 %v3082, %v3084
    %v3086 = vrot.slane %v3078, %v3085
    %v3088 = vunpack.c.l.s4 1983009808
    %v3089 = vunpack.c.0.s8 %v3088
    %v3090 = vlaneseq
    %v3091 = vshrl.u32 %v3090, 7
    %v3092 = vsub.s32 %v3089, %v3091
    %v3093 = vrot.slane %v3079, %v3092
    %v3094 = vcombine.low %v3086, %v3093
    %3096 = vst [vmem:[#allocation3] sm:$0xff] %v3094
    %v3097 = vld [vmem:[%s3] sm:$0xff]
    %v3098 = vld [vmem:[%s3 + $0x8] sm:$0xff]
    %v3099 = vld [vmem:[%s3 + $0x10] sm:$0xff]
    %v3100 = vld [vmem:[%s3 + $0x18] sm:$0xff]
    %v3101 = vld [vmem:[%s3 + $0x20] sm:$0xff]
    %v3102 = vld [vmem:[%s3 + $0x28] sm:$0xff]
    %v3103 = vld [vmem:[%s3 + $0x30] sm:$0xff]
    %v3104 = vld [vmem:[%s3 + $0x38] sm:$0xff]
    %v3105 = vld [vmem:[%s3 + $0x40] sm:$0xff]
    %v3106 = vld [vmem:[%s3 + $0x48] sm:$0xff]
    %v3107 = vld [vmem:[%s3 + $0x50] sm:$0xff]
    %v3108 = vld [vmem:[%s3 + $0x58] sm:$0xff]
    %v3109 = vld [vmem:[%s3 + $0x60] sm:$0xff]
    %v3110 = vld [vmem:[%s3 + $0x68] sm:$0xff]
    %v3111 = vld [vmem:[%s3 + $0x70] sm:$0xff]
    %v3112 = vld [vmem:[%s3 + $0x78] sm:$0xff]
    %v3113 = vld [vmem:[%s3 + $0x80] sm:$0xff]
    %v3114 = vld [vmem:[%s3 + $0x88] sm:$0xff]
    %v3115 = vld [vmem:[%s3 + $0x90] sm:$0xff]
    %v3116 = vld [vmem:[%s3 + $0x98] sm:$0xff]
    %v3117 = vld [vmem:[%s3 + $0xa0] sm:$0xff]
    %v3118 = vld [vmem:[%s3 + $0xa8] sm:$0xff]
    %v3119 = vld [vmem:[%s3 + $0xb0] sm:$0xff]
    %v3120 = vld [vmem:[%s3 + $0xb8] sm:$0xff]
    %v3121 = vld [vmem:[%s3 + $0xc0] sm:$0xff]
    %v3122 = vld [vmem:[%s3 + $0xc8] sm:$0xff]
    %v3123 = vld [vmem:[%s3 + $0xd0] sm:$0xff]
    %v3124 = vld [vmem:[%s3 + $0xd8] sm:$0xff]
    %v3125 = vld [vmem:[%s3 + $0xe0] sm:$0xff]
    %v3126 = vld [vmem:[%s3 + $0xe8] sm:$0xff]
    %v3127 = vld [vmem:[%s3 + $0xf0] sm:$0xff]
    %v3128 = vld [vmem:[%s3 + $0xf8] sm:$0xff]
    %v3129 = vld [vmem:[%s3 + $0x100] sm:$0xff]
    %v3130 = vld [vmem:[%s3 + $0x108] sm:$0xff]
    %v3131 = vld [vmem:[%s3 + $0x110] sm:$0xff]
    %v3132 = vld [vmem:[%s3 + $0x118] sm:$0xff]
    %v3133 = vld [vmem:[%s3 + $0x120] sm:$0xff]
    %v3134 = vld [vmem:[%s3 + $0x128] sm:$0xff]
    %v3135 = vld [vmem:[%s3 + $0x130] sm:$0xff]
    %v3136 = vld [vmem:[%s3 + $0x138] sm:$0xff]
    %v3137 = vld [vmem:[%s3 + $0x140] sm:$0xff]
    %v3138 = vld [vmem:[%s3 + $0x148] sm:$0xff]
    %v3139 = vld [vmem:[%s3 + $0x150] sm:$0xff]
    %v3140 = vld [vmem:[%s3 + $0x158] sm:$0xff]
    %v3141 = vld [vmem:[%s3 + $0x160] sm:$0xff]
    %v3142 = vld [vmem:[%s3 + $0x168] sm:$0xff]
    %v3143 = vld [vmem:[%s3 + $0x170] sm:$0xff]
    %v3144 = vld [vmem:[%s3 + $0x178] sm:$0xff]
    %v3145 = vld [vmem:[%s3 + $0x180] sm:$0xff]
    %v3146 = vld [vmem:[%s3 + $0x188] sm:$0xff]
    %v3147 = vld [vmem:[%s3 + $0x190] sm:$0xff]
    %v3148 = vld [vmem:[%s3 + $0x198] sm:$0xff]
    %v3149 = vld [vmem:[%s3 + $0x1a0] sm:$0xff]
    %v3150 = vld [vmem:[%s3 + $0x1a8] sm:$0xff]
    %v3151 = vld [vmem:[%s3 + $0x1b0] sm:$0xff]
    %v3152 = vld [vmem:[%s3 + $0x1b8] sm:$0xff]
    %v3153 = vld [vmem:[%s3 + $0x1c0] sm:$0xff]
    %v3154 = vld [vmem:[%s3 + $0x1c8] sm:$0xff]
    %v3155 = vld [vmem:[%s3 + $0x1d0] sm:$0xff]
    %v3156 = vld [vmem:[%s3 + $0x1d8] sm:$0xff]
    %v3157 = vld [vmem:[%s3 + $0x1e0] sm:$0xff]
    %v3158 = vld [vmem:[%s3 + $0x1e8] sm:$0xff]
    %v3159 = vld [vmem:[%s3 + $0x1f0] sm:$0xff]
    %v3160 = vld [vmem:[%s3 + $0x1f8] sm:$0xff]
    %v3161 = vld [vmem:[#allocation2] sm:$0x1]
    %v3163 = vlaneseq
    %v3164 = vshrl.u32 %v3163, 7
    %v3165 = vsub.s32 0, %v3164
    %v3166 = vrot.slane %v3161, %v3165
    %3168 = vmatprep.subr.mxu0 0.0
    %3169 = vmatpush1.msra.mxu0 %v3112
    %3170 = vmatprep.subr.mxu0 0.0
    %3171 = vmatpush1.msra.mxu0 %v3111
    %3172 = vmatprep.subr.mxu0 0.0
    %3173 = vmatpush1.msra.mxu0 %v3110
    %3174 = vmatprep.subr.mxu0 0.0
    %3175 = vmatpush1.msra.mxu0 %v3109
    %3176 = vmatprep.subr.mxu0 0.0
    %3177 = vmatpush1.msra.mxu0 %v3108
    %3178 = vmatprep.subr.mxu0 0.0
    %3179 = vmatpush1.msra.mxu0 %v3107
    %3180 = vmatprep.subr.mxu0 0.0
    %3181 = vmatpush1.msra.mxu0 %v3106
    %3182 = vmatprep.subr.mxu0 0.0
    %3183 = vmatpush1.msra.mxu0 %v3105
    %3184 = vmatprep.subr.mxu0 0.0
    %3185 = vmatpush1.msra.mxu0 %v3104
    %3186 = vmatprep.subr.mxu0 0.0
    %3187 = vmatpush1.msra.mxu0 %v3103
    %3188 = vmatprep.subr.mxu0 0.0
    %3189 = vmatpush1.msra.mxu0 %v3102
    %3190 = vmatprep.subr.mxu0 0.0
    %3191 = vmatpush1.msra.mxu0 %v3101
    %3192 = vmatprep.subr.mxu0 0.0
    %3193 = vmatpush1.msra.mxu0 %v3100
    %3194 = vmatprep.subr.mxu0 0.0
    %3195 = vmatpush1.msra.mxu0 %v3099
    %3196 = vmatprep.subr.mxu0 0.0
    %3197 = vmatpush1.msra.mxu0 %v3098
    %3198 = vmatprep.subr.mxu0 0.0
    %3199 = vmatpush1.msra.mxu0 %v3097
    %3200 = vmatprep.subr.mxu0 0.0
    %3201 = vmatpush2.msra.mxu0 %v3128
    %3202 = vmatprep.subr.mxu0 0.0
    %3203 = vmatpush2.msra.mxu0 %v3127
    %3204 = vmatprep.subr.mxu0 0.0
    %3205 = vmatpush2.msra.mxu0 %v3126
    %3206 = vmatprep.subr.mxu0 0.0
    %3207 = vmatpush2.msra.mxu0 %v3125
    %3208 = vmatprep.subr.mxu0 0.0
    %3209 = vmatpush2.msra.mxu0 %v3124
    %3210 = vmatprep.subr.mxu0 0.0
    %3211 = vmatpush2.msra.mxu0 %v3123
    %3212 = vmatprep.subr.mxu0 0.0
    %3213 = vmatpush2.msra.mxu0 %v3122
    %3214 = vmatprep.subr.mxu0 0.0
    %3215 = vmatpush2.msra.mxu0 %v3121
    %3216 = vmatprep.subr.mxu0 0.0
    %3217 = vmatpush2.msra.mxu0 %v3120
    %3218 = vmatprep.subr.mxu0 0.0
    %3219 = vmatpush2.msra.mxu0 %v3119
    %3220 = vmatprep.subr.mxu0 0.0
    %3221 = vmatpush2.msra.mxu0 %v3118
    %3222 = vmatprep.subr.mxu0 0.0
    %3223 = vmatpush2.msra.mxu0 %v3117
    %3224 = vmatprep.subr.mxu0 0.0
    %3225 = vmatpush2.msra.mxu0 %v3116
    %3226 = vmatprep.subr.mxu0 0.0
    %3227 = vmatpush2.msra.mxu0 %v3115
    %3228 = vmatprep.subr.mxu0 0.0
    %3229 = vmatpush2.msra.mxu0 %v3114
    %3230 = vmatprep.subr.mxu0 0.0
    %3231 = vmatpush2.msra.mxu0 %v3113
    %3232 = vmatprep.mubr.f32.mxu0 %v3071
    %3233 = vmatmul.mubr.f32.gmra.mxu0 %v3070
    %v3234 = vpop.f32.mrf.mxu0
    %v3235 = vadd.f32 %v3166, %v3234
    %v3236 = vpop.f32.mrf.mxu0
    %3237 = vdwg.mxu0
    %3238 = vmatprep.subr.mxu0 0.0
    %3239 = vmatpush1.msra.mxu0 %v3144
    %3240 = vmatprep.subr.mxu0 0.0
    %3241 = vmatpush1.msra.mxu0 %v3143
    %3242 = vmatprep.subr.mxu0 0.0
    %3243 = vmatpush1.msra.mxu0 %v3142
    %3244 = vmatprep.subr.mxu0 0.0
    %3245 = vmatpush1.msra.mxu0 %v3141
    %3246 = vmatprep.subr.mxu0 0.0
    %3247 = vmatpush1.msra.mxu0 %v3140
    %3248 = vmatprep.subr.mxu0 0.0
    %3249 = vmatpush1.msra.mxu0 %v3139
    %3250 = vmatprep.subr.mxu0 0.0
    %3251 = vmatpush1.msra.mxu0 %v3138
    %3252 = vmatprep.subr.mxu0 0.0
    %3253 = vmatpush1.msra.mxu0 %v3137
    %3254 = vmatprep.subr.mxu0 0.0
    %3255 = vmatpush1.msra.mxu0 %v3136
    %3256 = vmatprep.subr.mxu0 0.0
    %3257 = vmatpush1.msra.mxu0 %v3135
    %3258 = vmatprep.subr.mxu0 0.0
    %3259 = vmatpush1.msra.mxu0 %v3134
    %3260 = vmatprep.subr.mxu0 0.0
    %3261 = vmatpush1.msra.mxu0 %v3133
    %3262 = vmatprep.subr.mxu0 0.0
    %3263 = vmatpush1.msra.mxu0 %v3132
    %3264 = vmatprep.subr.mxu0 0.0
    %3265 = vmatpush1.msra.mxu0 %v3131
    %3266 = vmatprep.subr.mxu0 0.0
    %3267 = vmatpush1.msra.mxu0 %v3130
    %3268 = vmatprep.subr.mxu0 0.0
    %3269 = vmatpush1.msra.mxu0 %v3129
    %3270 = vmatprep.subr.mxu0 0.0
    %3271 = vmatpush2.msra.mxu0 %v3160
    %3272 = vmatprep.subr.mxu0 0.0
    %3273 = vmatpush2.msra.mxu0 %v3159
    %3274 = vmatprep.subr.mxu0 0.0
    %3275 = vmatpush2.msra.mxu0 %v3158
    %3276 = vmatprep.subr.mxu0 0.0
    %3277 = vmatpush2.msra.mxu0 %v3157
    %3278 = vmatprep.subr.mxu0 0.0
    %3279 = vmatpush2.msra.mxu0 %v3156
    %3280 = vmatprep.subr.mxu0 0.0
    %3281 = vmatpush2.msra.mxu0 %v3155
    %3282 = vmatprep.subr.mxu0 0.0
    %3283 = vmatpush2.msra.mxu0 %v3154
    %3284 = vmatprep.subr.mxu0 0.0
    %3285 = vmatpush2.msra.mxu0 %v3153
    %3286 = vmatprep.subr.mxu0 0.0
    %3287 = vmatpush2.msra.mxu0 %v3152
    %3288 = vmatprep.subr.mxu0 0.0
    %3289 = vmatpush2.msra.mxu0 %v3151
    %3290 = vmatprep.subr.mxu0 0.0
    %3291 = vmatpush2.msra.mxu0 %v3150
    %3292 = vmatprep.subr.mxu0 0.0
    %3293 = vmatpush2.msra.mxu0 %v3149
    %3294 = vmatprep.subr.mxu0 0.0
    %3295 = vmatpush2.msra.mxu0 %v3148
    %3296 = vmatprep.subr.mxu0 0.0
    %3297 = vmatpush2.msra.mxu0 %v3147
    %3298 = vmatprep.subr.mxu0 0.0
    %3299 = vmatpush2.msra.mxu0 %v3146
    %3300 = vmatprep.subr.mxu0 0.0
    %3301 = vmatpush2.msra.mxu0 %v3145
    %3302 = vmatprep.mubr.f32.mxu0 %v3073
    %3303 = vmatmul.mubr.f32.gmra.mxu0 %v3072
    %v3304 = vpop.f32.mrf.mxu0
    %v3305 = vadd.f32 %v3235, %v3304
    %v3306 = vpop.f32.mrf.mxu0
    %3307 = vdwg.mxu0
    %vm3308 = vcmask 1024
    %3309 = vst.msk [vmem:[%s6] sm:$0x3] %vm3308, %v3305
    // Predicated region
    $region22: #{_cnn_forward.7} parent=1 // pred_check
      _
    $region23: #{_cnn_forward.7} parent=1 // pred_check_branch
      %3311 = sbr.rel (0) target = $region25
    $region24: #{_cnn_forward.7} parent=1 // pred_region
      %s3313 = ssub.s32 128, 128
      %3314 = vsyncadd [#allocation4], %s3313
      %s3316 = sshll.u32 [#allocation3], 4
      %s3317 = int_to_ptr.vmem [resolvable:$true] %s3316
      %3319 = dma.vmem_to_hbm [thread:$0]  %s3317, 128, %s5, [#allocation4]
    $region25: #{_cnn_forward.7} parent=1 // pred_fallthru
      _
    // Predicated region
    $region26: #{_cnn_forward.7} parent=1 // pred_check
      _
    $region27: #{_cnn_forward.7} parent=1 // pred_check_branch
      %3321 = sbr.rel (0) target = $region29
    $region28: #{_cnn_forward.7} parent=1 // pred_region
      _
    $region29: #{_cnn_forward.7} parent=1 // pred_fallthru
      _
    // Predicated region
    $region30: #{_cnn_forward.7} parent=1 // pred_check
      _
    $region31: #{_cnn_forward.7} parent=1 // pred_check_branch
      %3323 = sbr.rel (0) target = $region33
    $region32: #{_cnn_forward.7} parent=1 // pred_region
      %3324 = dma.done [#allocation4], 128
    $region33: #{_cnn_forward.7} parent=1 // pred_fallthru
      _
    // Predicated region
    $region34: #{_cnn_forward.7} parent=1 // pred_check
      _
    $region35: #{_cnn_forward.7} parent=1 // pred_check_branch
      %3326 = sbr.rel (0) target = $region37
    $region36: #{_cnn_forward.7} parent=1 // pred_region
      _
    $region37: #{_cnn_forward.7} parent=1 // pred_fallthru
      _
    %3327 = vsyncpa [#allocation4], 1

</llo_original>
